<compile_context>
chip_gen: v7x
topology: tpu7x:2x2x1
jax: 0.10.0
libtpu: 0.0.40
codegen_flags: <defaults>
</compile_context>

<pallas_src>
import math

import jax
import jax.numpy as jnp
from jax import lax
from jax.experimental import pallas as pl
from jax.experimental.pallas import tpu as pltpu

# ----------------------------- model dimensions (scaled-down) -----------------
B = 2
C_IN, IMG_HW, PATCH = 3, 16, 8
N_PATCH = (IMG_HW // PATCH) ** 2          # 4 patches per image
D_PATCH = C_IN * PATCH * PATCH            # 192 flattened patch size
D_IMG = 128                               # IMAGE_EMBEDDING_DIM (scaled from 768)
CLIP_HEADS = 4
CLIP_HD = D_IMG // CLIP_HEADS
CLIP_FF = 4 * D_IMG                       # 512
HIDDEN = 128                              # qwen hidden_size (scaled from 1024)
Q_HEADS = 4
Q_HD = HIDDEN // Q_HEADS
Q_FF = 2 * HIDDEN                         # 256
VOCAB = 512
T_TEXT = 8
S_SEQ = T_TEXT + 1                        # image prefix token + text tokens (=9)

TC_PAD = 8                                # CLIP tokens padded 5 -> 8 (sublanes)
S_PAD = 16                                # decoder sequence padded 9 -> 16

LN_EPS = 1e-5                             # CLIP LayerNorm eps
RMS_EPS = 1e-6                            # Qwen RMSNorm eps
NEG = -1e30                               # additive mask value

# Packed CLIP weight-slab lane offsets: [Wq|Wk|Wv|Wo|Wfc1|Wproj]
CW_Q, CW_K, CW_V, CW_O, CW_FC1, CW_PROJ, CW_END = 0, 128, 256, 384, 512, 1024, 1152
# Packed Qwen weight-slab lane offsets: [Wq|Wk|Wv|Wq@perm|Wk@perm|Wo|Wg|Wu|Wlm]
QW_Q, QW_K, QW_V, QW_QR, QW_KR, QW_O, QW_G, QW_U, QW_LM, QW_END = (
    0, 128, 256, 384, 512, 640, 768, 1024, 1280, 1792)


# ----------------------------- in-kernel helpers ------------------------------
def _layernorm(x, g, b, eps):
    mu = jnp.mean(x, axis=-1, keepdims=True)
    var = jnp.mean((x - mu) ** 2, axis=-1, keepdims=True)
    return (x - mu) * lax.rsqrt(var + eps) * g + b


def _rmsnorm(x, g, eps):
    return x * lax.rsqrt(jnp.mean(x * x, axis=-1, keepdims=True) + eps) * g


# ----------------------------- fused kernel -----------------------------------
def fused_caption_kernel(
    # per-batch inputs
    patches_ref, text_ref, keyvalid_ref,
    # shared small tables
    clip_base_ref, rope_ref, vecs_ref,
    # bf16 weight slabs
    w_patch_ref, clip_w_ref, wfc2_ref, qwen_w_ref, wd_ref,
    # output
    out_ref,
):
    f32 = jnp.float32
    bf16 = jnp.bfloat16
    V = vecs_ref

    def vrow(r, lo, hi):                       # (1, hi-lo) slice of the vec slab
        return V[r:r + 1, lo:hi]

    # ------------------ CLIP vision tower (single synthetic layer) ------------
    # Patch embedding (padded rows hold zero patches) + CLS/pos base.
    x = jnp.dot(patches_ref[...].astype(bf16), w_patch_ref[...],
                preferred_element_type=f32)
    x = x + clip_base_ref[...]                                   # (TC_PAD, D_IMG)
    x = _layernorm(x, vrow(0, 0, 128), vrow(0, 128, 256), LN_EPS)   # pre_layrnorm

    # Pre-LN MHA.  Fused QKV matmul; padded keys disabled by an iota-built bias;
    # per-head contexts folded through sublane slices of Wo (no lane concat).
    h = _layernorm(x, vrow(0, 256, 384), vrow(0, 384, 512), LN_EPS)
    qkv = jnp.dot(h.astype(bf16), clip_w_ref[:, CW_Q:CW_O],
                  preferred_element_type=f32) + vrow(1, 0, 384)  # (TC_PAD, 384)

    kcol = lax.broadcasted_iota(jnp.int32, (TC_PAD, TC_PAD), 1)
    clip_bias = jnp.where(kcol < (N_PATCH + 1), 0.0, NEG).astype(f32)

    scale = 1.0 / math.sqrt(CLIP_HD)
    attn = jnp.zeros((TC_PAD, D_IMG), f32)
    for head in range(CLIP_HEADS):                               # unrolled (4)
        lo, hi = head * CLIP_HD, (head + 1) * CLIP_HD
        q_h = qkv[:, CW_Q + lo:CW_Q + hi].astype(bf16)
        k_h = qkv[:, CW_K + lo:CW_K + hi].astype(bf16)
        v_h = qkv[:, CW_V + lo:CW_V + hi].astype(bf16)
        sc = lax.dot_general(q_h, k_h, (((1,), (1,)), ((), ())),
                             preferred_element_type=f32) * scale
        sc = sc + clip_bias
        sc = sc - jnp.max(sc, axis=-1, keepdims=True)
        p = jnp.exp(sc)
        p = p * pl.reciprocal(jnp.sum(p, axis=-1, keepdims=True), approx=True)
        ctx = jnp.dot(p.astype(bf16), v_h, preferred_element_type=f32)
        attn = attn + jnp.dot(ctx.astype(bf16), clip_w_ref[lo:hi, CW_O:CW_FC1],
                              preferred_element_type=f32)
    x = x + attn + vrow(1, 384, 512)                             # + out-proj bias

    # Pre-LN MLP with CLIP quick_gelu.
    h = _layernorm(x, vrow(2, 0, 128), vrow(2, 128, 256), LN_EPS)
    ff = jnp.dot(h.astype(bf16), clip_w_ref[:, CW_FC1:CW_PROJ],
                 preferred_element_type=f32) + V[3:4, :]
    ff = ff * jax.nn.sigmoid(1.702 * ff)                         # quick_gelu
    x = x + jnp.dot(ff.astype(bf16), wfc2_ref[...],
                    preferred_element_type=f32) + vrow(2, 256, 384)

    # last_hidden_state[:, 1:, :].mean(dim=1) over the 4 patch tokens, then
    # img_proj; padded rows get zero pool weight.
    ridx = lax.broadcasted_iota(jnp.int32, (TC_PAD, 1), 0)
    pool_w = jnp.where((ridx >= 1) & (ridx <= N_PATCH), 1.0 / N_PATCH, 0.0)
    img_feats = jnp.sum(x * pool_w, axis=0, keepdims=True)       # (1, D_IMG)
    img_pref = (jnp.dot(img_feats.astype(bf16), clip_w_ref[:, CW_PROJ:CW_END],
                        preferred_element_type=f32) + vrow(2, 384, 512))

    # ------------------ Qwen decoder (single synthetic layer) -----------------
    # merged = cat([img_pref, text_embeds]): drop img_pref into row 0 of the
    # zero-padded text slab via a row-index select (pure VPU).
    row = lax.broadcasted_iota(jnp.int32, (S_PAD, HIDDEN), 0)
    xq = text_ref[...] + jnp.where(row == 0, img_pref, 0.0)      # (S_PAD, HIDDEN)

    h = _rmsnorm(xq, vrow(4, 0, 128), RMS_EPS)
    # Fused Q|K|V|Q_rot|K_rot matmul (RoPE permutation folded into weights).
    qkvr = jnp.dot(h.astype(bf16), qwen_w_ref[:, QW_Q:QW_O],
                   preferred_element_type=f32)                   # (S_PAD, 640)
    cos = rope_ref[0:S_PAD, :]
    sin = rope_ref[S_PAD:2 * S_PAD, :]
    q = qkvr[:, QW_Q:QW_K] * cos + qkvr[:, QW_QR:QW_KR] * sin
    k = qkvr[:, QW_K:QW_V] * cos + qkvr[:, QW_KR:QW_O] * sin
    v = qkvr[:, QW_V:QW_QR]

    # Causal + key-padding additive bias, generated in-kernel.
    rr = lax.broadcasted_iota(jnp.int32, (S_PAD, S_PAD), 0)
    cc = lax.broadcasted_iota(jnp.int32, (S_PAD, S_PAD), 1)
    allow = (cc <= rr) & (keyvalid_ref[...] > 0.5)               # (S_PAD, S_PAD)
    dec_bias = jnp.where(allow, 0.0, NEG).astype(f32)

    scale = 1.0 / math.sqrt(Q_HD)
    attn = jnp.zeros((S_PAD, HIDDEN), f32)
    for head in range(Q_HEADS):                                  # unrolled (4)
        lo, hi = head * Q_HD, (head + 1) * Q_HD
        sc = lax.dot_general(q[:, lo:hi].astype(bf16), k[:, lo:hi].astype(bf16),
                             (((1,), (1,)), ((), ())),
                             preferred_element_type=f32) * scale
        sc = sc + dec_bias
        sc = sc - jnp.max(sc, axis=-1, keepdims=True)
        p = jnp.exp(sc)
        p = p * pl.reciprocal(jnp.sum(p, axis=-1, keepdims=True), approx=True)
        ctx = jnp.dot(p.astype(bf16), v[:, lo:hi].astype(bf16),
                      preferred_element_type=f32)
        attn = attn + jnp.dot(ctx.astype(bf16), qwen_w_ref[lo:hi, QW_O:QW_G],
                              preferred_element_type=f32)
    xq = xq + attn

    # SwiGLU MLP with fused gate|up matmul.
    h = _rmsnorm(xq, vrow(4, 128, 256), RMS_EPS)
    gu = jnp.dot(h.astype(bf16), qwen_w_ref[:, QW_G:QW_LM],
                 preferred_element_type=f32)                     # (S_PAD, 2*Q_FF)
    gated = jax.nn.silu(gu[:, :Q_FF]) * gu[:, Q_FF:]
    xq = xq + jnp.dot(gated.astype(bf16), wd_ref[...],
                      preferred_element_type=f32)

    # Select the text rows FIRST (drops prefix + pad rows), then final RMSNorm
    # and lm_head.  Output is a lane-dense (T_TEXT, VOCAB) block.
    h_text = _rmsnorm(xq[1:1 + T_TEXT, :], vrow(4, 256, 384), RMS_EPS)
    out_ref[...] = jnp.dot(h_text.astype(bf16), qwen_w_ref[:, QW_LM:QW_END],
                           preferred_element_type=f32)


# ----------------------------- host-side builders ------------------------------
def _rope_perm():
    # rotate_half as a signed block permutation (per head): x @ perm = [-x2, x1].
    half = Q_HD // 2
    eye = jnp.eye(half, dtype=jnp.float32)
    perm = jnp.zeros((HIDDEN, HIDDEN), jnp.float32)
    for hh in range(Q_HEADS):
        base = hh * Q_HD
        perm = perm.at[base + half:base + Q_HD, base:base + half].set(-eye)
        perm = perm.at[base:base + half, base + half:base + Q_HD].set(eye)
    return perm


def _rope_tables():
    inv_freq = 1.0 / (10000.0 ** (jnp.arange(0, Q_HD, 2, dtype=jnp.float32) / Q_HD))
    freqs = jnp.arange(S_PAD, dtype=jnp.float32)[:, None] * inv_freq[None, :]
    emb = jnp.concatenate([freqs, freqs], axis=-1)               # (S_PAD, Q_HD)
    cos = jnp.tile(jnp.cos(emb), (1, Q_HEADS))                   # (S_PAD, HIDDEN)
    sin = jnp.tile(jnp.sin(emb), (1, Q_HEADS))
    return jnp.concatenate([cos, sin], axis=0)                   # (2*S_PAD, HIDDEN)


def extract_patches(imgs):
    # NCHW -> (B, num_patches, C*ph*pw); equals Conv2d(k=stride=PATCH) unfold.
    b, c, hh, ww = imgs.shape
    hp, wp = hh // PATCH, ww // PATCH
    x = imgs.reshape(b, c, hp, PATCH, wp, PATCH)
    x = x.transpose(0, 2, 4, 1, 3, 5)
    return x.reshape(b, hp * wp, c * PATCH * PATCH)


def init_params(key):
    ks = jax.random.split(key, 24)
    n = lambda k, shp, s=0.02: (jax.random.normal(k, shp, jnp.float32) * s)
    ones = lambda shp: jnp.ones(shp, jnp.float32)
    zeros = lambda shp: jnp.zeros(shp, jnp.float32)
    return {
        # CLIP vision tower (synthetic single layer)
        "w_patch": n(ks[0], (D_PATCH, D_IMG)),
        "cls": n(ks[1], (1, D_IMG)),
        "pos": n(ks[2], (N_PATCH + 1, D_IMG)),
        "lnp_g": ones((1, D_IMG)), "lnp_b": zeros((1, D_IMG)),
        "ln1_g": ones((1, D_IMG)), "ln1_b": zeros((1, D_IMG)),
        "wq": n(ks[3], (D_IMG, D_IMG)), "bq": zeros((1, D_IMG)),
        "wk": n(ks[4], (D_IMG, D_IMG)), "bk": zeros((1, D_IMG)),
        "wv": n(ks[5], (D_IMG, D_IMG)), "bv": zeros((1, D_IMG)),
        "wo": n(ks[6], (D_IMG, D_IMG)), "bo": zeros((1, D_IMG)),
        "ln2_g": ones((1, D_IMG)), "ln2_b": zeros((1, D_IMG)),
        "wfc1": n(ks[7], (D_IMG, CLIP_FF)), "bfc1": zeros((1, CLIP_FF)),
        "wfc2": n(ks[8], (CLIP_FF, D_IMG)), "bfc2": zeros((1, D_IMG)),
        # img_proj (the trainable Linear in the module)
        "w_proj": n(ks[9], (D_IMG, HIDDEN)), "b_proj": zeros((1, HIDDEN)),
        # Qwen decoder (synthetic, single layer)
        "embed": n(ks[10], (VOCAB, HIDDEN)),
        "rms1": ones((1, HIDDEN)),
        "q_wq": n(ks[11], (HIDDEN, HIDDEN)),
        "q_wk": n(ks[12], (HIDDEN, HIDDEN)),
        "q_wv": n(ks[13], (HIDDEN, HIDDEN)),
        "q_wo": n(ks[14], (HIDDEN, HIDDEN)),
        "rms2": ones((1, HIDDEN)),
        "wg": n(ks[15], (HIDDEN, Q_FF)),
        "wu": n(ks[16], (HIDDEN, Q_FF)),
        "wd": n(ks[17], (Q_FF, HIDDEN)),
        "rmsf": ones((1, HIDDEN)),
        "wlm": n(ks[18], (HIDDEN, VOCAB)),
    }


def pack_params(p):
    """One-time host-side packing: fuse projections, fold RoPE perm, cast bf16."""
    bf16 = jnp.bfloat16
    perm = _rope_perm()

    clip_w = jnp.concatenate(
        [p["wq"], p["wk"], p["wv"], p["wo"], p["wfc1"], p["w_proj"]],
        axis=1).astype(bf16)                                     # (128, 1152)
    qwen_w = jnp.concatenate(
        [p["q_wq"], p["q_wk"], p["q_wv"],
         p["q_wq"] @ perm, p["q_wk"] @ perm,                     # RoPE folded
         p["q_wo"], p["wg"], p["wu"], p["wlm"]],
        axis=1).astype(bf16)                                     # (128, 1792)

    # All (1,D) gammas/betas/biases in one lane-dense f32 slab (sliced in-kernel).
    vecs = jnp.zeros((8, 512), jnp.float32)
    vecs = vecs.at[0, 0:128].set(p["lnp_g"][0]).at[0, 128:256].set(p["lnp_b"][0])
    vecs = vecs.at[0, 256:384].set(p["ln1_g"][0]).at[0, 384:512].set(p["ln1_b"][0])
    vecs = vecs.at[1, 0:128].set(p["bq"][0]).at[1, 128:256].set(p["bk"][0])
    vecs = vecs.at[1, 256:384].set(p["bv"][0]).at[1, 384:512].set(p["bo"][0])
    vecs = vecs.at[2, 0:128].set(p["ln2_g"][0]).at[2, 128:256].set(p["ln2_b"][0])
    vecs = vecs.at[2, 256:384].set(p["bfc2"][0]).at[2, 384:512].set(p["b_proj"][0])
    vecs = vecs.at[3, :].set(p["bfc1"][0])
    vecs = vecs.at[4, 0:128].set(p["rms1"][0]).at[4, 128:256].set(p["rms2"][0])
    vecs = vecs.at[4, 256:384].set(p["rmsf"][0])

    clip_base = jnp.zeros((TC_PAD, D_IMG), jnp.float32)
    clip_base = clip_base.at[:N_PATCH + 1, :].set(p["pos"])
    clip_base = clip_base.at[0, :].add(p["cls"][0])

    return {
        "w_patch": p["w_patch"].astype(bf16),
        "clip_w": clip_w,
        "wfc2": p["wfc2"].astype(bf16),
        "qwen_w": qwen_w,
        "wd": p["wd"].astype(bf16),
        "vecs": vecs,
        "clip_base": clip_base,
        "rope": _rope_tables(),
        "embed": p["embed"],
    }


# ----------------------------- forward -----------------------------------------
@jax.jit
def forward(packed, imgs, input_ids, attention_mask):
    f32 = jnp.float32

    # Per-batch CLIP patch slab (row 0 = CLS slot, rows 5..7 zero padding).
    patches = extract_patches(imgs)                              # (B, N_PATCH, D_PATCH)
    patches_pad = (jnp.zeros((B, TC_PAD, D_PATCH), f32)
                   .at[:, 1:1 + N_PATCH, :].set(patches))

    # Per-batch decoder text slab (row 0 reserved for the image prefix token).
    text_embeds = jnp.take(packed["embed"], input_ids, axis=0)   # (B, T, H)
    text_pad = (jnp.zeros((B, S_PAD, HIDDEN), f32)
                .at[:, 1:1 + T_TEXT, :].set(text_embeds))

    # Key-validity per batch: new_attention = cat([ones(B,1), attention_mask]).
    new_att = jnp.concatenate(
        [jnp.ones((B, 1), f32), attention_mask.astype(f32)], axis=1)
    key_valid = jnp.zeros((B, 1, S_PAD), f32).at[:, 0, :S_SEQ].set(new_att)

    shared = lambda b: (0, 0)
    grid_spec = pltpu.PrefetchScalarGridSpec(
        num_scalar_prefetch=0,
        grid=(B,),
        in_specs=[
            pl.BlockSpec((None, TC_PAD, D_PATCH), lambda b: (b, 0, 0)),
            pl.BlockSpec((None, S_PAD, HIDDEN), lambda b: (b, 0, 0)),
            pl.BlockSpec((None, 1, S_PAD), lambda b: (b, 0, 0)),
            pl.BlockSpec((TC_PAD, D_IMG), shared),
            pl.BlockSpec((2 * S_PAD, HIDDEN), shared),
            pl.BlockSpec((8, 512), shared),
            pl.BlockSpec((D_PATCH, D_IMG), shared),
            pl.BlockSpec((D_IMG, CW_END), shared),
            pl.BlockSpec((CLIP_FF, D_IMG), shared),
            pl.BlockSpec((HIDDEN, QW_END), shared),
            pl.BlockSpec((Q_FF, HIDDEN), shared),
        ],
        out_specs=pl.BlockSpec((None, T_TEXT, VOCAB), lambda b: (b, 0, 0)),
    )

    # Batch-parallel grid: one grid step per image/sequence; shared weight blocks
    # (constant index_map) are DMA'd once; "parallel" lets v7x split over its 2 TCs.
    logits = pl.pallas_call(
        fused_caption_kernel,
        out_shape=jax.ShapeDtypeStruct((B, T_TEXT, VOCAB), jnp.float32),
        grid_spec=grid_spec,
        compiler_params=pltpu.CompilerParams(
            dimension_semantics=("parallel",)),
    )(patches_pad, text_pad, key_valid,
      packed["clip_base"], packed["rope"], packed["vecs"],
      packed["w_patch"], packed["clip_w"], packed["wfc2"],
      packed["qwen_w"], packed["wd"])

    # Prefix logit row already dropped in-kernel -> equals outputs.logits[:, 1:, :].
    return logits


# ----------------------------- main ---------------------------------------------
if __name__ == "__main__":
    key = jax.random.PRNGKey(0)
    k_param, k_img, k_ids = jax.random.split(key, 3)
    params = init_params(k_param)
    packed = pack_params(params)

    imgs = jax.random.normal(k_img, (B, C_IN, IMG_HW, IMG_HW), jnp.float32)   # NCHW
    input_ids = jax.random.randint(k_ids, (B, T_TEXT), 0, VOCAB, jnp.int32)
    attention_mask = jnp.ones((B, T_TEXT), jnp.int32).at[1, -2:].set(0)

    out = forward(packed, imgs, input_ids, attention_mask)
    out = jax.block_until_ready(out)

    assert out.shape == (B, T_TEXT, VOCAB), out.shape
    assert bool(jnp.all(jnp.isfinite(out)))
    print("KERNEL_OK")
</pallas_src>

<mosaic_0001>
module attributes {stable_mosaic.version = 11 : i64} {
  func.func @fused_caption_kernel(%arg0: i32, %arg1: memref<1x8x192xf32, #tpu.memory_space<vmem>>, %arg2: memref<1x16x128xf32, #tpu.memory_space<vmem>>, %arg3: memref<1x1x16xf32, #tpu.memory_space<vmem>>, %arg4: memref<8x128xf32, #tpu.memory_space<vmem>>, %arg5: memref<32x128xf32, #tpu.memory_space<vmem>>, %arg6: memref<8x512xf32, #tpu.memory_space<vmem>>, %arg7: memref<192x128xbf16, #tpu.memory_space<vmem>>, %arg8: memref<128x1152xbf16, #tpu.memory_space<vmem>>, %arg9: memref<512x128xbf16, #tpu.memory_space<vmem>>, %arg10: memref<128x1792xbf16, #tpu.memory_space<vmem>>, %arg11: memref<256x128xbf16, #tpu.memory_space<vmem>>, %arg12: memref<1x8x512xf32, #tpu.memory_space<vmem>>) attributes {dimension_semantics = [#tpu.dimension_semantics<parallel>], iteration_bounds = array<i64: 2>, scalar_prefetch = 0 : i64, scratch_operands = 0 : i64, tpu.core_type = #tpu.core_type<tc>, window_params = [{transform_indices = @transform_0, window_bounds = array<i64: 1, 8, 192>}, {transform_indices = @transform_1, window_bounds = array<i64: 1, 16, 128>}, {transform_indices = @transform_2, window_bounds = array<i64: 1, 1, 16>}, {pipeline_mode = #tpu.pipeline_mode<synchronous>, transform_indices = @transform_3, window_bounds = array<i64: 8, 128>}, {pipeline_mode = #tpu.pipeline_mode<synchronous>, transform_indices = @transform_4, window_bounds = array<i64: 32, 128>}, {pipeline_mode = #tpu.pipeline_mode<synchronous>, transform_indices = @transform_5, window_bounds = array<i64: 8, 512>}, {pipeline_mode = #tpu.pipeline_mode<synchronous>, transform_indices = @transform_6, window_bounds = array<i64: 192, 128>}, {pipeline_mode = #tpu.pipeline_mode<synchronous>, transform_indices = @transform_7, window_bounds = array<i64: 128, 1152>}, {pipeline_mode = #tpu.pipeline_mode<synchronous>, transform_indices = @transform_8, window_bounds = array<i64: 512, 128>}, {pipeline_mode = #tpu.pipeline_mode<synchronous>, transform_indices = @transform_9, window_bounds = array<i64: 128, 1792>}, {pipeline_mode = #tpu.pipeline_mode<synchronous>, transform_indices = @transform_10, window_bounds = array<i64: 256, 128>}, {transform_indices = @transform_11, window_bounds = array<i64: 1, 8, 512>}]} {
    %c0 = arith.constant 0 : index
    %c0_0 = arith.constant 0 : index
    %c0_1 = arith.constant 0 : index
    %0 = vector.load %arg1[%c0, %c0_0, %c0_1] : memref<1x8x192xf32, #tpu.memory_space<vmem>>, vector<1x8x192xf32>
    %1 = vector.shape_cast %0 : vector<1x8x192xf32> to vector<8x192xf32>
    %2 = arith.truncf %1 : vector<8x192xf32> to vector<8x192xbf16>
    %c0_2 = arith.constant 0 : index
    %c0_3 = arith.constant 0 : index
    %3 = vector.load %arg7[%c0_2, %c0_3] : memref<192x128xbf16, #tpu.memory_space<vmem>>, vector<192x128xbf16>
    %cst = arith.constant dense<0.000000e+00> : vector<8x128xf32>
    %4 = tpu.matmul %2, %3, %cst {dimension_numbers = #tpu.dot_dimension_numbers<[1], [0], [0], [1], [0, 0, 1, 1], [], []>} : vector<8x192xbf16>, vector<192x128xbf16>, vector<8x128xf32> -> vector<8x128xf32>
    %c0_4 = arith.constant 0 : index
    %c0_5 = arith.constant 0 : index
    %5 = vector.load %arg4[%c0_4, %c0_5] : memref<8x128xf32, #tpu.memory_space<vmem>>, vector<8x128xf32>
    %6 = arith.addf %4, %5 : vector<8x128xf32>
    %c0_6 = arith.constant 0 : index
    %c0_7 = arith.constant 0 : index
    %7 = vector.load %arg6[%c0_6, %c0_7] : memref<8x512xf32, #tpu.memory_space<vmem>>, vector<1x128xf32>
    %c0_8 = arith.constant 0 : index
    %c128 = arith.constant 128 : index
    %8 = vector.load %arg6[%c0_8, %c128] : memref<8x512xf32, #tpu.memory_space<vmem>>, vector<1x128xf32>
    %cst_9 = arith.constant dense<0.000000e+00> : vector<8xf32>
    %9 = vector.multi_reduction <add>, %6, %cst_9 [1] : vector<8x128xf32> to vector<8xf32>
    %10 = vector.shape_cast %9 : vector<8xf32> to vector<8x1xf32>
    %cst_10 = arith.constant 1.280000e+02 : f32
    %11 = vector.broadcast %cst_10 : f32 to vector<8x1xf32>
    %12 = arith.divf %10, %11 : vector<8x1xf32>
    %13 = vector.broadcast %12 : vector<8x1xf32> to vector<8x128xf32>
    %14 = arith.subf %6, %13 : vector<8x128xf32>
    %15 = arith.mulf %14, %14 : vector<8x128xf32>
    %cst_11 = arith.constant dense<0.000000e+00> : vector<8xf32>
    %16 = vector.multi_reduction <add>, %15, %cst_11 [1] : vector<8x128xf32> to vector<8xf32>
    %17 = vector.shape_cast %16 : vector<8xf32> to vector<8x1xf32>
    %cst_12 = arith.constant 1.280000e+02 : f32
    %18 = vector.broadcast %cst_12 : f32 to vector<8x1xf32>
    %19 = arith.divf %17, %18 : vector<8x1xf32>
    %20 = vector.broadcast %12 : vector<8x1xf32> to vector<8x128xf32>
    %21 = arith.subf %6, %20 : vector<8x128xf32>
    %cst_13 = arith.constant 9.99999974E-6 : f32
    %22 = vector.broadcast %cst_13 : f32 to vector<8x1xf32>
    %23 = arith.addf %19, %22 : vector<8x1xf32>
    %24 = math.rsqrt %23 : vector<8x1xf32>
    %25 = vector.broadcast %24 : vector<8x1xf32> to vector<8x128xf32>
    %26 = arith.mulf %21, %25 : vector<8x128xf32>
    %27 = vector.broadcast %7 : vector<1x128xf32> to vector<8x128xf32>
    %28 = arith.mulf %26, %27 : vector<8x128xf32>
    %29 = vector.broadcast %8 : vector<1x128xf32> to vector<8x128xf32>
    %30 = arith.addf %28, %29 : vector<8x128xf32>
    %c0_14 = arith.constant 0 : index
    %c256 = arith.constant 256 : index
    %31 = vector.load %arg6[%c0_14, %c256] : memref<8x512xf32, #tpu.memory_space<vmem>>, vector<1x128xf32>
    %c0_15 = arith.constant 0 : index
    %c384 = arith.constant 384 : index
    %32 = vector.load %arg6[%c0_15, %c384] : memref<8x512xf32, #tpu.memory_space<vmem>>, vector<1x128xf32>
    %cst_16 = arith.constant dense<0.000000e+00> : vector<8xf32>
    %33 = vector.multi_reduction <add>, %30, %cst_16 [1] : vector<8x128xf32> to vector<8xf32>
    %34 = vector.shape_cast %33 : vector<8xf32> to vector<8x1xf32>
    %cst_17 = arith.constant 1.280000e+02 : f32
    %35 = vector.broadcast %cst_17 : f32 to vector<8x1xf32>
    %36 = arith.divf %34, %35 : vector<8x1xf32>
    %37 = vector.broadcast %36 : vector<8x1xf32> to vector<8x128xf32>
    %38 = arith.subf %30, %37 : vector<8x128xf32>
    %39 = arith.mulf %38, %38 : vector<8x128xf32>
    %cst_18 = arith.constant dense<0.000000e+00> : vector<8xf32>
    %40 = vector.multi_reduction <add>, %39, %cst_18 [1] : vector<8x128xf32> to vector<8xf32>
    %41 = vector.shape_cast %40 : vector<8xf32> to vector<8x1xf32>
    %cst_19 = arith.constant 1.280000e+02 : f32
    %42 = vector.broadcast %cst_19 : f32 to vector<8x1xf32>
    %43 = arith.divf %41, %42 : vector<8x1xf32>
    %44 = vector.broadcast %36 : vector<8x1xf32> to vector<8x128xf32>
    %45 = arith.subf %30, %44 : vector<8x128xf32>
    %cst_20 = arith.constant 9.99999974E-6 : f32
    %46 = vector.broadcast %cst_20 : f32 to vector<8x1xf32>
    %47 = arith.addf %43, %46 : vector<8x1xf32>
    %48 = math.rsqrt %47 : vector<8x1xf32>
    %49 = vector.broadcast %48 : vector<8x1xf32> to vector<8x128xf32>
    %50 = arith.mulf %45, %49 : vector<8x128xf32>
    %51 = vector.broadcast %31 : vector<1x128xf32> to vector<8x128xf32>
    %52 = arith.mulf %50, %51 : vector<8x128xf32>
    %53 = vector.broadcast %32 : vector<1x128xf32> to vector<8x128xf32>
    %54 = arith.addf %52, %53 : vector<8x128xf32>
    %55 = arith.truncf %54 : vector<8x128xf32> to vector<8x128xbf16>
    %c0_21 = arith.constant 0 : index
    %c0_22 = arith.constant 0 : index
    %56 = vector.load %arg8[%c0_21, %c0_22] : memref<128x1152xbf16, #tpu.memory_space<vmem>>, vector<128x384xbf16>
    %cst_23 = arith.constant dense<0.000000e+00> : vector<8x384xf32>
    %57 = tpu.matmul %55, %56, %cst_23 {dimension_numbers = #tpu.dot_dimension_numbers<[1], [0], [0], [1], [0, 0, 1, 1], [], []>} : vector<8x128xbf16>, vector<128x384xbf16>, vector<8x384xf32> -> vector<8x384xf32>
    %c1 = arith.constant 1 : index
    %c0_24 = arith.constant 0 : index
    %58 = vector.load %arg6[%c1, %c0_24] : memref<8x512xf32, #tpu.memory_space<vmem>>, vector<1x384xf32>
    %59 = vector.broadcast %58 : vector<1x384xf32> to vector<8x384xf32>
    %60 = arith.addf %57, %59 : vector<8x384xf32>
    %61 = tpu.iota {dimensions = array<i32: 1>} : vector<8x8xi32>
    %c5_i32 = arith.constant 5 : i32
    %62 = vector.broadcast %c5_i32 : i32 to vector<8x8xi32>
    %63 = arith.cmpi slt, %61, %62 : vector<8x8xi32>
    %cst_25 = arith.constant 0.000000e+00 : f32
    %cst_26 = arith.constant -1.000000e+30 : f32
    %64 = vector.broadcast %cst_25 : f32 to vector<8x8xf32>
    %65 = vector.broadcast %cst_26 : f32 to vector<8x8xf32>
    %66 = arith.select %63, %64, %65 : vector<8x8xi1>, vector<8x8xf32>
    %cst_27 = arith.constant 0.000000e+00 : f32
    %67 = vector.broadcast %cst_27 : f32 to vector<8x128xf32>
    %68 = vector.extract_strided_slice %60 {offsets = [0, 0], sizes = [8, 32], strides = [1, 1]} : vector<8x384xf32> to vector<8x32xf32>
    %69 = arith.truncf %68 : vector<8x32xf32> to vector<8x32xbf16>
    %70 = vector.extract_strided_slice %60 {offsets = [0, 128], sizes = [8, 32], strides = [1, 1]} : vector<8x384xf32> to vector<8x32xf32>
    %71 = arith.truncf %70 : vector<8x32xf32> to vector<8x32xbf16>
    %72 = vector.extract_strided_slice %60 {offsets = [0, 256], sizes = [8, 32], strides = [1, 1]} : vector<8x384xf32> to vector<8x32xf32>
    %73 = arith.truncf %72 : vector<8x32xf32> to vector<8x32xbf16>
    %cst_28 = arith.constant dense<0.000000e+00> : vector<8x8xf32>
    %74 = tpu.matmul %69, %71, %cst_28 {dimension_numbers = #tpu.dot_dimension_numbers<[1], [1], [0], [0], [0, 0, 1, 0], [], []>} : vector<8x32xbf16>, vector<8x32xbf16>, vector<8x8xf32> -> vector<8x8xf32>
    %cst_29 = arith.constant 0.176776692 : f32
    %75 = vector.broadcast %cst_29 : f32 to vector<8x8xf32>
    %76 = arith.mulf %74, %75 : vector<8x8xf32>
    %77 = arith.addf %76, %66 : vector<8x8xf32>
    %cst_30 = arith.constant dense<0xFF800000> : vector<8xf32>
    %78 = vector.multi_reduction <maximumf>, %77, %cst_30 [1] : vector<8x8xf32> to vector<8xf32>
    %79 = vector.shape_cast %78 : vector<8xf32> to vector<8x1xf32>
    %80 = vector.broadcast %79 : vector<8x1xf32> to vector<8x8xf32>
    %81 = arith.subf %77, %80 : vector<8x8xf32>
    %82 = math.exp %81 : vector<8x8xf32>
    %cst_31 = arith.constant dense<0.000000e+00> : vector<8xf32>
    %83 = vector.multi_reduction <add>, %82, %cst_31 [1] : vector<8x8xf32> to vector<8xf32>
    %84 = vector.shape_cast %83 : vector<8xf32> to vector<8x1xf32>
    %85 = tpu.reciprocal %84 {approx = true} : vector<8x1xf32> -> vector<8x1xf32>
    %86 = vector.broadcast %85 : vector<8x1xf32> to vector<8x8xf32>
    %87 = arith.mulf %82, %86 : vector<8x8xf32>
    %88 = arith.truncf %87 : vector<8x8xf32> to vector<8x8xbf16>
    %cst_32 = arith.constant dense<0.000000e+00> : vector<8x32xf32>
    %89 = tpu.matmul %88, %73, %cst_32 {dimension_numbers = #tpu.dot_dimension_numbers<[1], [0], [0], [1], [0, 0, 1, 1], [], []>} : vector<8x8xbf16>, vector<8x32xbf16>, vector<8x32xf32> -> vector<8x32xf32>
    %90 = arith.truncf %89 : vector<8x32xf32> to vector<8x32xbf16>
    %c0_33 = arith.constant 0 : index
    %c384_34 = arith.constant 384 : index
    %91 = vector.load %arg8[%c0_33, %c384_34] : memref<128x1152xbf16, #tpu.memory_space<vmem>>, vector<32x128xbf16>
    %cst_35 = arith.constant dense<0.000000e+00> : vector<8x128xf32>
    %92 = tpu.matmul %90, %91, %cst_35 {dimension_numbers = #tpu.dot_dimension_numbers<[1], [0], [0], [1], [0, 0, 1, 1], [], []>} : vector<8x32xbf16>, vector<32x128xbf16>, vector<8x128xf32> -> vector<8x128xf32>
    %93 = arith.addf %67, %92 : vector<8x128xf32>
    %94 = vector.extract_strided_slice %60 {offsets = [0, 32], sizes = [8, 32], strides = [1, 1]} : vector<8x384xf32> to vector<8x32xf32>
    %95 = arith.truncf %94 : vector<8x32xf32> to vector<8x32xbf16>
    %96 = vector.extract_strided_slice %60 {offsets = [0, 160], sizes = [8, 32], strides = [1, 1]} : vector<8x384xf32> to vector<8x32xf32>
    %97 = arith.truncf %96 : vector<8x32xf32> to vector<8x32xbf16>
    %98 = vector.extract_strided_slice %60 {offsets = [0, 288], sizes = [8, 32], strides = [1, 1]} : vector<8x384xf32> to vector<8x32xf32>
    %99 = arith.truncf %98 : vector<8x32xf32> to vector<8x32xbf16>
    %cst_36 = arith.constant dense<0.000000e+00> : vector<8x8xf32>
    %100 = tpu.matmul %95, %97, %cst_36 {dimension_numbers = #tpu.dot_dimension_numbers<[1], [1], [0], [0], [0, 0, 1, 0], [], []>} : vector<8x32xbf16>, vector<8x32xbf16>, vector<8x8xf32> -> vector<8x8xf32>
    %cst_37 = arith.constant 0.176776692 : f32
    %101 = vector.broadcast %cst_37 : f32 to vector<8x8xf32>
    %102 = arith.mulf %100, %101 : vector<8x8xf32>
    %103 = arith.addf %102, %66 : vector<8x8xf32>
    %cst_38 = arith.constant dense<0xFF800000> : vector<8xf32>
    %104 = vector.multi_reduction <maximumf>, %103, %cst_38 [1] : vector<8x8xf32> to vector<8xf32>
    %105 = vector.shape_cast %104 : vector<8xf32> to vector<8x1xf32>
    %106 = vector.broadcast %105 : vector<8x1xf32> to vector<8x8xf32>
    %107 = arith.subf %103, %106 : vector<8x8xf32>
    %108 = math.exp %107 : vector<8x8xf32>
    %cst_39 = arith.constant dense<0.000000e+00> : vector<8xf32>
    %109 = vector.multi_reduction <add>, %108, %cst_39 [1] : vector<8x8xf32> to vector<8xf32>
    %110 = vector.shape_cast %109 : vector<8xf32> to vector<8x1xf32>
    %111 = tpu.reciprocal %110 {approx = true} : vector<8x1xf32> -> vector<8x1xf32>
    %112 = vector.broadcast %111 : vector<8x1xf32> to vector<8x8xf32>
    %113 = arith.mulf %108, %112 : vector<8x8xf32>
    %114 = arith.truncf %113 : vector<8x8xf32> to vector<8x8xbf16>
    %cst_40 = arith.constant dense<0.000000e+00> : vector<8x32xf32>
    %115 = tpu.matmul %114, %99, %cst_40 {dimension_numbers = #tpu.dot_dimension_numbers<[1], [0], [0], [1], [0, 0, 1, 1], [], []>} : vector<8x8xbf16>, vector<8x32xbf16>, vector<8x32xf32> -> vector<8x32xf32>
    %116 = arith.truncf %115 : vector<8x32xf32> to vector<8x32xbf16>
    %c32 = arith.constant 32 : index
    %c384_41 = arith.constant 384 : index
    %117 = vector.load %arg8[%c32, %c384_41] : memref<128x1152xbf16, #tpu.memory_space<vmem>>, vector<32x128xbf16>
    %cst_42 = arith.constant dense<0.000000e+00> : vector<8x128xf32>
    %118 = tpu.matmul %116, %117, %cst_42 {dimension_numbers = #tpu.dot_dimension_numbers<[1], [0], [0], [1], [0, 0, 1, 1], [], []>} : vector<8x32xbf16>, vector<32x128xbf16>, vector<8x128xf32> -> vector<8x128xf32>
    %119 = arith.addf %93, %118 : vector<8x128xf32>
    %120 = vector.extract_strided_slice %60 {offsets = [0, 64], sizes = [8, 32], strides = [1, 1]} : vector<8x384xf32> to vector<8x32xf32>
    %121 = arith.truncf %120 : vector<8x32xf32> to vector<8x32xbf16>
    %122 = vector.extract_strided_slice %60 {offsets = [0, 192], sizes = [8, 32], strides = [1, 1]} : vector<8x384xf32> to vector<8x32xf32>
    %123 = arith.truncf %122 : vector<8x32xf32> to vector<8x32xbf16>
    %124 = vector.extract_strided_slice %60 {offsets = [0, 320], sizes = [8, 32], strides = [1, 1]} : vector<8x384xf32> to vector<8x32xf32>
    %125 = arith.truncf %124 : vector<8x32xf32> to vector<8x32xbf16>
    %cst_43 = arith.constant dense<0.000000e+00> : vector<8x8xf32>
    %126 = tpu.matmul %121, %123, %cst_43 {dimension_numbers = #tpu.dot_dimension_numbers<[1], [1], [0], [0], [0, 0, 1, 0], [], []>} : vector<8x32xbf16>, vector<8x32xbf16>, vector<8x8xf32> -> vector<8x8xf32>
    %cst_44 = arith.constant 0.176776692 : f32
    %127 = vector.broadcast %cst_44 : f32 to vector<8x8xf32>
    %128 = arith.mulf %126, %127 : vector<8x8xf32>
    %129 = arith.addf %128, %66 : vector<8x8xf32>
    %cst_45 = arith.constant dense<0xFF800000> : vector<8xf32>
    %130 = vector.multi_reduction <maximumf>, %129, %cst_45 [1] : vector<8x8xf32> to vector<8xf32>
    %131 = vector.shape_cast %130 : vector<8xf32> to vector<8x1xf32>
    %132 = vector.broadcast %131 : vector<8x1xf32> to vector<8x8xf32>
    %133 = arith.subf %129, %132 : vector<8x8xf32>
    %134 = math.exp %133 : vector<8x8xf32>
    %cst_46 = arith.constant dense<0.000000e+00> : vector<8xf32>
    %135 = vector.multi_reduction <add>, %134, %cst_46 [1] : vector<8x8xf32> to vector<8xf32>
    %136 = vector.shape_cast %135 : vector<8xf32> to vector<8x1xf32>
    %137 = tpu.reciprocal %136 {approx = true} : vector<8x1xf32> -> vector<8x1xf32>
    %138 = vector.broadcast %137 : vector<8x1xf32> to vector<8x8xf32>
    %139 = arith.mulf %134, %138 : vector<8x8xf32>
    %140 = arith.truncf %139 : vector<8x8xf32> to vector<8x8xbf16>
    %cst_47 = arith.constant dense<0.000000e+00> : vector<8x32xf32>
    %141 = tpu.matmul %140, %125, %cst_47 {dimension_numbers = #tpu.dot_dimension_numbers<[1], [0], [0], [1], [0, 0, 1, 1], [], []>} : vector<8x8xbf16>, vector<8x32xbf16>, vector<8x32xf32> -> vector<8x32xf32>
    %142 = arith.truncf %141 : vector<8x32xf32> to vector<8x32xbf16>
    %c64 = arith.constant 64 : index
    %c384_48 = arith.constant 384 : index
    %143 = vector.load %arg8[%c64, %c384_48] : memref<128x1152xbf16, #tpu.memory_space<vmem>>, vector<32x128xbf16>
    %cst_49 = arith.constant dense<0.000000e+00> : vector<8x128xf32>
    %144 = tpu.matmul %142, %143, %cst_49 {dimension_numbers = #tpu.dot_dimension_numbers<[1], [0], [0], [1], [0, 0, 1, 1], [], []>} : vector<8x32xbf16>, vector<32x128xbf16>, vector<8x128xf32> -> vector<8x128xf32>
    %145 = arith.addf %119, %144 : vector<8x128xf32>
    %146 = vector.extract_strided_slice %60 {offsets = [0, 96], sizes = [8, 32], strides = [1, 1]} : vector<8x384xf32> to vector<8x32xf32>
    %147 = arith.truncf %146 : vector<8x32xf32> to vector<8x32xbf16>
    %148 = vector.extract_strided_slice %60 {offsets = [0, 224], sizes = [8, 32], strides = [1, 1]} : vector<8x384xf32> to vector<8x32xf32>
    %149 = arith.truncf %148 : vector<8x32xf32> to vector<8x32xbf16>
    %150 = vector.extract_strided_slice %60 {offsets = [0, 352], sizes = [8, 32], strides = [1, 1]} : vector<8x384xf32> to vector<8x32xf32>
    %151 = arith.truncf %150 : vector<8x32xf32> to vector<8x32xbf16>
    %cst_50 = arith.constant dense<0.000000e+00> : vector<8x8xf32>
    %152 = tpu.matmul %147, %149, %cst_50 {dimension_numbers = #tpu.dot_dimension_numbers<[1], [1], [0], [0], [0, 0, 1, 0], [], []>} : vector<8x32xbf16>, vector<8x32xbf16>, vector<8x8xf32> -> vector<8x8xf32>
    %cst_51 = arith.constant 0.176776692 : f32
    %153 = vector.broadcast %cst_51 : f32 to vector<8x8xf32>
    %154 = arith.mulf %152, %153 : vector<8x8xf32>
    %155 = arith.addf %154, %66 : vector<8x8xf32>
    %cst_52 = arith.constant dense<0xFF800000> : vector<8xf32>
    %156 = vector.multi_reduction <maximumf>, %155, %cst_52 [1] : vector<8x8xf32> to vector<8xf32>
    %157 = vector.shape_cast %156 : vector<8xf32> to vector<8x1xf32>
    %158 = vector.broadcast %157 : vector<8x1xf32> to vector<8x8xf32>
    %159 = arith.subf %155, %158 : vector<8x8xf32>
    %160 = math.exp %159 : vector<8x8xf32>
    %cst_53 = arith.constant dense<0.000000e+00> : vector<8xf32>
    %161 = vector.multi_reduction <add>, %160, %cst_53 [1] : vector<8x8xf32> to vector<8xf32>
    %162 = vector.shape_cast %161 : vector<8xf32> to vector<8x1xf32>
    %163 = tpu.reciprocal %162 {approx = true} : vector<8x1xf32> -> vector<8x1xf32>
    %164 = vector.broadcast %163 : vector<8x1xf32> to vector<8x8xf32>
    %165 = arith.mulf %160, %164 : vector<8x8xf32>
    %166 = arith.truncf %165 : vector<8x8xf32> to vector<8x8xbf16>
    %cst_54 = arith.constant dense<0.000000e+00> : vector<8x32xf32>
    %167 = tpu.matmul %166, %151, %cst_54 {dimension_numbers = #tpu.dot_dimension_numbers<[1], [0], [0], [1], [0, 0, 1, 1], [], []>} : vector<8x8xbf16>, vector<8x32xbf16>, vector<8x32xf32> -> vector<8x32xf32>
    %168 = arith.truncf %167 : vector<8x32xf32> to vector<8x32xbf16>
    %c96 = arith.constant 96 : index
    %c384_55 = arith.constant 384 : index
    %169 = vector.load %arg8[%c96, %c384_55] : memref<128x1152xbf16, #tpu.memory_space<vmem>>, vector<32x128xbf16>
    %cst_56 = arith.constant dense<0.000000e+00> : vector<8x128xf32>
    %170 = tpu.matmul %168, %169, %cst_56 {dimension_numbers = #tpu.dot_dimension_numbers<[1], [0], [0], [1], [0, 0, 1, 1], [], []>} : vector<8x32xbf16>, vector<32x128xbf16>, vector<8x128xf32> -> vector<8x128xf32>
    %171 = arith.addf %145, %170 : vector<8x128xf32>
    %172 = arith.addf %30, %171 : vector<8x128xf32>
    %c1_57 = arith.constant 1 : index
    %c384_58 = arith.constant 384 : index
    %173 = vector.load %arg6[%c1_57, %c384_58] : memref<8x512xf32, #tpu.memory_space<vmem>>, vector<1x128xf32>
    %174 = vector.broadcast %173 : vector<1x128xf32> to vector<8x128xf32>
    %175 = arith.addf %172, %174 : vector<8x128xf32>
    %c2 = arith.constant 2 : index
    %c0_59 = arith.constant 0 : index
    %176 = vector.load %arg6[%c2, %c0_59] : memref<8x512xf32, #tpu.memory_space<vmem>>, vector<1x128xf32>
    %c2_60 = arith.constant 2 : index
    %c128_61 = arith.constant 128 : index
    %177 = vector.load %arg6[%c2_60, %c128_61] : memref<8x512xf32, #tpu.memory_space<vmem>>, vector<1x128xf32>
    %cst_62 = arith.constant dense<0.000000e+00> : vector<8xf32>
    %178 = vector.multi_reduction <add>, %175, %cst_62 [1] : vector<8x128xf32> to vector<8xf32>
    %179 = vector.shape_cast %178 : vector<8xf32> to vector<8x1xf32>
    %cst_63 = arith.constant 1.280000e+02 : f32
    %180 = vector.broadcast %cst_63 : f32 to vector<8x1xf32>
    %181 = arith.divf %179, %180 : vector<8x1xf32>
    %182 = vector.broadcast %181 : vector<8x1xf32> to vector<8x128xf32>
    %183 = arith.subf %175, %182 : vector<8x128xf32>
    %184 = arith.mulf %183, %183 : vector<8x128xf32>
    %cst_64 = arith.constant dense<0.000000e+00> : vector<8xf32>
    %185 = vector.multi_reduction <add>, %184, %cst_64 [1] : vector<8x128xf32> to vector<8xf32>
    %186 = vector.shape_cast %185 : vector<8xf32> to vector<8x1xf32>
    %cst_65 = arith.constant 1.280000e+02 : f32
    %187 = vector.broadcast %cst_65 : f32 to vector<8x1xf32>
    %188 = arith.divf %186, %187 : vector<8x1xf32>
    %189 = vector.broadcast %181 : vector<8x1xf32> to vector<8x128xf32>
    %190 = arith.subf %175, %189 : vector<8x128xf32>
    %cst_66 = arith.constant 9.99999974E-6 : f32
    %191 = vector.broadcast %cst_66 : f32 to vector<8x1xf32>
    %192 = arith.addf %188, %191 : vector<8x1xf32>
    %193 = math.rsqrt %192 : vector<8x1xf32>
    %194 = vector.broadcast %193 : vector<8x1xf32> to vector<8x128xf32>
    %195 = arith.mulf %190, %194 : vector<8x128xf32>
    %196 = vector.broadcast %176 : vector<1x128xf32> to vector<8x128xf32>
    %197 = arith.mulf %195, %196 : vector<8x128xf32>
    %198 = vector.broadcast %177 : vector<1x128xf32> to vector<8x128xf32>
    %199 = arith.addf %197, %198 : vector<8x128xf32>
    %200 = arith.truncf %199 : vector<8x128xf32> to vector<8x128xbf16>
    %c0_67 = arith.constant 0 : index
    %c512 = arith.constant 512 : index
    %201 = vector.load %arg8[%c0_67, %c512] : memref<128x1152xbf16, #tpu.memory_space<vmem>>, vector<128x512xbf16>
    %cst_68 = arith.constant dense<0.000000e+00> : vector<8x512xf32>
    %202 = tpu.matmul %200, %201, %cst_68 {dimension_numbers = #tpu.dot_dimension_numbers<[1], [0], [0], [1], [0, 0, 1, 1], [], []>} : vector<8x128xbf16>, vector<128x512xbf16>, vector<8x512xf32> -> vector<8x512xf32>
    %c3 = arith.constant 3 : index
    %c0_69 = arith.constant 0 : index
    %203 = vector.load %arg6[%c3, %c0_69] : memref<8x512xf32, #tpu.memory_space<vmem>>, vector<1x512xf32>
    %204 = vector.broadcast %203 : vector<1x512xf32> to vector<8x512xf32>
    %205 = arith.addf %202, %204 : vector<8x512xf32>
    %cst_70 = arith.constant 1.702000e+00 : f32
    %206 = vector.broadcast %cst_70 : f32 to vector<8x512xf32>
    %207 = arith.mulf %206, %205 : vector<8x512xf32>
    %208 = arith.negf %207 : vector<8x512xf32>
    %209 = math.exp %208 : vector<8x512xf32>
    %cst_71 = arith.constant 1.000000e+00 : f32
    %210 = vector.broadcast %cst_71 : f32 to vector<8x512xf32>
    %211 = arith.addf %210, %209 : vector<8x512xf32>
    %212 = arith.divf %210, %211 : vector<8x512xf32>
    %213 = arith.mulf %205, %212 : vector<8x512xf32>
    %214 = arith.truncf %213 : vector<8x512xf32> to vector<8x512xbf16>
    %c0_72 = arith.constant 0 : index
    %c0_73 = arith.constant 0 : index
    %215 = vector.load %arg9[%c0_72, %c0_73] : memref<512x128xbf16, #tpu.memory_space<vmem>>, vector<512x128xbf16>
    %cst_74 = arith.constant dense<0.000000e+00> : vector<8x128xf32>
    %216 = tpu.matmul %214, %215, %cst_74 {dimension_numbers = #tpu.dot_dimension_numbers<[1], [0], [0], [1], [0, 0, 1, 1], [], []>} : vector<8x512xbf16>, vector<512x128xbf16>, vector<8x128xf32> -> vector<8x128xf32>
    %217 = arith.addf %175, %216 : vector<8x128xf32>
    %c2_75 = arith.constant 2 : index
    %c256_76 = arith.constant 256 : index
    %218 = vector.load %arg6[%c2_75, %c256_76] : memref<8x512xf32, #tpu.memory_space<vmem>>, vector<1x128xf32>
    %219 = vector.broadcast %218 : vector<1x128xf32> to vector<8x128xf32>
    %220 = arith.addf %217, %219 : vector<8x128xf32>
    %221 = tpu.iota {dimensions = array<i32: 0>} : vector<8x1xi32>
    %c1_i32 = arith.constant 1 : i32
    %222 = vector.broadcast %c1_i32 : i32 to vector<8x1xi32>
    %223 = arith.cmpi sge, %221, %222 : vector<8x1xi32>
    %c4_i32 = arith.constant 4 : i32
    %224 = vector.broadcast %c4_i32 : i32 to vector<8x1xi32>
    %225 = arith.cmpi sle, %221, %224 : vector<8x1xi32>
    %226 = arith.andi %223, %225 : vector<8x1xi1>
    %cst_77 = arith.constant 2.500000e-01 : f32
    %cst_78 = arith.constant 0.000000e+00 : f32
    %227 = vector.broadcast %cst_77 : f32 to vector<8x1xf32>
    %228 = vector.broadcast %cst_78 : f32 to vector<8x1xf32>
    %229 = arith.select %226, %227, %228 : vector<8x1xi1>, vector<8x1xf32>
    %230 = vector.broadcast %229 : vector<8x1xf32> to vector<8x128xf32>
    %231 = arith.mulf %220, %230 : vector<8x128xf32>
    %cst_79 = arith.constant dense<0.000000e+00> : vector<128xf32>
    %232 = vector.multi_reduction <add>, %231, %cst_79 [0] : vector<8x128xf32> to vector<128xf32>
    %233 = vector.shape_cast %232 : vector<128xf32> to vector<1x128xf32>
    %234 = arith.truncf %233 : vector<1x128xf32> to vector<1x128xbf16>
    %c0_80 = arith.constant 0 : index
    %c1024 = arith.constant 1024 : index
    %235 = vector.load %arg8[%c0_80, %c1024] : memref<128x1152xbf16, #tpu.memory_space<vmem>>, vector<128x128xbf16>
    %cst_81 = arith.constant dense<0.000000e+00> : vector<1x128xf32>
    %236 = tpu.matmul %234, %235, %cst_81 {dimension_numbers = #tpu.dot_dimension_numbers<[1], [0], [0], [1], [0, 0, 1, 1], [], []>} : vector<1x128xbf16>, vector<128x128xbf16>, vector<1x128xf32> -> vector<1x128xf32>
    %c2_82 = arith.constant 2 : index
    %c384_83 = arith.constant 384 : index
    %237 = vector.load %arg6[%c2_82, %c384_83] : memref<8x512xf32, #tpu.memory_space<vmem>>, vector<1x128xf32>
    %238 = arith.addf %236, %237 : vector<1x128xf32>
    %239 = tpu.iota {dimensions = array<i32: 0>} : vector<16x128xi32>
    %c0_84 = arith.constant 0 : index
    %c0_85 = arith.constant 0 : index
    %c0_86 = arith.constant 0 : index
    %240 = vector.load %arg2[%c0_84, %c0_85, %c0_86] : memref<1x16x128xf32, #tpu.memory_space<vmem>>, vector<1x16x128xf32>
    %241 = vector.shape_cast %240 : vector<1x16x128xf32> to vector<16x128xf32>
    %c0_i32 = arith.constant 0 : i32
    %242 = vector.broadcast %c0_i32 : i32 to vector<16x128xi32>
    %243 = arith.cmpi eq, %239, %242 : vector<16x128xi32>
    %cst_87 = arith.constant 0.000000e+00 : f32
    %244 = vector.shape_cast %238 : vector<1x128xf32> to vector<1x128xf32>
    %245 = vector.broadcast %244 : vector<1x128xf32> to vector<16x128xf32>
    %246 = vector.broadcast %cst_87 : f32 to vector<16x128xf32>
    %247 = arith.select %243, %245, %246 : vector<16x128xi1>, vector<16x128xf32>
    %248 = arith.addf %241, %247 : vector<16x128xf32>
    %c4 = arith.constant 4 : index
    %c0_88 = arith.constant 0 : index
    %249 = vector.load %arg6[%c4, %c0_88] : memref<8x512xf32, #tpu.memory_space<vmem>>, vector<1x128xf32>
    %250 = arith.mulf %248, %248 : vector<16x128xf32>
    %cst_89 = arith.constant dense<0.000000e+00> : vector<16xf32>
    %251 = vector.multi_reduction <add>, %250, %cst_89 [1] : vector<16x128xf32> to vector<16xf32>
    %252 = vector.shape_cast %251 : vector<16xf32> to vector<16x1xf32>
    %cst_90 = arith.constant 1.280000e+02 : f32
    %253 = vector.broadcast %cst_90 : f32 to vector<16x1xf32>
    %254 = arith.divf %252, %253 : vector<16x1xf32>
    %cst_91 = arith.constant 9.99999997E-7 : f32
    %255 = vector.broadcast %cst_91 : f32 to vector<16x1xf32>
    %256 = arith.addf %254, %255 : vector<16x1xf32>
    %257 = math.rsqrt %256 : vector<16x1xf32>
    %258 = vector.broadcast %257 : vector<16x1xf32> to vector<16x128xf32>
    %259 = arith.mulf %248, %258 : vector<16x128xf32>
    %260 = vector.broadcast %249 : vector<1x128xf32> to vector<16x128xf32>
    %261 = arith.mulf %259, %260 : vector<16x128xf32>
    %262 = arith.truncf %261 : vector<16x128xf32> to vector<16x128xbf16>
    %c0_92 = arith.constant 0 : index
    %c0_93 = arith.constant 0 : index
    %263 = vector.load %arg10[%c0_92, %c0_93] : memref<128x1792xbf16, #tpu.memory_space<vmem>>, vector<128x640xbf16>
    %cst_94 = arith.constant dense<0.000000e+00> : vector<16x640xf32>
    %264 = tpu.matmul %262, %263, %cst_94 {dimension_numbers = #tpu.dot_dimension_numbers<[1], [0], [0], [1], [0, 0, 1, 1], [], []>} : vector<16x128xbf16>, vector<128x640xbf16>, vector<16x640xf32> -> vector<16x640xf32>
    %c0_95 = arith.constant 0 : index
    %c0_96 = arith.constant 0 : index
    %265 = vector.load %arg5[%c0_95, %c0_96] : memref<32x128xf32, #tpu.memory_space<vmem>>, vector<16x128xf32>
    %c16 = arith.constant 16 : index
    %c0_97 = arith.constant 0 : index
    %266 = vector.load %arg5[%c16, %c0_97] : memref<32x128xf32, #tpu.memory_space<vmem>>, vector<16x128xf32>
    %267 = vector.extract_strided_slice %264 {offsets = [0, 0], sizes = [16, 128], strides = [1, 1]} : vector<16x640xf32> to vector<16x128xf32>
    %268 = arith.mulf %267, %265 : vector<16x128xf32>
    %269 = vector.extract_strided_slice %264 {offsets = [0, 384], sizes = [16, 128], strides = [1, 1]} : vector<16x640xf32> to vector<16x128xf32>
    %270 = arith.mulf %269, %266 : vector<16x128xf32>
    %271 = arith.addf %268, %270 : vector<16x128xf32>
    %272 = vector.extract_strided_slice %264 {offsets = [0, 128], sizes = [16, 128], strides = [1, 1]} : vector<16x640xf32> to vector<16x128xf32>
    %273 = arith.mulf %272, %265 : vector<16x128xf32>
    %274 = vector.extract_strided_slice %264 {offsets = [0, 512], sizes = [16, 128], strides = [1, 1]} : vector<16x640xf32> to vector<16x128xf32>
    %275 = arith.mulf %274, %266 : vector<16x128xf32>
    %276 = arith.addf %273, %275 : vector<16x128xf32>
    %277 = vector.extract_strided_slice %264 {offsets = [0, 256], sizes = [16, 128], strides = [1, 1]} : vector<16x640xf32> to vector<16x128xf32>
    %278 = tpu.iota {dimensions = array<i32: 0>} : vector<16x16xi32>
    %279 = tpu.iota {dimensions = array<i32: 1>} : vector<16x16xi32>
    %280 = arith.cmpi sle, %279, %278 : vector<16x16xi32>
    %c0_98 = arith.constant 0 : index
    %c0_99 = arith.constant 0 : index
    %c0_100 = arith.constant 0 : index
    %281 = vector.load %arg3[%c0_98, %c0_99, %c0_100] : memref<1x1x16xf32, #tpu.memory_space<vmem>>, vector<1x1x16xf32>
    %282 = vector.shape_cast %281 : vector<1x1x16xf32> to vector<1x16xf32>
    %cst_101 = arith.constant 5.000000e-01 : f32
    %283 = vector.broadcast %cst_101 : f32 to vector<1x16xf32>
    %284 = arith.cmpf ogt, %282, %283 : vector<1x16xf32>
    %285 = vector.broadcast %284 : vector<1x16xi1> to vector<16x16xi1>
    %286 = arith.andi %280, %285 : vector<16x16xi1>
    %cst_102 = arith.constant 0.000000e+00 : f32
    %cst_103 = arith.constant -1.000000e+30 : f32
    %287 = vector.broadcast %cst_102 : f32 to vector<16x16xf32>
    %288 = vector.broadcast %cst_103 : f32 to vector<16x16xf32>
    %289 = arith.select %286, %287, %288 : vector<16x16xi1>, vector<16x16xf32>
    %cst_104 = arith.constant 0.000000e+00 : f32
    %290 = vector.broadcast %cst_104 : f32 to vector<16x128xf32>
    %291 = vector.extract_strided_slice %271 {offsets = [0, 0], sizes = [16, 32], strides = [1, 1]} : vector<16x128xf32> to vector<16x32xf32>
    %292 = arith.truncf %291 : vector<16x32xf32> to vector<16x32xbf16>
    %293 = vector.extract_strided_slice %276 {offsets = [0, 0], sizes = [16, 32], strides = [1, 1]} : vector<16x128xf32> to vector<16x32xf32>
    %294 = arith.truncf %293 : vector<16x32xf32> to vector<16x32xbf16>
    %cst_105 = arith.constant dense<0.000000e+00> : vector<16x16xf32>
    %295 = tpu.matmul %292, %294, %cst_105 {dimension_numbers = #tpu.dot_dimension_numbers<[1], [1], [0], [0], [0, 0, 1, 0], [], []>} : vector<16x32xbf16>, vector<16x32xbf16>, vector<16x16xf32> -> vector<16x16xf32>
    %cst_106 = arith.constant 0.176776692 : f32
    %296 = vector.broadcast %cst_106 : f32 to vector<16x16xf32>
    %297 = arith.mulf %295, %296 : vector<16x16xf32>
    %298 = arith.addf %297, %289 : vector<16x16xf32>
    %cst_107 = arith.constant dense<0xFF800000> : vector<16xf32>
    %299 = vector.multi_reduction <maximumf>, %298, %cst_107 [1] : vector<16x16xf32> to vector<16xf32>
    %300 = vector.shape_cast %299 : vector<16xf32> to vector<16x1xf32>
    %301 = vector.broadcast %300 : vector<16x1xf32> to vector<16x16xf32>
    %302 = arith.subf %298, %301 : vector<16x16xf32>
    %303 = math.exp %302 : vector<16x16xf32>
    %cst_108 = arith.constant dense<0.000000e+00> : vector<16xf32>
    %304 = vector.multi_reduction <add>, %303, %cst_108 [1] : vector<16x16xf32> to vector<16xf32>
    %305 = vector.shape_cast %304 : vector<16xf32> to vector<16x1xf32>
    %306 = tpu.reciprocal %305 {approx = true} : vector<16x1xf32> -> vector<16x1xf32>
    %307 = vector.broadcast %306 : vector<16x1xf32> to vector<16x16xf32>
    %308 = arith.mulf %303, %307 : vector<16x16xf32>
    %309 = arith.truncf %308 : vector<16x16xf32> to vector<16x16xbf16>
    %310 = vector.extract_strided_slice %277 {offsets = [0, 0], sizes = [16, 32], strides = [1, 1]} : vector<16x128xf32> to vector<16x32xf32>
    %311 = arith.truncf %310 : vector<16x32xf32> to vector<16x32xbf16>
    %cst_109 = arith.constant dense<0.000000e+00> : vector<16x32xf32>
    %312 = tpu.matmul %309, %311, %cst_109 {dimension_numbers = #tpu.dot_dimension_numbers<[1], [0], [0], [1], [0, 0, 1, 1], [], []>} : vector<16x16xbf16>, vector<16x32xbf16>, vector<16x32xf32> -> vector<16x32xf32>
    %313 = arith.truncf %312 : vector<16x32xf32> to vector<16x32xbf16>
    %c0_110 = arith.constant 0 : index
    %c640 = arith.constant 640 : index
    %314 = vector.load %arg10[%c0_110, %c640] : memref<128x1792xbf16, #tpu.memory_space<vmem>>, vector<32x128xbf16>
    %cst_111 = arith.constant dense<0.000000e+00> : vector<16x128xf32>
    %315 = tpu.matmul %313, %314, %cst_111 {dimension_numbers = #tpu.dot_dimension_numbers<[1], [0], [0], [1], [0, 0, 1, 1], [], []>} : vector<16x32xbf16>, vector<32x128xbf16>, vector<16x128xf32> -> vector<16x128xf32>
    %316 = arith.addf %290, %315 : vector<16x128xf32>
    %317 = vector.extract_strided_slice %271 {offsets = [0, 32], sizes = [16, 32], strides = [1, 1]} : vector<16x128xf32> to vector<16x32xf32>
    %318 = arith.truncf %317 : vector<16x32xf32> to vector<16x32xbf16>
    %319 = vector.extract_strided_slice %276 {offsets = [0, 32], sizes = [16, 32], strides = [1, 1]} : vector<16x128xf32> to vector<16x32xf32>
    %320 = arith.truncf %319 : vector<16x32xf32> to vector<16x32xbf16>
    %cst_112 = arith.constant dense<0.000000e+00> : vector<16x16xf32>
    %321 = tpu.matmul %318, %320, %cst_112 {dimension_numbers = #tpu.dot_dimension_numbers<[1], [1], [0], [0], [0, 0, 1, 0], [], []>} : vector<16x32xbf16>, vector<16x32xbf16>, vector<16x16xf32> -> vector<16x16xf32>
    %cst_113 = arith.constant 0.176776692 : f32
    %322 = vector.broadcast %cst_113 : f32 to vector<16x16xf32>
    %323 = arith.mulf %321, %322 : vector<16x16xf32>
    %324 = arith.addf %323, %289 : vector<16x16xf32>
    %cst_114 = arith.constant dense<0xFF800000> : vector<16xf32>
    %325 = vector.multi_reduction <maximumf>, %324, %cst_114 [1] : vector<16x16xf32> to vector<16xf32>
    %326 = vector.shape_cast %325 : vector<16xf32> to vector<16x1xf32>
    %327 = vector.broadcast %326 : vector<16x1xf32> to vector<16x16xf32>
    %328 = arith.subf %324, %327 : vector<16x16xf32>
    %329 = math.exp %328 : vector<16x16xf32>
    %cst_115 = arith.constant dense<0.000000e+00> : vector<16xf32>
    %330 = vector.multi_reduction <add>, %329, %cst_115 [1] : vector<16x16xf32> to vector<16xf32>
    %331 = vector.shape_cast %330 : vector<16xf32> to vector<16x1xf32>
    %332 = tpu.reciprocal %331 {approx = true} : vector<16x1xf32> -> vector<16x1xf32>
    %333 = vector.broadcast %332 : vector<16x1xf32> to vector<16x16xf32>
    %334 = arith.mulf %329, %333 : vector<16x16xf32>
    %335 = arith.truncf %334 : vector<16x16xf32> to vector<16x16xbf16>
    %336 = vector.extract_strided_slice %277 {offsets = [0, 32], sizes = [16, 32], strides = [1, 1]} : vector<16x128xf32> to vector<16x32xf32>
    %337 = arith.truncf %336 : vector<16x32xf32> to vector<16x32xbf16>
    %cst_116 = arith.constant dense<0.000000e+00> : vector<16x32xf32>
    %338 = tpu.matmul %335, %337, %cst_116 {dimension_numbers = #tpu.dot_dimension_numbers<[1], [0], [0], [1], [0, 0, 1, 1], [], []>} : vector<16x16xbf16>, vector<16x32xbf16>, vector<16x32xf32> -> vector<16x32xf32>
    %339 = arith.truncf %338 : vector<16x32xf32> to vector<16x32xbf16>
    %c32_117 = arith.constant 32 : index
    %c640_118 = arith.constant 640 : index
    %340 = vector.load %arg10[%c32_117, %c640_118] : memref<128x1792xbf16, #tpu.memory_space<vmem>>, vector<32x128xbf16>
    %cst_119 = arith.constant dense<0.000000e+00> : vector<16x128xf32>
    %341 = tpu.matmul %339, %340, %cst_119 {dimension_numbers = #tpu.dot_dimension_numbers<[1], [0], [0], [1], [0, 0, 1, 1], [], []>} : vector<16x32xbf16>, vector<32x128xbf16>, vector<16x128xf32> -> vector<16x128xf32>
    %342 = arith.addf %316, %341 : vector<16x128xf32>
    %343 = vector.extract_strided_slice %271 {offsets = [0, 64], sizes = [16, 32], strides = [1, 1]} : vector<16x128xf32> to vector<16x32xf32>
    %344 = arith.truncf %343 : vector<16x32xf32> to vector<16x32xbf16>
    %345 = vector.extract_strided_slice %276 {offsets = [0, 64], sizes = [16, 32], strides = [1, 1]} : vector<16x128xf32> to vector<16x32xf32>
    %346 = arith.truncf %345 : vector<16x32xf32> to vector<16x32xbf16>
    %cst_120 = arith.constant dense<0.000000e+00> : vector<16x16xf32>
    %347 = tpu.matmul %344, %346, %cst_120 {dimension_numbers = #tpu.dot_dimension_numbers<[1], [1], [0], [0], [0, 0, 1, 0], [], []>} : vector<16x32xbf16>, vector<16x32xbf16>, vector<16x16xf32> -> vector<16x16xf32>
    %cst_121 = arith.constant 0.176776692 : f32
    %348 = vector.broadcast %cst_121 : f32 to vector<16x16xf32>
    %349 = arith.mulf %347, %348 : vector<16x16xf32>
    %350 = arith.addf %349, %289 : vector<16x16xf32>
    %cst_122 = arith.constant dense<0xFF800000> : vector<16xf32>
    %351 = vector.multi_reduction <maximumf>, %350, %cst_122 [1] : vector<16x16xf32> to vector<16xf32>
    %352 = vector.shape_cast %351 : vector<16xf32> to vector<16x1xf32>
    %353 = vector.broadcast %352 : vector<16x1xf32> to vector<16x16xf32>
    %354 = arith.subf %350, %353 : vector<16x16xf32>
    %355 = math.exp %354 : vector<16x16xf32>
    %cst_123 = arith.constant dense<0.000000e+00> : vector<16xf32>
    %356 = vector.multi_reduction <add>, %355, %cst_123 [1] : vector<16x16xf32> to vector<16xf32>
    %357 = vector.shape_cast %356 : vector<16xf32> to vector<16x1xf32>
    %358 = tpu.reciprocal %357 {approx = true} : vector<16x1xf32> -> vector<16x1xf32>
    %359 = vector.broadcast %358 : vector<16x1xf32> to vector<16x16xf32>
    %360 = arith.mulf %355, %359 : vector<16x16xf32>
    %361 = arith.truncf %360 : vector<16x16xf32> to vector<16x16xbf16>
    %362 = vector.extract_strided_slice %277 {offsets = [0, 64], sizes = [16, 32], strides = [1, 1]} : vector<16x128xf32> to vector<16x32xf32>
    %363 = arith.truncf %362 : vector<16x32xf32> to vector<16x32xbf16>
    %cst_124 = arith.constant dense<0.000000e+00> : vector<16x32xf32>
    %364 = tpu.matmul %361, %363, %cst_124 {dimension_numbers = #tpu.dot_dimension_numbers<[1], [0], [0], [1], [0, 0, 1, 1], [], []>} : vector<16x16xbf16>, vector<16x32xbf16>, vector<16x32xf32> -> vector<16x32xf32>
    %365 = arith.truncf %364 : vector<16x32xf32> to vector<16x32xbf16>
    %c64_125 = arith.constant 64 : index
    %c640_126 = arith.constant 640 : index
    %366 = vector.load %arg10[%c64_125, %c640_126] : memref<128x1792xbf16, #tpu.memory_space<vmem>>, vector<32x128xbf16>
    %cst_127 = arith.constant dense<0.000000e+00> : vector<16x128xf32>
    %367 = tpu.matmul %365, %366, %cst_127 {dimension_numbers = #tpu.dot_dimension_numbers<[1], [0], [0], [1], [0, 0, 1, 1], [], []>} : vector<16x32xbf16>, vector<32x128xbf16>, vector<16x128xf32> -> vector<16x128xf32>
    %368 = arith.addf %342, %367 : vector<16x128xf32>
    %369 = vector.extract_strided_slice %271 {offsets = [0, 96], sizes = [16, 32], strides = [1, 1]} : vector<16x128xf32> to vector<16x32xf32>
    %370 = arith.truncf %369 : vector<16x32xf32> to vector<16x32xbf16>
    %371 = vector.extract_strided_slice %276 {offsets = [0, 96], sizes = [16, 32], strides = [1, 1]} : vector<16x128xf32> to vector<16x32xf32>
    %372 = arith.truncf %371 : vector<16x32xf32> to vector<16x32xbf16>
    %cst_128 = arith.constant dense<0.000000e+00> : vector<16x16xf32>
    %373 = tpu.matmul %370, %372, %cst_128 {dimension_numbers = #tpu.dot_dimension_numbers<[1], [1], [0], [0], [0, 0, 1, 0], [], []>} : vector<16x32xbf16>, vector<16x32xbf16>, vector<16x16xf32> -> vector<16x16xf32>
    %cst_129 = arith.constant 0.176776692 : f32
    %374 = vector.broadcast %cst_129 : f32 to vector<16x16xf32>
    %375 = arith.mulf %373, %374 : vector<16x16xf32>
    %376 = arith.addf %375, %289 : vector<16x16xf32>
    %cst_130 = arith.constant dense<0xFF800000> : vector<16xf32>
    %377 = vector.multi_reduction <maximumf>, %376, %cst_130 [1] : vector<16x16xf32> to vector<16xf32>
    %378 = vector.shape_cast %377 : vector<16xf32> to vector<16x1xf32>
    %379 = vector.broadcast %378 : vector<16x1xf32> to vector<16x16xf32>
    %380 = arith.subf %376, %379 : vector<16x16xf32>
    %381 = math.exp %380 : vector<16x16xf32>
    %cst_131 = arith.constant dense<0.000000e+00> : vector<16xf32>
    %382 = vector.multi_reduction <add>, %381, %cst_131 [1] : vector<16x16xf32> to vector<16xf32>
    %383 = vector.shape_cast %382 : vector<16xf32> to vector<16x1xf32>
    %384 = tpu.reciprocal %383 {approx = true} : vector<16x1xf32> -> vector<16x1xf32>
    %385 = vector.broadcast %384 : vector<16x1xf32> to vector<16x16xf32>
    %386 = arith.mulf %381, %385 : vector<16x16xf32>
    %387 = arith.truncf %386 : vector<16x16xf32> to vector<16x16xbf16>
    %388 = vector.extract_strided_slice %277 {offsets = [0, 96], sizes = [16, 32], strides = [1, 1]} : vector<16x128xf32> to vector<16x32xf32>
    %389 = arith.truncf %388 : vector<16x32xf32> to vector<16x32xbf16>
    %cst_132 = arith.constant dense<0.000000e+00> : vector<16x32xf32>
    %390 = tpu.matmul %387, %389, %cst_132 {dimension_numbers = #tpu.dot_dimension_numbers<[1], [0], [0], [1], [0, 0, 1, 1], [], []>} : vector<16x16xbf16>, vector<16x32xbf16>, vector<16x32xf32> -> vector<16x32xf32>
    %391 = arith.truncf %390 : vector<16x32xf32> to vector<16x32xbf16>
    %c96_133 = arith.constant 96 : index
    %c640_134 = arith.constant 640 : index
    %392 = vector.load %arg10[%c96_133, %c640_134] : memref<128x1792xbf16, #tpu.memory_space<vmem>>, vector<32x128xbf16>
    %cst_135 = arith.constant dense<0.000000e+00> : vector<16x128xf32>
    %393 = tpu.matmul %391, %392, %cst_135 {dimension_numbers = #tpu.dot_dimension_numbers<[1], [0], [0], [1], [0, 0, 1, 1], [], []>} : vector<16x32xbf16>, vector<32x128xbf16>, vector<16x128xf32> -> vector<16x128xf32>
    %394 = arith.addf %368, %393 : vector<16x128xf32>
    %395 = arith.addf %248, %394 : vector<16x128xf32>
    %c4_136 = arith.constant 4 : index
    %c128_137 = arith.constant 128 : index
    %396 = vector.load %arg6[%c4_136, %c128_137] : memref<8x512xf32, #tpu.memory_space<vmem>>, vector<1x128xf32>
    %397 = arith.mulf %395, %395 : vector<16x128xf32>
    %cst_138 = arith.constant dense<0.000000e+00> : vector<16xf32>
    %398 = vector.multi_reduction <add>, %397, %cst_138 [1] : vector<16x128xf32> to vector<16xf32>
    %399 = vector.shape_cast %398 : vector<16xf32> to vector<16x1xf32>
    %cst_139 = arith.constant 1.280000e+02 : f32
    %400 = vector.broadcast %cst_139 : f32 to vector<16x1xf32>
    %401 = arith.divf %399, %400 : vector<16x1xf32>
    %cst_140 = arith.constant 9.99999997E-7 : f32
    %402 = vector.broadcast %cst_140 : f32 to vector<16x1xf32>
    %403 = arith.addf %401, %402 : vector<16x1xf32>
    %404 = math.rsqrt %403 : vector<16x1xf32>
    %405 = vector.broadcast %404 : vector<16x1xf32> to vector<16x128xf32>
    %406 = arith.mulf %395, %405 : vector<16x128xf32>
    %407 = vector.broadcast %396 : vector<1x128xf32> to vector<16x128xf32>
    %408 = arith.mulf %406, %407 : vector<16x128xf32>
    %409 = arith.truncf %408 : vector<16x128xf32> to vector<16x128xbf16>
    %c0_141 = arith.constant 0 : index
    %c768 = arith.constant 768 : index
    %410 = vector.load %arg10[%c0_141, %c768] : memref<128x1792xbf16, #tpu.memory_space<vmem>>, vector<128x512xbf16>
    %cst_142 = arith.constant dense<0.000000e+00> : vector<16x512xf32>
    %411 = tpu.matmul %409, %410, %cst_142 {dimension_numbers = #tpu.dot_dimension_numbers<[1], [0], [0], [1], [0, 0, 1, 1], [], []>} : vector<16x128xbf16>, vector<128x512xbf16>, vector<16x512xf32> -> vector<16x512xf32>
    %412 = vector.extract_strided_slice %411 {offsets = [0, 0], sizes = [16, 256], strides = [1, 1]} : vector<16x512xf32> to vector<16x256xf32>
    %413 = arith.negf %412 : vector<16x256xf32>
    %414 = math.exp %413 : vector<16x256xf32>
    %cst_143 = arith.constant 1.000000e+00 : f32
    %415 = vector.broadcast %cst_143 : f32 to vector<16x256xf32>
    %416 = arith.addf %415, %414 : vector<16x256xf32>
    %417 = arith.divf %415, %416 : vector<16x256xf32>
    %418 = arith.mulf %412, %417 : vector<16x256xf32>
    %419 = vector.extract_strided_slice %411 {offsets = [0, 256], sizes = [16, 256], strides = [1, 1]} : vector<16x512xf32> to vector<16x256xf32>
    %420 = arith.mulf %418, %419 : vector<16x256xf32>
    %421 = arith.truncf %420 : vector<16x256xf32> to vector<16x256xbf16>
    %c0_144 = arith.constant 0 : index
    %c0_145 = arith.constant 0 : index
    %422 = vector.load %arg11[%c0_144, %c0_145] : memref<256x128xbf16, #tpu.memory_space<vmem>>, vector<256x128xbf16>
    %cst_146 = arith.constant dense<0.000000e+00> : vector<16x128xf32>
    %423 = tpu.matmul %421, %422, %cst_146 {dimension_numbers = #tpu.dot_dimension_numbers<[1], [0], [0], [1], [0, 0, 1, 1], [], []>} : vector<16x256xbf16>, vector<256x128xbf16>, vector<16x128xf32> -> vector<16x128xf32>
    %424 = arith.addf %395, %423 : vector<16x128xf32>
    %425 = vector.extract_strided_slice %424 {offsets = [1, 0], sizes = [8, 128], strides = [1, 1]} : vector<16x128xf32> to vector<8x128xf32>
    %c4_147 = arith.constant 4 : index
    %c256_148 = arith.constant 256 : index
    %426 = vector.load %arg6[%c4_147, %c256_148] : memref<8x512xf32, #tpu.memory_space<vmem>>, vector<1x128xf32>
    %427 = arith.mulf %425, %425 : vector<8x128xf32>
    %cst_149 = arith.constant dense<0.000000e+00> : vector<8xf32>
    %428 = vector.multi_reduction <add>, %427, %cst_149 [1] : vector<8x128xf32> to vector<8xf32>
    %429 = vector.shape_cast %428 : vector<8xf32> to vector<8x1xf32>
    %cst_150 = arith.constant 1.280000e+02 : f32
    %430 = vector.broadcast %cst_150 : f32 to vector<8x1xf32>
    %431 = arith.divf %429, %430 : vector<8x1xf32>
    %cst_151 = arith.constant 9.99999997E-7 : f32
    %432 = vector.broadcast %cst_151 : f32 to vector<8x1xf32>
    %433 = arith.addf %431, %432 : vector<8x1xf32>
    %434 = math.rsqrt %433 : vector<8x1xf32>
    %435 = vector.broadcast %434 : vector<8x1xf32> to vector<8x128xf32>
    %436 = arith.mulf %425, %435 : vector<8x128xf32>
    %437 = vector.broadcast %426 : vector<1x128xf32> to vector<8x128xf32>
    %438 = arith.mulf %436, %437 : vector<8x128xf32>
    %439 = arith.truncf %438 : vector<8x128xf32> to vector<8x128xbf16>
    %c0_152 = arith.constant 0 : index
    %c1280 = arith.constant 1280 : index
    %440 = vector.load %arg10[%c0_152, %c1280] : memref<128x1792xbf16, #tpu.memory_space<vmem>>, vector<128x512xbf16>
    %cst_153 = arith.constant dense<0.000000e+00> : vector<8x512xf32>
    %441 = tpu.matmul %439, %440, %cst_153 {dimension_numbers = #tpu.dot_dimension_numbers<[1], [0], [0], [1], [0, 0, 1, 1], [], []>} : vector<8x128xbf16>, vector<128x512xbf16>, vector<8x512xf32> -> vector<8x512xf32>
    %c0_154 = arith.constant 0 : index
    %c0_155 = arith.constant 0 : index
    %c0_156 = arith.constant 0 : index
    %442 = vector.load %arg12[%c0_154, %c0_155, %c0_156] : memref<1x8x512xf32, #tpu.memory_space<vmem>>, vector<1x8x512xf32>
    %443 = vector.shape_cast %442 : vector<1x8x512xf32> to vector<8x512xf32>
    %444 = vector.shape_cast %441 : vector<8x512xf32> to vector<1x8x512xf32>
    tpu.vector_store %arg12[%c0_154, %c0_155, %c0_156], %444 {strides = array<i32>} : memref<1x8x512xf32, #tpu.memory_space<vmem>>, vector<1x8x512xf32>,
    return
  }
  func.func @transform_0(%arg0: i32) -> (i32, i32, i32) {
    %c0_i32 = arith.constant 0 : i32
    %c0_i32_0 = arith.constant 0 : i32
    %c0_i32_1 = arith.constant 0 : i32
    return %arg0, %c0_i32, %c0_i32_0 : i32, i32, i32
  }
  func.func @transform_1(%arg0: i32) -> (i32, i32, i32) {
    %c0_i32 = arith.constant 0 : i32
    %c0_i32_0 = arith.constant 0 : i32
    %c0_i32_1 = arith.constant 0 : i32
    return %arg0, %c0_i32, %c0_i32_0 : i32, i32, i32
  }
  func.func @transform_2(%arg0: i32) -> (i32, i32, i32) {
    %c0_i32 = arith.constant 0 : i32
    %c0_i32_0 = arith.constant 0 : i32
    %c0_i32_1 = arith.constant 0 : i32
    return %arg0, %c0_i32, %c0_i32_0 : i32, i32, i32
  }
  func.func @transform_3(%arg0: i32) -> (i32, i32) {
    %c0_i32 = arith.constant 0 : i32
    %c0_i32_0 = arith.constant 0 : i32
    %c0_i32_1 = arith.constant 0 : i32
    return %c0_i32, %c0_i32_0 : i32, i32
  }
  func.func @transform_4(%arg0: i32) -> (i32, i32) {
    %c0_i32 = arith.constant 0 : i32
    %c0_i32_0 = arith.constant 0 : i32
    %c0_i32_1 = arith.constant 0 : i32
    return %c0_i32, %c0_i32_0 : i32, i32
  }
  func.func @transform_5(%arg0: i32) -> (i32, i32) {
    %c0_i32 = arith.constant 0 : i32
    %c0_i32_0 = arith.constant 0 : i32
    %c0_i32_1 = arith.constant 0 : i32
    return %c0_i32, %c0_i32_0 : i32, i32
  }
  func.func @transform_6(%arg0: i32) -> (i32, i32) {
    %c0_i32 = arith.constant 0 : i32
    %c0_i32_0 = arith.constant 0 : i32
    %c0_i32_1 = arith.constant 0 : i32
    return %c0_i32, %c0_i32_0 : i32, i32
  }
  func.func @transform_7(%arg0: i32) -> (i32, i32) {
    %c0_i32 = arith.constant 0 : i32
    %c0_i32_0 = arith.constant 0 : i32
    %c0_i32_1 = arith.constant 0 : i32
    return %c0_i32, %c0_i32_0 : i32, i32
  }
  func.func @transform_8(%arg0: i32) -> (i32, i32) {
    %c0_i32 = arith.constant 0 : i32
    %c0_i32_0 = arith.constant 0 : i32
    %c0_i32_1 = arith.constant 0 : i32
    return %c0_i32, %c0_i32_0 : i32, i32
  }
  func.func @transform_9(%arg0: i32) -> (i32, i32) {
    %c0_i32 = arith.constant 0 : i32
    %c0_i32_0 = arith.constant 0 : i32
    %c0_i32_1 = arith.constant 0 : i32
    return %c0_i32, %c0_i32_0 : i32, i32
  }
  func.func @transform_10(%arg0: i32) -> (i32, i32) {
    %c0_i32 = arith.constant 0 : i32
    %c0_i32_0 = arith.constant 0 : i32
    %c0_i32_1 = arith.constant 0 : i32
    return %c0_i32, %c0_i32_0 : i32, i32
  }
  func.func @transform_11(%arg0: i32) -> (i32, i32, i32) {
    %c0_i32 = arith.constant 0 : i32
    %c0_i32_0 = arith.constant 0 : i32
    %c0_i32_1 = arith.constant 0 : i32
    return %arg0, %c0_i32, %c0_i32_0 : i32, i32, i32
  }
}

</mosaic_0001>

<llo_original>
// kernel: forward.1
$region0: #{forward.1}
  #allocation0 [shape = 'u32[]', space=smem, size = 0x4, offset = 0x4, fixed_abs, tag = 'smem constant byte address 0x4 - core index']
  #allocation1 [shape = 'u32[144,128]{1,0:T(1,128)}', space=vmem, size = 0x12000, scoped, tag = 'internal scratch']
  %s0 = inlined_call_operand.vmem [shape: f32[2,8,192], index: 0, kind: input, shape index: {}]
  %s1 = inlined_call_operand.vmem [shape: f32[2,16,128], index: 1, kind: input, shape index: {}]
  %s2 = inlined_call_operand.vmem [shape: f32[2,1,16], index: 2, kind: input, shape index: {}]
  %s3 = inlined_call_operand.vmem [shape: f32[8,128], index: 3, kind: input, shape index: {}]
  %s4 = inlined_call_operand.vmem [shape: f32[32,128], index: 4, kind: input, shape index: {}]
  %s5 = inlined_call_operand.hbm [shape: f32[8,512], index: 5, kind: input, shape index: {}]
  %s6 = inlined_call_operand.hbm [shape: bf16[192,128], index: 6, kind: input, shape index: {}]
  %s7 = inlined_call_operand.hbm [shape: bf16[128,1152], index: 7, kind: input, shape index: {}]
  %s8 = inlined_call_operand.vmem [shape: bf16[512,128], index: 8, kind: input, shape index: {}]
  %s9 = inlined_call_operand.vmem [shape: bf16[128,1792], index: 9, kind: input, shape index: {}]
  %s10 = inlined_call_operand.hbm [shape: bf16[256,128], index: 10, kind: input, shape index: {}]
  %s11 = inlined_call_operand.hbm [shape: f32[2,8,512], index: 11, kind: output, shape index: {}]
  %s12 = sld [smem:[#allocation0]]
  $region93: #{forward.1} parent=0
    _
  %s14 = ssub.s32 1, %s12
  %s15 = scalar_select 0, %s14, %s12
  $region1: #{forward.1} parent=0
    #allocation2 [shape = 'u8[16384]{0}', space=vmem, size = 0x4000, scoped, tag = 'input window, operand 5, single buffered']
    #allocation3 [shape = 's32[2]{0}', space=sflag, size = 0x8, scoped, tag = 'scoped memory for forward.1']
    #allocation4 [shape = 's32[2]{0}', space=sflag, size = 0x8, scoped, tag = 'scoped memory for forward.1']
    #allocation5 [shape = 'u8[49152]{0}', space=vmem, size = 0xc000, scoped, tag = 'input window, operand 6, single buffered']
    #allocation6 [shape = 's32[1]{0}', space=sflag, size = 0x4, scoped, tag = 'scoped memory for forward.1']
    #allocation7 [shape = 'u8[294912]{0}', space=vmem, size = 0x48000, scoped, tag = 'input window, operand 7, single buffered']
    #allocation8 [shape = 'u8[65536]{0}', space=vmem, size = 0x10000, scoped, tag = 'input window, operand 10, single buffered']
    #allocation9 [shape = 's32[1]{0}', space=sflag, size = 0x4, scoped, tag = 'scoped memory for forward.1']
    #allocation10 [shape = 'u8[32768]{0}', space=vmem, size = 0x8000, scoped, tag = 'output window, operand 0']
    %16 = vsyncpa [#allocation3], 0
    %17 = vsyncpa [#allocation6], 0
    %18 = vsyncpa [#allocation9], 0
    %19 = vsyncpa [#allocation4], 0
    %s20 = scalar_lea.sflag [#allocation4], 1
    %21 = vsyncpa %s20, 0
    loop: start=0, step=1, limit=4
    $region2: #{forward.1} parent=1 // loop_pre_header
      _
    $region3: #{forward.1} parent=1 // loop_header
      %s23 = sphi 0, %s27
      %p24 = scmp.ge.s32.totalorder %s23, 4
      %s33 = sphi 0, %s35
      %s36 = sphi 0, %s33
      %s37 = sphi 0, %s36
      %s53 = sphi 0, %s37
      %s59 = sphi 0, %s61
      %s62 = sphi 0, %s59
      %s63 = sphi 0, %s62
      %s79 = sphi 0, %s63
      %s85 = sphi 0, %s87
      %s88 = sphi 0, %s85
      %s89 = sphi 0, %s88
      %s105 = sphi 0, %s89
      %s109 = sphi 0, %s109
      %s111 = sphi 0, %s109
      %s112 = sphi 0, %s111
      %s126 = sphi 0, %s112
      %s130 = sphi 0, %s130
      %s132 = sphi 0, %s130
      %s133 = sphi 0, %s132
      %s147 = sphi 0, %s133
      %s151 = sphi 0, %s151
      %s153 = sphi 0, %s151
      %s154 = sphi 0, %s153
      %s168 = sphi 0, %s154
      %s172 = sphi 0, %s172
      %s174 = sphi 0, %s172
      %s175 = sphi 0, %s174
      %s189 = sphi 0, %s175
      %s193 = sphi 0, %s193
      %s195 = sphi 0, %s193
      %s196 = sphi 0, %s195
      %s210 = sphi 0, %s196
      %s214 = sphi 0, %s214
      %s216 = sphi 0, %s214
      %s217 = sphi 0, %s216
      %s231 = sphi 0, %s217
      %s235 = sphi 0, %s235
      %s237 = sphi 0, %s235
      %s238 = sphi 0, %s237
      %s252 = sphi 0, %s238
      %s256 = sphi 0, %s256
      %s258 = sphi 0, %s256
      %s259 = sphi 0, %s258
      %s273 = sphi 0, %s259
      %s279 = sphi 0, %s281
      %s282 = sphi 0, %s279
      %s283 = sphi 0, %s282
      %s299 = sphi 0, %s283
    $region4: #{forward.1} parent=1 // loop_header_branch
      %26 = sbr.rel (%p24) target = $region8
    $region5: #{forward.1} parent=1 // loop_body
      %s28 = ssub.s32 %s23, 1
      %s29 = ssub.s32 %s23, 2
      %s30 = sadd.s32 %s23, 1
      %s31 = ssub.s32 %s23, %s30
      %p32 = scmp.eq.s32.totalorder %s31, 0
      %s34 = sadd.s32 %s33, 1
      %s35 = scalar_select %p32, %s33, %s34
      %p38 = pneg %p32
      %p39 = scmp.eq.s32.totalorder %s23, 1
      %p40 = por %p38, %p39
      %p41 = scmp.ne.s32.totalorder %s33, %s36
      %p42 = scmp.eq.s32.totalorder %s23, 0
      %p43 = por %p41, %p42
      %p44 = scmp.ne.s32.totalorder %s33, %s36
      %p45 = scmp.eq.s32.totalorder %s28, 1
      %p46 = por %p44, %p45
      %p47 = scmp.ne.s32.totalorder %s36, %s37
      %p48 = scmp.eq.s32.totalorder %s28, 0
      %p49 = por %p47, %p48
      %p50 = scmp.ne.s32.totalorder %s36, %s37
      %p51 = scmp.eq.s32.totalorder %s29, 1
      %p52 = por %p50, %p51
      %p54 = scmp.ne.s32.totalorder %s37, %s53
      %p55 = scmp.eq.s32.totalorder %s29, 0
      %p56 = por %p54, %p55
      %s57 = ssub.s32 %s23, %s30
      %p58 = scmp.eq.s32.totalorder %s57, 0
      %s60 = sadd.s32 %s59, 1
      %s61 = scalar_select %p58, %s59, %s60
      %p64 = pneg %p58
      %p65 = scmp.eq.s32.totalorder %s23, 1
      %p66 = por %p64, %p65
      %p67 = scmp.ne.s32.totalorder %s59, %s62
      %p68 = scmp.eq.s32.totalorder %s23, 0
      %p69 = por %p67, %p68
      %p70 = scmp.ne.s32.totalorder %s59, %s62
      %p71 = scmp.eq.s32.totalorder %s28, 1
      %p72 = por %p70, %p71
      %p73 = scmp.ne.s32.totalorder %s62, %s63
      %p74 = scmp.eq.s32.totalorder %s28, 0
      %p75 = por %p73, %p74
      %p76 = scmp.ne.s32.totalorder %s62, %s63
      %p77 = scmp.eq.s32.totalorder %s29, 1
      %p78 = por %p76, %p77
      %p80 = scmp.ne.s32.totalorder %s63, %s79
      %p81 = scmp.eq.s32.totalorder %s29, 0
      %p82 = por %p80, %p81
      %s83 = ssub.s32 %s23, %s30
      %p84 = scmp.eq.s32.totalorder %s83, 0
      %s86 = sadd.s32 %s85, 1
      %s87 = scalar_select %p84, %s85, %s86
      %p90 = pneg %p84
      %p91 = scmp.eq.s32.totalorder %s23, 1
      %p92 = por %p90, %p91
      %p93 = scmp.ne.s32.totalorder %s85, %s88
      %p94 = scmp.eq.s32.totalorder %s23, 0
      %p95 = por %p93, %p94
      %p96 = scmp.ne.s32.totalorder %s85, %s88
      %p97 = scmp.eq.s32.totalorder %s28, 1
      %p98 = por %p96, %p97
      %p99 = scmp.ne.s32.totalorder %s88, %s89
      %p100 = scmp.eq.s32.totalorder %s28, 0
      %p101 = por %p99, %p100
      %p102 = scmp.ne.s32.totalorder %s88, %s89
      %p103 = scmp.eq.s32.totalorder %s29, 1
      %p104 = por %p102, %p103
      %p106 = scmp.ne.s32.totalorder %s89, %s105
      %p107 = scmp.eq.s32.totalorder %s29, 0
      %p108 = por %p106, %p107
      %s110 = sadd.s32 %s109, 1
      %p113 = scmp.eq.s32.totalorder %s23, 1
      %p114 = scmp.ne.s32.totalorder %s109, %s111
      %p115 = scmp.eq.s32.totalorder %s23, 0
      %p116 = por %p114, %p115
      %p117 = scmp.ne.s32.totalorder %s109, %s111
      %p118 = scmp.eq.s32.totalorder %s28, 1
      %p119 = por %p117, %p118
      %p120 = scmp.ne.s32.totalorder %s111, %s112
      %p121 = scmp.eq.s32.totalorder %s28, 0
      %p122 = por %p120, %p121
      %p123 = scmp.ne.s32.totalorder %s111, %s112
      %p124 = scmp.eq.s32.totalorder %s29, 1
      %p125 = por %p123, %p124
      %p127 = scmp.ne.s32.totalorder %s112, %s126
      %p128 = scmp.eq.s32.totalorder %s29, 0
      %p129 = por %p127, %p128
      %s131 = sadd.s32 %s130, 1
      %p134 = scmp.eq.s32.totalorder %s23, 1
      %p135 = scmp.ne.s32.totalorder %s130, %s132
      %p136 = scmp.eq.s32.totalorder %s23, 0
      %p137 = por %p135, %p136
      %p138 = scmp.ne.s32.totalorder %s130, %s132
      %p139 = scmp.eq.s32.totalorder %s28, 1
      %p140 = por %p138, %p139
      %p141 = scmp.ne.s32.totalorder %s132, %s133
      %p142 = scmp.eq.s32.totalorder %s28, 0
      %p143 = por %p141, %p142
      %p144 = scmp.ne.s32.totalorder %s132, %s133
      %p145 = scmp.eq.s32.totalorder %s29, 1
      %p146 = por %p144, %p145
      %p148 = scmp.ne.s32.totalorder %s133, %s147
      %p149 = scmp.eq.s32.totalorder %s29, 0
      %p150 = por %p148, %p149
      %s152 = sadd.s32 %s151, 1
      %p155 = scmp.eq.s32.totalorder %s23, 1
      %p156 = scmp.ne.s32.totalorder %s151, %s153
      %p157 = scmp.eq.s32.totalorder %s23, 0
      %p158 = por %p156, %p157
      %p159 = scmp.ne.s32.totalorder %s151, %s153
      %p160 = scmp.eq.s32.totalorder %s28, 1
      %p161 = por %p159, %p160
      %p162 = scmp.ne.s32.totalorder %s153, %s154
      %p163 = scmp.eq.s32.totalorder %s28, 0
      %p164 = por %p162, %p163
      %p165 = scmp.ne.s32.totalorder %s153, %s154
      %p166 = scmp.eq.s32.totalorder %s29, 1
      %p167 = por %p165, %p166
      %p169 = scmp.ne.s32.totalorder %s154, %s168
      %p170 = scmp.eq.s32.totalorder %s29, 0
      %p171 = por %p169, %p170
      %s173 = sadd.s32 %s172, 1
      %p176 = scmp.eq.s32.totalorder %s23, 1
      %p177 = scmp.ne.s32.totalorder %s172, %s174
      %p178 = scmp.eq.s32.totalorder %s23, 0
      %p179 = por %p177, %p178
      %p180 = scmp.ne.s32.totalorder %s172, %s174
      %p181 = scmp.eq.s32.totalorder %s28, 1
      %p182 = por %p180, %p181
      %p183 = scmp.ne.s32.totalorder %s174, %s175
      %p184 = scmp.eq.s32.totalorder %s28, 0
      %p185 = por %p183, %p184
      %p186 = scmp.ne.s32.totalorder %s174, %s175
      %p187 = scmp.eq.s32.totalorder %s29, 1
      %p188 = por %p186, %p187
      %p190 = scmp.ne.s32.totalorder %s175, %s189
      %p191 = scmp.eq.s32.totalorder %s29, 0
      %p192 = por %p190, %p191
      %s194 = sadd.s32 %s193, 1
      %p197 = scmp.eq.s32.totalorder %s23, 1
      %p198 = scmp.ne.s32.totalorder %s193, %s195
      %p199 = scmp.eq.s32.totalorder %s23, 0
      %p200 = por %p198, %p199
      %p201 = scmp.ne.s32.totalorder %s193, %s195
      %p202 = scmp.eq.s32.totalorder %s28, 1
      %p203 = por %p201, %p202
      %p204 = scmp.ne.s32.totalorder %s195, %s196
      %p205 = scmp.eq.s32.totalorder %s28, 0
      %p206 = por %p204, %p205
      %p207 = scmp.ne.s32.totalorder %s195, %s196
      %p208 = scmp.eq.s32.totalorder %s29, 1
      %p209 = por %p207, %p208
      %p211 = scmp.ne.s32.totalorder %s196, %s210
      %p212 = scmp.eq.s32.totalorder %s29, 0
      %p213 = por %p211, %p212
      %s215 = sadd.s32 %s214, 1
      %p218 = scmp.eq.s32.totalorder %s23, 1
      %p219 = scmp.ne.s32.totalorder %s214, %s216
      %p220 = scmp.eq.s32.totalorder %s23, 0
      %p221 = por %p219, %p220
      %p222 = scmp.ne.s32.totalorder %s214, %s216
      %p223 = scmp.eq.s32.totalorder %s28, 1
      %p224 = por %p222, %p223
      %p225 = scmp.ne.s32.totalorder %s216, %s217
      %p226 = scmp.eq.s32.totalorder %s28, 0
      %p227 = por %p225, %p226
      %p228 = scmp.ne.s32.totalorder %s216, %s217
      %p229 = scmp.eq.s32.totalorder %s29, 1
      %p230 = por %p228, %p229
      %p232 = scmp.ne.s32.totalorder %s217, %s231
      %p233 = scmp.eq.s32.totalorder %s29, 0
      %p234 = por %p232, %p233
      %s236 = sadd.s32 %s235, 1
      %p239 = scmp.eq.s32.totalorder %s23, 1
      %p240 = scmp.ne.s32.totalorder %s235, %s237
      %p241 = scmp.eq.s32.totalorder %s23, 0
      %p242 = por %p240, %p241
      %p243 = scmp.ne.s32.totalorder %s235, %s237
      %p244 = scmp.eq.s32.totalorder %s28, 1
      %p245 = por %p243, %p244
      %p246 = scmp.ne.s32.totalorder %s237, %s238
      %p247 = scmp.eq.s32.totalorder %s28, 0
      %p248 = por %p246, %p247
      %p249 = scmp.ne.s32.totalorder %s237, %s238
      %p250 = scmp.eq.s32.totalorder %s29, 1
      %p251 = por %p249, %p250
      %p253 = scmp.ne.s32.totalorder %s238, %s252
      %p254 = scmp.eq.s32.totalorder %s29, 0
      %p255 = por %p253, %p254
      %s257 = sadd.s32 %s256, 1
      %p260 = scmp.eq.s32.totalorder %s23, 1
      %p261 = scmp.ne.s32.totalorder %s256, %s258
      %p262 = scmp.eq.s32.totalorder %s23, 0
      %p263 = por %p261, %p262
      %p264 = scmp.ne.s32.totalorder %s256, %s258
      %p265 = scmp.eq.s32.totalorder %s28, 1
      %p266 = por %p264, %p265
      %p267 = scmp.ne.s32.totalorder %s258, %s259
      %p268 = scmp.eq.s32.totalorder %s28, 0
      %p269 = por %p267, %p268
      %p270 = scmp.ne.s32.totalorder %s258, %s259
      %p271 = scmp.eq.s32.totalorder %s29, 1
      %p272 = por %p270, %p271
      %p274 = scmp.ne.s32.totalorder %s259, %s273
      %p275 = scmp.eq.s32.totalorder %s29, 0
      %p276 = por %p274, %p275
      %s277 = ssub.s32 %s23, %s30
      %p278 = scmp.eq.s32.totalorder %s277, 0
      %s280 = sadd.s32 %s279, 1
      %s281 = scalar_select %p278, %s279, %s280
      %p284 = pneg %p278
      %p285 = scmp.eq.s32.totalorder %s23, 1
      %p286 = por %p284, %p285
      %p287 = scmp.ne.s32.totalorder %s279, %s282
      %p288 = scmp.eq.s32.totalorder %s23, 0
      %p289 = por %p287, %p288
      %p290 = scmp.ne.s32.totalorder %s279, %s282
      %p291 = scmp.eq.s32.totalorder %s28, 1
      %p292 = por %p290, %p291
      %p293 = scmp.ne.s32.totalorder %s282, %s283
      %p294 = scmp.eq.s32.totalorder %s28, 0
      %p295 = por %p293, %p294
      %p296 = scmp.ne.s32.totalorder %s282, %s283
      %p297 = scmp.eq.s32.totalorder %s29, 1
      %p298 = por %p296, %p297
      %p300 = scmp.ne.s32.totalorder %s283, %s299
      %p301 = scmp.eq.s32.totalorder %s29, 0
      %p302 = por %p300, %p301
      %p303 = scmp.le.s32.totalorder 1, %s23
      %p304 = scmp.lt.s32.totalorder %s23, 3
      %p305 = pnand %p303, %p304
      %p306 = pneg %p305
      // Predicated region
      $region9: #{forward.1} parent=5 // pred_check
        _
      $region10: #{forward.1} parent=5 // pred_check_branch
        %308 = sbr.rel (%p305) target = $region12
      $region11: #{forward.1} parent=5 // pred_region
        %s309 = ssub.s32 %s23, 1
        // Predicated region
        $region13: #{forward.1} parent=11 // pred_check
          %p310 = pneg %p122
        $region14: #{forward.1} parent=11 // pred_check_branch
          %312 = sbr.rel (%p310) target = $region16
        $region15: #{forward.1} parent=11 // pred_region
          _
        $region16: #{forward.1} parent=11 // pred_fallthru
          _
        // Predicated region
        $region17: #{forward.1} parent=11 // pred_check
          %p313 = pneg %p143
        $region18: #{forward.1} parent=11 // pred_check_branch
          %315 = sbr.rel (%p313) target = $region20
        $region19: #{forward.1} parent=11 // pred_region
          _
        $region20: #{forward.1} parent=11 // pred_fallthru
          _
        // Predicated region
        $region21: #{forward.1} parent=11 // pred_check
          %p316 = pneg %p164
        $region22: #{forward.1} parent=11 // pred_check_branch
          %318 = sbr.rel (%p316) target = $region24
        $region23: #{forward.1} parent=11 // pred_region
          %s320 = ssub.s32 512, 512
          %321 = vsyncadd [#allocation3], %s320
          %s323 = sshll.u32 [#allocation2], 4
          %s324 = int_to_ptr.vmem [resolvable:$true] %s323
          %326 = dma.hbm_to_vmem [thread:$0]  %s5, 512, %s324, [#allocation3]
        $region24: #{forward.1} parent=11 // pred_fallthru
          _
        // Predicated region
        $region25: #{forward.1} parent=11 // pred_check
          %p327 = pneg %p185
        $region26: #{forward.1} parent=11 // pred_check_branch
          %329 = sbr.rel (%p327) target = $region28
        $region27: #{forward.1} parent=11 // pred_region
          %s331 = ssub.s32 1536, 1536
          %332 = vsyncadd [#allocation6], %s331
          %s333 = sshll.u32 [#allocation5], 4
          %s334 = int_to_ptr.vmem [resolvable:$true] %s333
          %339 = dma.hbm_to_vmem [thread:$0]  %s6, 1536, %s334, [#allocation6], 64, 64, 4
        $region28: #{forward.1} parent=11 // pred_fallthru
          _
        // Predicated region
        $region29: #{forward.1} parent=11 // pred_check
          %p340 = pneg %p206
        $region30: #{forward.1} parent=11 // pred_check_branch
          %342 = sbr.rel (%p340) target = $region32
        $region31: #{forward.1} parent=11 // pred_region
          %s344 = ssub.s32 9216, 9216
          %345 = vsyncadd [#allocation6], %s344
          %s346 = sshll.u32 [#allocation7], 4
          %s347 = int_to_ptr.vmem [resolvable:$true] %s346
          %352 = dma.hbm_to_vmem [thread:$0]  %s7, 9216, %s347, [#allocation6], 576, 576, 36
        $region32: #{forward.1} parent=11 // pred_fallthru
          _
        // Predicated region
        $region33: #{forward.1} parent=11 // pred_check
          %p353 = pneg %p227
        $region34: #{forward.1} parent=11 // pred_check_branch
          %355 = sbr.rel (%p353) target = $region36
        $region35: #{forward.1} parent=11 // pred_region
          _
        $region36: #{forward.1} parent=11 // pred_fallthru
          _
        // Predicated region
        $region37: #{forward.1} parent=11 // pred_check
          %p356 = pneg %p248
        $region38: #{forward.1} parent=11 // pred_check_branch
          %358 = sbr.rel (%p356) target = $region40
        $region39: #{forward.1} parent=11 // pred_region
          _
        $region40: #{forward.1} parent=11 // pred_fallthru
          _
        // Predicated region
        $region41: #{forward.1} parent=11 // pred_check
          %p359 = pneg %p269
        $region42: #{forward.1} parent=11 // pred_check_branch
          %361 = sbr.rel (%p359) target = $region44
        $region43: #{forward.1} parent=11 // pred_region
          %s363 = ssub.s32 2048, 2048
          %364 = vsyncadd [#allocation9], %s363
          %s365 = sshll.u32 [#allocation8], 4
          %s366 = int_to_ptr.vmem [resolvable:$true] %s365
          %371 = dma.hbm_to_vmem [thread:$0]  %s10, 2048, %s366, [#allocation9], 64, 64, 4
        $region44: #{forward.1} parent=11 // pred_fallthru
          _
      $region12: #{forward.1} parent=5 // pred_fallthru
        _
      %p372 = scmp.lt.s32.totalorder %s23, 2
      // Predicated region
      $region45: #{forward.1} parent=5 // pred_check
        %p373 = pneg %p372
      $region46: #{forward.1} parent=5 // pred_check_branch
        %375 = sbr.rel (%p373) target = $region48
      $region47: #{forward.1} parent=5 // pred_region
        // Predicated region
        $region49: #{forward.1} parent=47 // pred_check
          %p376 = pneg %p43
        $region50: #{forward.1} parent=47 // pred_check_branch
          %378 = sbr.rel (%p376) target = $region52
        $region51: #{forward.1} parent=47 // pred_region
          %p379 = scmp.lt.s32.totalorder %s23, 1
          %s380 = scalar_select %p379, %s23, 1
          %s381 = smul.addr %s380, 2
          %s382 = smul.addr %s381, 8
          %s383 = scalar_lea.vmem %s0, %s382
        $region52: #{forward.1} parent=47 // pred_fallthru
          _
        // Predicated region
        $region53: #{forward.1} parent=47 // pred_check
          %p384 = pneg %p69
        $region54: #{forward.1} parent=47 // pred_check_branch
          %386 = sbr.rel (%p384) target = $region56
        $region55: #{forward.1} parent=47 // pred_region
          %p387 = scmp.lt.s32.totalorder %s23, 1
          %s388 = scalar_select %p387, %s23, 1
          %s389 = smul.addr %s388, 2
          %s390 = smul.addr %s389, 8
          %s391 = scalar_lea.vmem %s1, %s390
        $region56: #{forward.1} parent=47 // pred_fallthru
          _
        // Predicated region
        $region57: #{forward.1} parent=47 // pred_check
          %p392 = pneg %p95
        $region58: #{forward.1} parent=47 // pred_check_branch
          %394 = sbr.rel (%p392) target = $region60
        $region59: #{forward.1} parent=47 // pred_region
          %p395 = scmp.lt.s32.totalorder %s23, 1
          %s396 = scalar_select %p395, %s23, 1
          %s397 = scalar_lea.vmem %s2, %s396
        $region60: #{forward.1} parent=47 // pred_fallthru
          _
      $region48: #{forward.1} parent=5 // pred_fallthru
        _
      %p398 = scmp.le.s32.totalorder 1, %s23
      %p399 = scmp.lt.s32.totalorder %s23, 3
      %p400 = pnand %p398, %p399
      %p401 = pneg %p400
      // Predicated region
      $region61: #{forward.1} parent=5 // pred_check
        _
      $region62: #{forward.1} parent=5 // pred_check_branch
        %403 = sbr.rel (%p400) target = $region64
      $region63: #{forward.1} parent=5 // pred_region
        %s404 = ssub.s32 %s23, 1
        // Predicated region
        $region65: #{forward.1} parent=63 // pred_check
          %p405 = pneg %p164
        $region66: #{forward.1} parent=63 // pred_check_branch
          %407 = sbr.rel (%p405) target = $region68
        $region67: #{forward.1} parent=63 // pred_region
          %408 = dma.done [#allocation3], 512
        $region68: #{forward.1} parent=63 // pred_fallthru
          _
        // Predicated region
        $region69: #{forward.1} parent=63 // pred_check
          %p409 = pneg %p185
        $region70: #{forward.1} parent=63 // pred_check_branch
          %411 = sbr.rel (%p409) target = $region72
        $region71: #{forward.1} parent=63 // pred_region
          %412 = dma.done [#allocation6], 1536
        $region72: #{forward.1} parent=63 // pred_fallthru
          _
        // Predicated region
        $region73: #{forward.1} parent=63 // pred_check
          %p413 = pneg %p206
        $region74: #{forward.1} parent=63 // pred_check_branch
          %415 = sbr.rel (%p413) target = $region76
        $region75: #{forward.1} parent=63 // pred_region
          %416 = dma.done [#allocation6], 9216
        $region76: #{forward.1} parent=63 // pred_fallthru
          _
        // Predicated region
        $region77: #{forward.1} parent=63 // pred_check
          %p417 = pneg %p269
        $region78: #{forward.1} parent=63 // pred_check_branch
          %419 = sbr.rel (%p417) target = $region80
        $region79: #{forward.1} parent=63 // pred_region
          %420 = dma.done [#allocation9], 2048
        $region80: #{forward.1} parent=63 // pred_fallthru
          _
        %p421 = scmp.lt.s32.totalorder %s28, 1
        %s422 = scalar_select %p421, %s28, 1
        %s423 = smul.addr %s422, 2
        %s424 = smul.addr %s423, 8
        %s425 = scalar_lea.vmem %s0, %s424
        %p426 = pneg %p49
        %p427 = pneg %p46
        %p428 = scmp.lt.s32.totalorder %s28, 1
        %s429 = scalar_select %p428, %s28, 1
        %s430 = smul.addr %s429, 2
        %s431 = smul.addr %s430, 8
        %s432 = scalar_lea.vmem %s1, %s431
        %p433 = pneg %p75
        %p434 = pneg %p72
        %p435 = scmp.lt.s32.totalorder %s28, 1
        %s436 = scalar_select %p435, %s28, 1
        %s437 = scalar_lea.vmem %s2, %s436
        %p438 = pneg %p101
        %p439 = pneg %p98
        %p440 = pneg %p122
        %p441 = pneg %p119
        %p442 = pneg %p143
        %p443 = pneg %p140
        %p444 = pneg %p164
        %p445 = pneg %p161
        %p446 = pneg %p185
        %p447 = pneg %p182
        %p448 = pneg %p206
        %p449 = pneg %p203
        %p450 = pneg %p227
        %p451 = pneg %p224
        %p452 = pneg %p248
        %p453 = pneg %p245
        %p454 = pneg %p269
        %p455 = pneg %p266
        %p456 = pneg %p295
        %p457 = pneg %p292
        %s458 = sand.u32 %s282, 1
        %s459 = scalar_lea.sflag [#allocation4], %s458
        %s460 = sand.u32 %s282, 1
        %s461 = smul.addr %s460, 32
        %s462 = scalar_lea.vmem [#allocation10], %s461
        %p463 = scmp.lt.s32.totalorder %s28, 1
        %s464 = scalar_select %p463, %s28, 1
        %s465 = smul.addr %s464, 2
        %s466 = smul.addr %s465, 8
        %s467 = scalar_lea.vmem %s0, %s466
        %p468 = scmp.lt.s32.totalorder %s28, 1
        %s469 = scalar_select %p468, %s28, 1
        %s470 = smul.addr %s469, 2
        %s471 = smul.addr %s470, 8
        %s472 = scalar_lea.vmem %s1, %s471
        %p473 = scmp.lt.s32.totalorder %s28, 1
        %s474 = scalar_select %p473, %s28, 1
        %s475 = scalar_lea.vmem %s2, %s474
        %v477 = vld [vmem:[%s467] sm:$0xff]
        %v478 = vld [vmem:[%s467 + $0x8] sm:$0xff]
        %v479 = vpack.c.bf16 %v477, %v477
        %v480 = vpack.c.bf16 %v478, %v478
        %v481 = vld [vmem:[#allocation5] sm:$0xf]
        %v482 = vld [vmem:[#allocation5 + $0x4] sm:$0xf]
        %v483 = vld [vmem:[#allocation5 + $0x8] sm:$0xf]
        %v484 = vld [vmem:[#allocation5 + $0xc] sm:$0xf]
        %v485 = vld [vmem:[#allocation5 + $0x10] sm:$0xf]
        %v486 = vld [vmem:[#allocation5 + $0x14] sm:$0xf]
        %v487 = vld [vmem:[#allocation5 + $0x18] sm:$0xf]
        %v488 = vld [vmem:[#allocation5 + $0x1c] sm:$0xf]
        %v489 = vld [vmem:[#allocation5 + $0x20] sm:$0xf]
        %v490 = vld [vmem:[#allocation5 + $0x24] sm:$0xf]
        %v491 = vld [vmem:[#allocation5 + $0x28] sm:$0xf]
        %v492 = vld [vmem:[#allocation5 + $0x2c] sm:$0xf]
        %v493 = vld [vmem:[#allocation5 + $0x30] sm:$0xf]
        %v494 = vld [vmem:[#allocation5 + $0x34] sm:$0xf]
        %v495 = vld [vmem:[#allocation5 + $0x38] sm:$0xf]
        %v496 = vld [vmem:[#allocation5 + $0x3c] sm:$0xf]
        %v497 = vld [vmem:[#allocation5 + $0x40] sm:$0xf]
        %v498 = vld [vmem:[#allocation5 + $0x44] sm:$0xf]
        %v499 = vld [vmem:[#allocation5 + $0x48] sm:$0xf]
        %v500 = vld [vmem:[#allocation5 + $0x4c] sm:$0xf]
        %v501 = vld [vmem:[#allocation5 + $0x50] sm:$0xf]
        %v502 = vld [vmem:[#allocation5 + $0x54] sm:$0xf]
        %v503 = vld [vmem:[#allocation5 + $0x58] sm:$0xf]
        %v504 = vld [vmem:[#allocation5 + $0x5c] sm:$0xf]
        %v505 = vld [vmem:[%s3] sm:$0xff]
        %v530 = vunpack.c.l.b16 %v481
        %v531 = vunpack.c.l.b16 %v482
        %v532 = vunpack.c.l.b16 %v483
        %v533 = vunpack.c.l.b16 %v484
        %v534 = vunpack.c.l.b16 %v485
        %v535 = vunpack.c.l.b16 %v486
        %v536 = vunpack.c.l.b16 %v487
        %v537 = vunpack.c.l.b16 %v488
        %v538 = vunpack.c.l.b16 %v489
        %v539 = vunpack.c.l.b16 %v490
        %v540 = vunpack.c.l.b16 %v491
        %v541 = vunpack.c.l.b16 %v492
        %v542 = vunpack.c.l.b16 %v493
        %v543 = vunpack.c.l.b16 %v494
        %v544 = vunpack.c.l.b16 %v495
        %v545 = vunpack.c.l.b16 %v496
        %v546 = vunpack.c.l.b16 %v497
        %v547 = vunpack.c.l.b16 %v498
        %v548 = vunpack.c.l.b16 %v499
        %v549 = vunpack.c.l.b16 %v500
        %v550 = vunpack.c.l.b16 %v501
        %v551 = vunpack.c.l.b16 %v502
        %v552 = vunpack.c.l.b16 %v503
        %v553 = vunpack.c.l.b16 %v504
        %v554 = vpack.c.b16 %v531, %v530
        %v555 = vpack.c.b16 %v533, %v532
        %v556 = vpack.c.b16 %v535, %v534
        %v557 = vpack.c.b16 %v537, %v536
        %v558 = vpack.c.b16 %v539, %v538
        %v559 = vpack.c.b16 %v541, %v540
        %v560 = vpack.c.b16 %v543, %v542
        %v561 = vpack.c.b16 %v545, %v544
        %v562 = vpack.c.b16 %v547, %v546
        %v563 = vpack.c.b16 %v549, %v548
        %v564 = vpack.c.b16 %v551, %v550
        %v565 = vpack.c.b16 %v553, %v552
        %vm578 = vcmask 523264
        %v580 = vsel %vm578, %v480, 0
        %582 = vmatprep.subr.bf16.mxu0 0
        %583 = vmatpush1.bf16.msra.mxu0 %v554
        %584 = vmatprep.subr.bf16.mxu0 0
        %585 = vmatpush1.bf16.msra.mxu0 %v555
        %586 = vmatprep.subr.bf16.mxu0 0
        %587 = vmatpush1.bf16.msra.mxu0 %v556
        %588 = vmatprep.subr.bf16.mxu0 0
        %589 = vmatpush1.bf16.msra.mxu0 %v557
        %590 = vmatprep.subr.bf16.mxu0 0
        %591 = vmatpush1.bf16.msra.mxu0 %v558
        %592 = vmatprep.subr.bf16.mxu0 0
        %593 = vmatpush1.bf16.msra.mxu0 %v559
        %594 = vmatprep.subr.bf16.mxu0 0
        %595 = vmatpush1.bf16.msra.mxu0 %v560
        %596 = vmatprep.subr.bf16.mxu0 0
        %597 = vmatpush1.bf16.msra.mxu0 %v561
        %598 = vmatprep.subr.bf16.mxu0 0
        %599 = vmatpush1.bf16.msra.mxu0 %v562
        %600 = vmatprep.subr.bf16.mxu0 0
        %601 = vmatpush1.bf16.msra.mxu0 %v563
        %602 = vmatprep.subr.bf16.mxu0 0
        %603 = vmatpush1.bf16.msra.mxu0 %v564
        %604 = vmatprep.subr.bf16.mxu0 0
        %605 = vmatpush1.bf16.msra.mxu0 %v565
        %606 = vmatprep.subr.bf16.mxu0 0
        %607 = vmatpush1.bf16.msra.mxu0 0
        %608 = vmatprep.subr.bf16.mxu0 0
        %609 = vmatpush1.bf16.msra.mxu0 0
        %610 = vmatprep.subr.bf16.mxu0 0
        %611 = vmatpush1.bf16.msra.mxu0 0
        %612 = vmatprep.subr.bf16.mxu0 0
        %613 = vmatpush1.bf16.msra.mxu0 0
        %614 = vmatprep.mubr.bf16.mxu0 %v580
        %615 = vmatmul.mubr.bf16.gmra.mrb[0].mxu0 %v479
        %v616 = vpop.f32.mrb[0].mxu0
        %v617 = vadd.f32 %v505, %v616
        %v618 = vpop.f32.mrb[0].mxu0
        %v619 = vpop.f32.mrb[0].mxu0
        %v620 = vpop.f32.mrb[0].mxu0
        %621 = vdwg.mxu0
        %v622 = vld [vmem:[#allocation2] ss:$0 sm:$0xff]
        %v623 = vld [vmem:[#allocation2 + $0x8] ss:$0 sm:$0xff]
        %624 = vadd.xlane.f32.xlu0 %v617
        %v625 = vpop.xlane.xlu0 %624
        %v626 = vrcp.pop 128.0
        %v627 = vmul.f32 %v625, %v626
        %v628 = vsub.f32 %v617, %v627
        %v629 = vmul.f32 %v628, %v628
        %630 = vadd.xlane.f32.xlu0 %v629
        %v631 = vpop.xlane.xlu0 %630
        %v632 = vmul.f32 %v631, %v626
        %v633 = vadd.f32 %v632, 1e-05
        %v634 = vrsqrt.pop %v633
        %v635 = vmul.f32 %v628, %v634
        %v636 = vmul.f32 %v635, %v622
        %v637 = vadd.f32 %v636, %v623
        %v638 = vld [vmem:[#allocation2 + $0x10] ss:$0 sm:$0xff]
        %v639 = vld [vmem:[#allocation2 + $0x18] ss:$0 sm:$0xff]
        %640 = vadd.xlane.f32.xlu0 %v637
        %v641 = vpop.xlane.xlu0 %640
        %v642 = vmul.f32 %v641, %v626
        %v643 = vsub.f32 %v637, %v642
        %v644 = vmul.f32 %v643, %v643
        %645 = vadd.xlane.f32.xlu0 %v644
        %v646 = vpop.xlane.xlu0 %645
        %v647 = vmul.f32 %v646, %v626
        %v648 = vadd.f32 %v647, 1e-05
        %v649 = vrsqrt.pop %v648
        %v650 = vmul.f32 %v643, %v649
        %v651 = vmul.f32 %v650, %v638
        %v652 = vadd.f32 %v651, %v639
        %v653 = vpack.c.bf16 %v652, %v652
        %v654 = vld [vmem:[#allocation7] sm:$0xff]
        %v655 = vld [vmem:[#allocation7 + $0x8] sm:$0xf]
        %v656 = vld [vmem:[#allocation7 + $0x24] sm:$0xff]
        %v657 = vld [vmem:[#allocation7 + $0x2c] sm:$0xf]
        %v658 = vld [vmem:[#allocation7 + $0x48] sm:$0xff]
        %v659 = vld [vmem:[#allocation7 + $0x50] sm:$0xf]
        %v660 = vld [vmem:[#allocation7 + $0x6c] sm:$0xff]
        %v661 = vld [vmem:[#allocation7 + $0x74] sm:$0xf]
        %v662 = vld [vmem:[#allocation7 + $0x90] sm:$0xff]
        %v663 = vld [vmem:[#allocation7 + $0x98] sm:$0xf]
        %v664 = vld [vmem:[#allocation7 + $0xb4] sm:$0xff]
        %v665 = vld [vmem:[#allocation7 + $0xbc] sm:$0xf]
        %v666 = vld [vmem:[#allocation7 + $0xd8] sm:$0xff]
        %v667 = vld [vmem:[#allocation7 + $0xe0] sm:$0xf]
        %v668 = vld [vmem:[#allocation7 + $0xfc] sm:$0xff]
        %v669 = vld [vmem:[#allocation7 + $0x104] sm:$0xf]
        %v670 = vld [vmem:[#allocation7 + $0x120] sm:$0xff]
        %v671 = vld [vmem:[#allocation7 + $0x128] sm:$0xf]
        %v672 = vld [vmem:[#allocation7 + $0x144] sm:$0xff]
        %v673 = vld [vmem:[#allocation7 + $0x14c] sm:$0xf]
        %v674 = vld [vmem:[#allocation7 + $0x168] sm:$0xff]
        %v675 = vld [vmem:[#allocation7 + $0x170] sm:$0xf]
        %v676 = vld [vmem:[#allocation7 + $0x18c] sm:$0xff]
        %v677 = vld [vmem:[#allocation7 + $0x194] sm:$0xf]
        %v678 = vld [vmem:[#allocation7 + $0x1b0] sm:$0xff]
        %v679 = vld [vmem:[#allocation7 + $0x1b8] sm:$0xf]
        %v680 = vld [vmem:[#allocation7 + $0x1d4] sm:$0xff]
        %v681 = vld [vmem:[#allocation7 + $0x1dc] sm:$0xf]
        %v682 = vld [vmem:[#allocation7 + $0x1f8] sm:$0xff]
        %v683 = vld [vmem:[#allocation7 + $0x200] sm:$0xf]
        %v684 = vld [vmem:[#allocation7 + $0x21c] sm:$0xff]
        %v685 = vld [vmem:[#allocation7 + $0x224] sm:$0xf]
        %s686 = scalar_lea.vmem [#allocation2], 1
        %v687 = vld [vmem:[%s686] ss:$8 sm:$0x7]
        %v689 = vlaneseq
        %v690 = vshrl.u32 %v689, 7
        %v691 = vsub.s32 0, %v690
        %v692 = vrot.slane %v687, %v691
        %v693 = vlaneseq
        %v694 = vshrl.u32 %v693, 7
        %v695 = vsub.s32 1, %v694
        %v696 = vrot.slane %v687, %v695
        %v697 = vlaneseq
        %v698 = vshrl.u32 %v697, 7
        %v699 = vsub.s32 2, %v698
        %v700 = vrot.slane %v687, %v699
        %v736 = vunpack.c.l.b16 %v654
        %v737 = vunpack.c.h.b16 %v654
        %v738 = vunpack.c.l.b16 %v655
        %v739 = vunpack.c.l.b16 %v656
        %v740 = vunpack.c.h.b16 %v656
        %v741 = vunpack.c.l.b16 %v657
        %v742 = vunpack.c.l.b16 %v658
        %v743 = vunpack.c.h.b16 %v658
        %v744 = vunpack.c.l.b16 %v659
        %v745 = vunpack.c.l.b16 %v660
        %v746 = vunpack.c.h.b16 %v660
        %v747 = vunpack.c.l.b16 %v661
        %v748 = vunpack.c.l.b16 %v662
        %v749 = vunpack.c.h.b16 %v662
        %v750 = vunpack.c.l.b16 %v663
        %v751 = vunpack.c.l.b16 %v664
        %v752 = vunpack.c.h.b16 %v664
        %v753 = vunpack.c.l.b16 %v665
        %v754 = vunpack.c.l.b16 %v666
        %v755 = vunpack.c.h.b16 %v666
        %v756 = vunpack.c.l.b16 %v667
        %v757 = vunpack.c.l.b16 %v668
        %v758 = vunpack.c.h.b16 %v668
        %v759 = vunpack.c.l.b16 %v669
        %v760 = vunpack.c.l.b16 %v670
        %v761 = vunpack.c.h.b16 %v670
        %v762 = vunpack.c.l.b16 %v671
        %v763 = vunpack.c.l.b16 %v672
        %v764 = vunpack.c.h.b16 %v672
        %v765 = vunpack.c.l.b16 %v673
        %v766 = vunpack.c.l.b16 %v674
        %v767 = vunpack.c.h.b16 %v674
        %v768 = vunpack.c.l.b16 %v675
        %v769 = vunpack.c.l.b16 %v676
        %v770 = vunpack.c.h.b16 %v676
        %v771 = vunpack.c.l.b16 %v677
        %v772 = vunpack.c.l.b16 %v678
        %v773 = vunpack.c.h.b16 %v678
        %v774 = vunpack.c.l.b16 %v679
        %v775 = vunpack.c.l.b16 %v680
        %v776 = vunpack.c.h.b16 %v680
        %v777 = vunpack.c.l.b16 %v681
        %v778 = vunpack.c.l.b16 %v682
        %v779 = vunpack.c.h.b16 %v682
        %v780 = vunpack.c.l.b16 %v683
        %v781 = vunpack.c.l.b16 %v684
        %v782 = vunpack.c.h.b16 %v684
        %v783 = vunpack.c.l.b16 %v685
        %v784 = vpack.c.b16 %v739, %v736
        %v785 = vpack.c.b16 %v740, %v737
        %v786 = vpack.c.b16 %v741, %v738
        %v787 = vpack.c.b16 %v745, %v742
        %v788 = vpack.c.b16 %v746, %v743
        %v789 = vpack.c.b16 %v747, %v744
        %v790 = vpack.c.b16 %v751, %v748
        %v791 = vpack.c.b16 %v752, %v749
        %v792 = vpack.c.b16 %v753, %v750
        %v793 = vpack.c.b16 %v757, %v754
        %v794 = vpack.c.b16 %v758, %v755
        %v795 = vpack.c.b16 %v759, %v756
        %v796 = vpack.c.b16 %v763, %v760
        %v797 = vpack.c.b16 %v764, %v761
        %v798 = vpack.c.b16 %v765, %v762
        %v799 = vpack.c.b16 %v769, %v766
        %v800 = vpack.c.b16 %v770, %v767
        %v801 = vpack.c.b16 %v771, %v768
        %v802 = vpack.c.b16 %v775, %v772
        %v803 = vpack.c.b16 %v776, %v773
        %v804 = vpack.c.b16 %v777, %v774
        %v805 = vpack.c.b16 %v781, %v778
        %v806 = vpack.c.b16 %v782, %v779
        %v807 = vpack.c.b16 %v783, %v780
        %832 = vmatprep.subr.bf16.mxu0 %v785
        %833 = vmatpush1.bf16.msra.mxu0 %v784
        %834 = vmatprep.subr.bf16.mxu0 %v788
        %835 = vmatpush1.bf16.msra.mxu0 %v787
        %836 = vmatprep.subr.bf16.mxu0 %v791
        %837 = vmatpush1.bf16.msra.mxu0 %v790
        %838 = vmatprep.subr.bf16.mxu0 %v794
        %839 = vmatpush1.bf16.msra.mxu0 %v793
        %840 = vmatprep.subr.bf16.mxu0 %v797
        %841 = vmatpush1.bf16.msra.mxu0 %v796
        %842 = vmatprep.subr.bf16.mxu0 %v800
        %843 = vmatpush1.bf16.msra.mxu0 %v799
        %844 = vmatprep.subr.bf16.mxu0 %v803
        %845 = vmatpush1.bf16.msra.mxu0 %v802
        %846 = vmatprep.subr.bf16.mxu0 %v806
        %847 = vmatpush1.bf16.msra.mxu0 %v805
        %848 = vmatprep.subr.bf16.mxu0 0
        %849 = vmatpush1.bf16.msra.mxu0 0
        %850 = vmatprep.subr.bf16.mxu0 0
        %851 = vmatpush1.bf16.msra.mxu0 0
        %852 = vmatprep.subr.bf16.mxu0 0
        %853 = vmatpush1.bf16.msra.mxu0 0
        %854 = vmatprep.subr.bf16.mxu0 0
        %855 = vmatpush1.bf16.msra.mxu0 0
        %856 = vmatprep.subr.bf16.mxu0 0
        %857 = vmatpush1.bf16.msra.mxu0 0
        %858 = vmatprep.subr.bf16.mxu0 0
        %859 = vmatpush1.bf16.msra.mxu0 0
        %860 = vmatprep.subr.bf16.mxu0 0
        %861 = vmatpush1.bf16.msra.mxu0 0
        %862 = vmatprep.subr.bf16.mxu0 0
        %863 = vmatpush1.bf16.msra.mxu0 0
        %864 = vmatprep.mubr.bf16.mxu0 0
        %865 = vmatmul.mubr.bf16.gmra.mrb[0].mxu0 %v653
        %v866 = vpop.f32.mrb[0].mxu0
        %v867 = vadd.f32 %v692, %v866
        %v868 = vpop.f32.mrb[0].mxu0
        %v869 = vadd.f32 %v696, %v868
        %v870 = vpop.f32.mrb[0].mxu0
        %v871 = vpop.f32.mrb[0].mxu0
        %872 = vdwg.mxu0
        %873 = vmatprep.subr.bf16.mxu0 0
        %874 = vmatpush1.bf16.msra.mxu0 %v786
        %875 = vmatprep.subr.bf16.mxu0 0
        %876 = vmatpush1.bf16.msra.mxu0 %v789
        %877 = vmatprep.subr.bf16.mxu0 0
        %878 = vmatpush1.bf16.msra.mxu0 %v792
        %879 = vmatprep.subr.bf16.mxu0 0
        %880 = vmatpush1.bf16.msra.mxu0 %v795
        %881 = vmatprep.subr.bf16.mxu0 0
        %882 = vmatpush1.bf16.msra.mxu0 %v798
        %883 = vmatprep.subr.bf16.mxu0 0
        %884 = vmatpush1.bf16.msra.mxu0 %v801
        %885 = vmatprep.subr.bf16.mxu0 0
        %886 = vmatpush1.bf16.msra.mxu0 %v804
        %887 = vmatprep.subr.bf16.mxu0 0
        %888 = vmatpush1.bf16.msra.mxu0 %v807
        %889 = vmatprep.subr.bf16.mxu0 0
        %890 = vmatpush1.bf16.msra.mxu0 0
        %891 = vmatprep.subr.bf16.mxu0 0
        %892 = vmatpush1.bf16.msra.mxu0 0
        %893 = vmatprep.subr.bf16.mxu0 0
        %894 = vmatpush1.bf16.msra.mxu0 0
        %895 = vmatprep.subr.bf16.mxu0 0
        %896 = vmatpush1.bf16.msra.mxu0 0
        %897 = vmatprep.subr.bf16.mxu0 0
        %898 = vmatpush1.bf16.msra.mxu0 0
        %899 = vmatprep.subr.bf16.mxu0 0
        %900 = vmatpush1.bf16.msra.mxu0 0
        %901 = vmatprep.subr.bf16.mxu0 0
        %902 = vmatpush1.bf16.msra.mxu0 0
        %903 = vmatprep.subr.bf16.mxu0 0
        %904 = vmatpush1.bf16.msra.mxu0 0
        %905 = vmatprep.mubr.bf16.mxu0 0
        %906 = vmatmul.mubr.bf16.gmra.mrb[0].mxu0 %v653
        %v907 = vpop.f32.mrb[0].mxu0
        %v908 = vadd.f32 %v700, %v907
        %v909 = vpop.f32.mrb[0].mxu0
        %v910 = vpop.f32.mrb[0].mxu0
        %v911 = vpop.f32.mrb[0].mxu0
        %912 = vdwg.mxu0
        %v913 = vlaneseq
        %v914 = vand.u32 %v913, 127
        %vm915 = vcmp.lt.s32.totalorder %v914, 5
        %v916 = vsel %vm915, 0.0, -1e+30
        %v917 = vpack.c.bf16 %v867, %v867
        %v918 = vpack.c.bf16 %v869, %v869
        %v919 = vpack.c.bf16 %v908, %v908
        %vm920 = vcmask 261120
        %v922 = vsel %vm920, %v917, 0
        %v925 = vsel %vm920, %v918, 0
        %927 = vmatprep.subr.bf16.mxu0 0
        %928 = vmatpush1.bf16.xpose.msra.mxu0 %v925
        %929 = vmatprep.subr.bf16.mxu0 0
        %930 = vmatpush1.bf16.xpose.msra.mxu0 0
        %931 = vmatprep.subr.bf16.mxu0 0
        %932 = vmatpush1.bf16.xpose.msra.mxu0 0
        %933 = vmatprep.subr.bf16.mxu0 0
        %934 = vmatpush1.bf16.xpose.msra.mxu0 0
        %935 = vmatprep.subr.bf16.mxu0 0
        %936 = vmatpush1.bf16.xpose.msra.mxu0 0
        %937 = vmatprep.subr.bf16.mxu0 0
        %938 = vmatpush1.bf16.xpose.msra.mxu0 0
        %939 = vmatprep.subr.bf16.mxu0 0
        %940 = vmatpush1.bf16.xpose.msra.mxu0 0
        %941 = vmatprep.subr.bf16.mxu0 0
        %942 = vmatpush1.bf16.xpose.msra.mxu0 0
        %943 = vmatprep.subr.bf16.mxu0 0
        %944 = vmatpush1.bf16.xpose.msra.mxu0 0
        %945 = vmatprep.subr.bf16.mxu0 0
        %946 = vmatpush1.bf16.xpose.msra.mxu0 0
        %947 = vmatprep.subr.bf16.mxu0 0
        %948 = vmatpush1.bf16.xpose.msra.mxu0 0
        %949 = vmatprep.subr.bf16.mxu0 0
        %950 = vmatpush1.bf16.xpose.msra.mxu0 0
        %951 = vmatprep.subr.bf16.mxu0 0
        %952 = vmatpush1.bf16.xpose.msra.mxu0 0
        %953 = vmatprep.subr.bf16.mxu0 0
        %954 = vmatpush1.bf16.xpose.msra.mxu0 0
        %955 = vmatprep.subr.bf16.mxu0 0
        %956 = vmatpush1.bf16.xpose.msra.mxu0 0
        %957 = vmatprep.subr.bf16.mxu0 0
        %958 = vmatpush1.bf16.xpose.msra.mxu0 0
        %959 = vmatprep.mubr.bf16.mxu0 0
        %960 = vmatmul.mubr.bf16.gmra.mrb[0].mxu0 %v922
        %v961 = vpop.f32.mrb[0].mxu0
        %v962 = vadd.f32 0.0, %v961
        %v963 = vpop.f32.mrb[0].mxu0
        %v964 = vpop.f32.mrb[0].mxu0
        %v965 = vpop.f32.mrb[0].mxu0
        %966 = vdwg.mxu0
        %v967 = vmul.f32 %v962, 0.17677669
        %v968 = vadd.f32 %v967, %v916
        %vm969 = vcmask 64512
        %v970 = vsel %vm969, %v968, -inf
        %971 = vmax.xlane.f32.xlu0 %v970
        %v972 = vpop.xlane.xlu0 %971
        %v973 = vsub.f32 %v968, %v972
        %v974 = vmul.f32 %v973, 1.442695
        %v975 = vpow.pop %v974
        %v976 = vsel %vm969, %v975, 0.0
        %977 = vadd.xlane.f32.xlu0 %v976
        %v978 = vpop.xlane.xlu0 %977
        %v979 = vrcp.pop %v978
        %v980 = vmul.f32 %v975, %v979
        %v981 = vpack.c.bf16 %v980, %v980
        %v983 = vsel %vm969, %v981, 0
        %vm985 = vcmask 1043456
        %v987 = vsel %vm985, %v919, 0
        %989 = vmatprep.subr.bf16.mxu0 0
        %990 = vmatpush1.bf16.msra.mxu0 %v987
        %991 = vmatprep.subr.bf16.mxu0 0
        %992 = vmatpush1.bf16.msra.mxu0 0
        %993 = vmatprep.subr.bf16.mxu0 0
        %994 = vmatpush1.bf16.msra.mxu0 0
        %995 = vmatprep.subr.bf16.mxu0 0
        %996 = vmatpush1.bf16.msra.mxu0 0
        %997 = vmatprep.subr.bf16.mxu0 0
        %998 = vmatpush1.bf16.msra.mxu0 0
        %999 = vmatprep.subr.bf16.mxu0 0
        %1000 = vmatpush1.bf16.msra.mxu0 0
        %1001 = vmatprep.subr.bf16.mxu0 0
        %1002 = vmatpush1.bf16.msra.mxu0 0
        %1003 = vmatprep.subr.bf16.mxu0 0
        %1004 = vmatpush1.bf16.msra.mxu0 0
        %1005 = vmatprep.subr.bf16.mxu0 0
        %1006 = vmatpush1.bf16.msra.mxu0 0
        %1007 = vmatprep.subr.bf16.mxu0 0
        %1008 = vmatpush1.bf16.msra.mxu0 0
        %1009 = vmatprep.subr.bf16.mxu0 0
        %1010 = vmatpush1.bf16.msra.mxu0 0
        %1011 = vmatprep.subr.bf16.mxu0 0
        %1012 = vmatpush1.bf16.msra.mxu0 0
        %1013 = vmatprep.subr.bf16.mxu0 0
        %1014 = vmatpush1.bf16.msra.mxu0 0
        %1015 = vmatprep.subr.bf16.mxu0 0
        %1016 = vmatpush1.bf16.msra.mxu0 0
        %1017 = vmatprep.subr.bf16.mxu0 0
        %1018 = vmatpush1.bf16.msra.mxu0 0
        %1019 = vmatprep.subr.bf16.mxu0 0
        %1020 = vmatpush1.bf16.msra.mxu0 0
        %1021 = vmatprep.mubr.bf16.mxu0 0
        %1022 = vmatmul.mubr.bf16.gmra.mrb[0].mxu0 %v983
        %v1023 = vpop.f32.mrb[0].mxu0
        %v1024 = vadd.f32 0.0, %v1023
        %v1025 = vpop.f32.mrb[0].mxu0
        %v1026 = vpop.f32.mrb[0].mxu0
        %v1027 = vpop.f32.mrb[0].mxu0
        %1028 = vdwg.mxu0
        %v1029 = vpack.c.bf16 %v1024, %v1024
        %v1030 = vld [vmem:[#allocation7 + $0xc] sm:$0xf]
        %v1031 = vld [vmem:[#allocation7 + $0x30] sm:$0xf]
        %v1032 = vld [vmem:[#allocation7 + $0x54] sm:$0xf]
        %v1033 = vld [vmem:[#allocation7 + $0x78] sm:$0xf]
        %1035 = vrot.lane.b32.xlu0 %v917, 96
        %v1036 = vpop.permute.xlu0 %1035
        %1038 = vrot.lane.b32.xlu0 %v918, 96
        %v1039 = vpop.permute.xlu0 %1038
        %v1041 = vsel %vm920, %v1036, 0
        %v1044 = vsel %vm920, %v1039, 0
        %1046 = vmatprep.subr.bf16.mxu0 0
        %1047 = vmatpush1.bf16.xpose.msra.mxu0 %v1044
        %1048 = vmatprep.subr.bf16.mxu0 0
        %1049 = vmatpush1.bf16.xpose.msra.mxu0 0
        %1050 = vmatprep.subr.bf16.mxu0 0
        %1051 = vmatpush1.bf16.xpose.msra.mxu0 0
        %1052 = vmatprep.subr.bf16.mxu0 0
        %1053 = vmatpush1.bf16.xpose.msra.mxu0 0
        %1054 = vmatprep.subr.bf16.mxu0 0
        %1055 = vmatpush1.bf16.xpose.msra.mxu0 0
        %1056 = vmatprep.subr.bf16.mxu0 0
        %1057 = vmatpush1.bf16.xpose.msra.mxu0 0
        %1058 = vmatprep.subr.bf16.mxu0 0
        %1059 = vmatpush1.bf16.xpose.msra.mxu0 0
        %1060 = vmatprep.subr.bf16.mxu0 0
        %1061 = vmatpush1.bf16.xpose.msra.mxu0 0
        %1062 = vmatprep.subr.bf16.mxu0 0
        %1063 = vmatpush1.bf16.xpose.msra.mxu0 0
        %1064 = vmatprep.subr.bf16.mxu0 0
        %1065 = vmatpush1.bf16.xpose.msra.mxu0 0
        %1066 = vmatprep.subr.bf16.mxu0 0
        %1067 = vmatpush1.bf16.xpose.msra.mxu0 0
        %1068 = vmatprep.subr.bf16.mxu0 0
        %1069 = vmatpush1.bf16.xpose.msra.mxu0 0
        %1070 = vmatprep.subr.bf16.mxu0 0
        %1071 = vmatpush1.bf16.xpose.msra.mxu0 0
        %1072 = vmatprep.subr.bf16.mxu0 0
        %1073 = vmatpush1.bf16.xpose.msra.mxu0 0
        %1074 = vmatprep.subr.bf16.mxu0 0
        %1075 = vmatpush1.bf16.xpose.msra.mxu0 0
        %1076 = vmatprep.subr.bf16.mxu0 0
        %1077 = vmatpush1.bf16.xpose.msra.mxu0 0
        %1078 = vmatprep.mubr.bf16.mxu0 0
        %1079 = vmatmul.mubr.bf16.gmra.mrb[0].mxu0 %v1041
        %v1080 = vpop.f32.mrb[0].mxu0
        %v1081 = vadd.f32 0.0, %v1080
        %v1082 = vpop.f32.mrb[0].mxu0
        %v1083 = vpop.f32.mrb[0].mxu0
        %v1084 = vpop.f32.mrb[0].mxu0
        %1085 = vdwg.mxu0
        %v1086 = vmul.f32 %v1081, 0.17677669
        %v1087 = vadd.f32 %v1086, %v916
        %v1088 = vsel %vm969, %v1087, -inf
        %1089 = vmax.xlane.f32.xlu0 %v1088
        %v1090 = vpop.xlane.xlu0 %1089
        %v1091 = vsub.f32 %v1087, %v1090
        %v1092 = vmul.f32 %v1091, 1.442695
        %v1093 = vpow.pop %v1092
        %v1094 = vsel %vm969, %v1093, 0.0
        %1095 = vadd.xlane.f32.xlu0 %v1094
        %v1096 = vpop.xlane.xlu0 %1095
        %v1097 = vrcp.pop %v1096
        %v1098 = vmul.f32 %v1093, %v1097
        %v1099 = vpack.c.bf16 %v1098, %v1098
        %1101 = vrot.lane.b32.xlu0 %v919, 96
        %v1102 = vpop.permute.xlu0 %1101
        %v1104 = vsel %vm969, %v1099, 0
        %v1107 = vsel %vm985, %v1102, 0
        %1109 = vmatprep.subr.bf16.mxu0 0
        %1110 = vmatpush1.bf16.msra.mxu0 %v1107
        %1111 = vmatprep.subr.bf16.mxu0 0
        %1112 = vmatpush1.bf16.msra.mxu0 0
        %1113 = vmatprep.subr.bf16.mxu0 0
        %1114 = vmatpush1.bf16.msra.mxu0 0
        %1115 = vmatprep.subr.bf16.mxu0 0
        %1116 = vmatpush1.bf16.msra.mxu0 0
        %1117 = vmatprep.subr.bf16.mxu0 0
        %1118 = vmatpush1.bf16.msra.mxu0 0
        %1119 = vmatprep.subr.bf16.mxu0 0
        %1120 = vmatpush1.bf16.msra.mxu0 0
        %1121 = vmatprep.subr.bf16.mxu0 0
        %1122 = vmatpush1.bf16.msra.mxu0 0
        %1123 = vmatprep.subr.bf16.mxu0 0
        %1124 = vmatpush1.bf16.msra.mxu0 0
        %1125 = vmatprep.subr.bf16.mxu0 0
        %1126 = vmatpush1.bf16.msra.mxu0 0
        %1127 = vmatprep.subr.bf16.mxu0 0
        %1128 = vmatpush1.bf16.msra.mxu0 0
        %1129 = vmatprep.subr.bf16.mxu0 0
        %1130 = vmatpush1.bf16.msra.mxu0 0
        %1131 = vmatprep.subr.bf16.mxu0 0
        %1132 = vmatpush1.bf16.msra.mxu0 0
        %1133 = vmatprep.subr.bf16.mxu0 0
        %1134 = vmatpush1.bf16.msra.mxu0 0
        %1135 = vmatprep.subr.bf16.mxu0 0
        %1136 = vmatpush1.bf16.msra.mxu0 0
        %1137 = vmatprep.subr.bf16.mxu0 0
        %1138 = vmatpush1.bf16.msra.mxu0 0
        %1139 = vmatprep.subr.bf16.mxu0 0
        %1140 = vmatpush1.bf16.msra.mxu0 0
        %1141 = vmatprep.mubr.bf16.mxu0 0
        %1142 = vmatmul.mubr.bf16.gmra.mrb[0].mxu0 %v1104
        %v1143 = vpop.f32.mrb[0].mxu0
        %v1144 = vadd.f32 0.0, %v1143
        %v1145 = vpop.f32.mrb[0].mxu0
        %v1146 = vpop.f32.mrb[0].mxu0
        %v1147 = vpop.f32.mrb[0].mxu0
        %1148 = vdwg.mxu0
        %v1149 = vpack.c.bf16 %v1144, %v1144
        %v1150 = vld [vmem:[#allocation7 + $0x9c] sm:$0xf]
        %v1151 = vld [vmem:[#allocation7 + $0xc0] sm:$0xf]
        %v1152 = vld [vmem:[#allocation7 + $0xe4] sm:$0xf]
        %v1153 = vld [vmem:[#allocation7 + $0x108] sm:$0xf]
        %v1158 = vunpack.c.l.b16 %v1150
        %v1159 = vunpack.c.l.b16 %v1151
        %v1160 = vunpack.c.l.b16 %v1152
        %v1161 = vunpack.c.l.b16 %v1153
        %v1162 = vpack.c.b16 %v1159, %v1158
        %v1163 = vpack.c.b16 %v1161, %v1160
        %v1167 = vsel %vm920, %v1149, 0
        %1169 = vmatprep.subr.bf16.mxu0 0
        %1170 = vmatpush1.bf16.msra.mxu0 %v1162
        %1171 = vmatprep.subr.bf16.mxu0 0
        %1172 = vmatpush1.bf16.msra.mxu0 %v1163
        %1173 = vmatprep.subr.bf16.mxu0 0
        %1174 = vmatpush1.bf16.msra.mxu0 0
        %1175 = vmatprep.subr.bf16.mxu0 0
        %1176 = vmatpush1.bf16.msra.mxu0 0
        %1177 = vmatprep.subr.bf16.mxu0 0
        %1178 = vmatpush1.bf16.msra.mxu0 0
        %1179 = vmatprep.subr.bf16.mxu0 0
        %1180 = vmatpush1.bf16.msra.mxu0 0
        %1181 = vmatprep.subr.bf16.mxu0 0
        %1182 = vmatpush1.bf16.msra.mxu0 0
        %1183 = vmatprep.subr.bf16.mxu0 0
        %1184 = vmatpush1.bf16.msra.mxu0 0
        %1185 = vmatprep.subr.bf16.mxu0 0
        %1186 = vmatpush1.bf16.msra.mxu0 0
        %1187 = vmatprep.subr.bf16.mxu0 0
        %1188 = vmatpush1.bf16.msra.mxu0 0
        %1189 = vmatprep.subr.bf16.mxu0 0
        %1190 = vmatpush1.bf16.msra.mxu0 0
        %1191 = vmatprep.subr.bf16.mxu0 0
        %1192 = vmatpush1.bf16.msra.mxu0 0
        %1193 = vmatprep.subr.bf16.mxu0 0
        %1194 = vmatpush1.bf16.msra.mxu0 0
        %1195 = vmatprep.subr.bf16.mxu0 0
        %1196 = vmatpush1.bf16.msra.mxu0 0
        %1197 = vmatprep.subr.bf16.mxu0 0
        %1198 = vmatpush1.bf16.msra.mxu0 0
        %1199 = vmatprep.subr.bf16.mxu0 0
        %1200 = vmatpush1.bf16.msra.mxu0 0
        %1201 = vmatprep.mubr.bf16.mxu0 0
        %1202 = vmatmul.mubr.bf16.gmra.mrb[0].mxu0 %v1167
        %v1203 = vpop.f32.mrb[0].mxu0
        %v1204 = vadd.f32 0.0, %v1203
        %v1205 = vpop.f32.mrb[0].mxu0
        %v1206 = vpop.f32.mrb[0].mxu0
        %v1207 = vpop.f32.mrb[0].mxu0
        %1208 = vdwg.mxu0
        %v1213 = vunpack.c.l.b16 %v1030
        %v1214 = vunpack.c.l.b16 %v1031
        %v1215 = vunpack.c.l.b16 %v1032
        %v1216 = vunpack.c.l.b16 %v1033
        %v1217 = vpack.c.b16 %v1214, %v1213
        %v1218 = vpack.c.b16 %v1216, %v1215
        %v1222 = vsel %vm920, %v1029, 0
        %1224 = vmatprep.subr.bf16.mxu0 0
        %1225 = vmatpush1.bf16.msra.mxu0 %v1217
        %1226 = vmatprep.subr.bf16.mxu0 0
        %1227 = vmatpush1.bf16.msra.mxu0 %v1218
        %1228 = vmatprep.subr.bf16.mxu0 0
        %1229 = vmatpush1.bf16.msra.mxu0 0
        %1230 = vmatprep.subr.bf16.mxu0 0
        %1231 = vmatpush1.bf16.msra.mxu0 0
        %1232 = vmatprep.subr.bf16.mxu0 0
        %1233 = vmatpush1.bf16.msra.mxu0 0
        %1234 = vmatprep.subr.bf16.mxu0 0
        %1235 = vmatpush1.bf16.msra.mxu0 0
        %1236 = vmatprep.subr.bf16.mxu0 0
        %1237 = vmatpush1.bf16.msra.mxu0 0
        %1238 = vmatprep.subr.bf16.mxu0 0
        %1239 = vmatpush1.bf16.msra.mxu0 0
        %1240 = vmatprep.subr.bf16.mxu0 0
        %1241 = vmatpush1.bf16.msra.mxu0 0
        %1242 = vmatprep.subr.bf16.mxu0 0
        %1243 = vmatpush1.bf16.msra.mxu0 0
        %1244 = vmatprep.subr.bf16.mxu0 0
        %1245 = vmatpush1.bf16.msra.mxu0 0
        %1246 = vmatprep.subr.bf16.mxu0 0
        %1247 = vmatpush1.bf16.msra.mxu0 0
        %1248 = vmatprep.subr.bf16.mxu0 0
        %1249 = vmatpush1.bf16.msra.mxu0 0
        %1250 = vmatprep.subr.bf16.mxu0 0
        %1251 = vmatpush1.bf16.msra.mxu0 0
        %1252 = vmatprep.subr.bf16.mxu0 0
        %1253 = vmatpush1.bf16.msra.mxu0 0
        %1254 = vmatprep.subr.bf16.mxu0 0
        %1255 = vmatpush1.bf16.msra.mxu0 0
        %1256 = vmatprep.mubr.bf16.mxu0 0
        %1257 = vmatmul.mubr.bf16.gmra.mrb[0].mxu0 %v1222
        %v1258 = vpop.f32.mrb[0].mxu0
        %v1259 = vadd.f32 %v1204, %v1258
        %v1260 = vpop.f32.mrb[0].mxu0
        %v1261 = vpop.f32.mrb[0].mxu0
        %v1262 = vpop.f32.mrb[0].mxu0
        %1263 = vdwg.mxu0
        %1264 = vrot.lane.b32.xlu0 %v917, 64
        %v1265 = vpop.permute.xlu0 %1264
        %1266 = vrot.lane.b32.xlu0 %v918, 64
        %v1267 = vpop.permute.xlu0 %1266
        %v1269 = vsel %vm920, %v1265, 0
        %v1272 = vsel %vm920, %v1267, 0
        %1274 = vmatprep.subr.bf16.mxu0 0
        %1275 = vmatpush1.bf16.xpose.msra.mxu0 %v1272
        %1276 = vmatprep.subr.bf16.mxu0 0
        %1277 = vmatpush1.bf16.xpose.msra.mxu0 0
        %1278 = vmatprep.subr.bf16.mxu0 0
        %1279 = vmatpush1.bf16.xpose.msra.mxu0 0
        %1280 = vmatprep.subr.bf16.mxu0 0
        %1281 = vmatpush1.bf16.xpose.msra.mxu0 0
        %1282 = vmatprep.subr.bf16.mxu0 0
        %1283 = vmatpush1.bf16.xpose.msra.mxu0 0
        %1284 = vmatprep.subr.bf16.mxu0 0
        %1285 = vmatpush1.bf16.xpose.msra.mxu0 0
        %1286 = vmatprep.subr.bf16.mxu0 0
        %1287 = vmatpush1.bf16.xpose.msra.mxu0 0
        %1288 = vmatprep.subr.bf16.mxu0 0
        %1289 = vmatpush1.bf16.xpose.msra.mxu0 0
        %1290 = vmatprep.subr.bf16.mxu0 0
        %1291 = vmatpush1.bf16.xpose.msra.mxu0 0
        %1292 = vmatprep.subr.bf16.mxu0 0
        %1293 = vmatpush1.bf16.xpose.msra.mxu0 0
        %1294 = vmatprep.subr.bf16.mxu0 0
        %1295 = vmatpush1.bf16.xpose.msra.mxu0 0
        %1296 = vmatprep.subr.bf16.mxu0 0
        %1297 = vmatpush1.bf16.xpose.msra.mxu0 0
        %1298 = vmatprep.subr.bf16.mxu0 0
        %1299 = vmatpush1.bf16.xpose.msra.mxu0 0
        %1300 = vmatprep.subr.bf16.mxu0 0
        %1301 = vmatpush1.bf16.xpose.msra.mxu0 0
        %1302 = vmatprep.subr.bf16.mxu0 0
        %1303 = vmatpush1.bf16.xpose.msra.mxu0 0
        %1304 = vmatprep.subr.bf16.mxu0 0
        %1305 = vmatpush1.bf16.xpose.msra.mxu0 0
        %1306 = vmatprep.mubr.bf16.mxu0 0
        %1307 = vmatmul.mubr.bf16.gmra.mrb[0].mxu0 %v1269
        %v1308 = vpop.f32.mrb[0].mxu0
        %v1309 = vadd.f32 0.0, %v1308
        %v1310 = vpop.f32.mrb[0].mxu0
        %v1311 = vpop.f32.mrb[0].mxu0
        %v1312 = vpop.f32.mrb[0].mxu0
        %1313 = vdwg.mxu0
        %v1314 = vmul.f32 %v1309, 0.17677669
        %v1315 = vadd.f32 %v1314, %v916
        %v1316 = vsel %vm969, %v1315, -inf
        %1317 = vmax.xlane.f32.xlu0 %v1316
        %v1318 = vpop.xlane.xlu0 %1317
        %v1319 = vsub.f32 %v1315, %v1318
        %v1320 = vmul.f32 %v1319, 1.442695
        %v1321 = vpow.pop %v1320
        %v1322 = vsel %vm969, %v1321, 0.0
        %1323 = vadd.xlane.f32.xlu0 %v1322
        %v1324 = vpop.xlane.xlu0 %1323
        %v1325 = vrcp.pop %v1324
        %v1326 = vmul.f32 %v1321, %v1325
        %v1327 = vpack.c.bf16 %v1326, %v1326
        %1328 = vrot.lane.b32.xlu0 %v919, 64
        %v1329 = vpop.permute.xlu0 %1328
        %v1331 = vsel %vm969, %v1327, 0
        %v1334 = vsel %vm985, %v1329, 0
        %1336 = vmatprep.subr.bf16.mxu0 0
        %1337 = vmatpush1.bf16.msra.mxu0 %v1334
        %1338 = vmatprep.subr.bf16.mxu0 0
        %1339 = vmatpush1.bf16.msra.mxu0 0
        %1340 = vmatprep.subr.bf16.mxu0 0
        %1341 = vmatpush1.bf16.msra.mxu0 0
        %1342 = vmatprep.subr.bf16.mxu0 0
        %1343 = vmatpush1.bf16.msra.mxu0 0
        %1344 = vmatprep.subr.bf16.mxu0 0
        %1345 = vmatpush1.bf16.msra.mxu0 0
        %1346 = vmatprep.subr.bf16.mxu0 0
        %1347 = vmatpush1.bf16.msra.mxu0 0
        %1348 = vmatprep.subr.bf16.mxu0 0
        %1349 = vmatpush1.bf16.msra.mxu0 0
        %1350 = vmatprep.subr.bf16.mxu0 0
        %1351 = vmatpush1.bf16.msra.mxu0 0
        %1352 = vmatprep.subr.bf16.mxu0 0
        %1353 = vmatpush1.bf16.msra.mxu0 0
        %1354 = vmatprep.subr.bf16.mxu0 0
        %1355 = vmatpush1.bf16.msra.mxu0 0
        %1356 = vmatprep.subr.bf16.mxu0 0
        %1357 = vmatpush1.bf16.msra.mxu0 0
        %1358 = vmatprep.subr.bf16.mxu0 0
        %1359 = vmatpush1.bf16.msra.mxu0 0
        %1360 = vmatprep.subr.bf16.mxu0 0
        %1361 = vmatpush1.bf16.msra.mxu0 0
        %1362 = vmatprep.subr.bf16.mxu0 0
        %1363 = vmatpush1.bf16.msra.mxu0 0
        %1364 = vmatprep.subr.bf16.mxu0 0
        %1365 = vmatpush1.bf16.msra.mxu0 0
        %1366 = vmatprep.subr.bf16.mxu0 0
        %1367 = vmatpush1.bf16.msra.mxu0 0
        %1368 = vmatprep.mubr.bf16.mxu0 0
        %1369 = vmatmul.mubr.bf16.gmra.mrb[0].mxu0 %v1331
        %v1370 = vpop.f32.mrb[0].mxu0
        %v1371 = vadd.f32 0.0, %v1370
        %v1372 = vpop.f32.mrb[0].mxu0
        %v1373 = vpop.f32.mrb[0].mxu0
        %v1374 = vpop.f32.mrb[0].mxu0
        %1375 = vdwg.mxu0
        %v1376 = vpack.c.bf16 %v1371, %v1371
        %v1377 = vld [vmem:[#allocation7 + $0x12c] sm:$0xf]
        %v1378 = vld [vmem:[#allocation7 + $0x150] sm:$0xf]
        %v1379 = vld [vmem:[#allocation7 + $0x174] sm:$0xf]
        %v1380 = vld [vmem:[#allocation7 + $0x198] sm:$0xf]
        %v1385 = vunpack.c.l.b16 %v1377
        %v1386 = vunpack.c.l.b16 %v1378
        %v1387 = vunpack.c.l.b16 %v1379
        %v1388 = vunpack.c.l.b16 %v1380
        %v1389 = vpack.c.b16 %v1386, %v1385
        %v1390 = vpack.c.b16 %v1388, %v1387
        %v1394 = vsel %vm920, %v1376, 0
        %1396 = vmatprep.subr.bf16.mxu0 0
        %1397 = vmatpush1.bf16.msra.mxu0 %v1389
        %1398 = vmatprep.subr.bf16.mxu0 0
        %1399 = vmatpush1.bf16.msra.mxu0 %v1390
        %1400 = vmatprep.subr.bf16.mxu0 0
        %1401 = vmatpush1.bf16.msra.mxu0 0
        %1402 = vmatprep.subr.bf16.mxu0 0
        %1403 = vmatpush1.bf16.msra.mxu0 0
        %1404 = vmatprep.subr.bf16.mxu0 0
        %1405 = vmatpush1.bf16.msra.mxu0 0
        %1406 = vmatprep.subr.bf16.mxu0 0
        %1407 = vmatpush1.bf16.msra.mxu0 0
        %1408 = vmatprep.subr.bf16.mxu0 0
        %1409 = vmatpush1.bf16.msra.mxu0 0
        %1410 = vmatprep.subr.bf16.mxu0 0
        %1411 = vmatpush1.bf16.msra.mxu0 0
        %1412 = vmatprep.subr.bf16.mxu0 0
        %1413 = vmatpush1.bf16.msra.mxu0 0
        %1414 = vmatprep.subr.bf16.mxu0 0
        %1415 = vmatpush1.bf16.msra.mxu0 0
        %1416 = vmatprep.subr.bf16.mxu0 0
        %1417 = vmatpush1.bf16.msra.mxu0 0
        %1418 = vmatprep.subr.bf16.mxu0 0
        %1419 = vmatpush1.bf16.msra.mxu0 0
        %1420 = vmatprep.subr.bf16.mxu0 0
        %1421 = vmatpush1.bf16.msra.mxu0 0
        %1422 = vmatprep.subr.bf16.mxu0 0
        %1423 = vmatpush1.bf16.msra.mxu0 0
        %1424 = vmatprep.subr.bf16.mxu0 0
        %1425 = vmatpush1.bf16.msra.mxu0 0
        %1426 = vmatprep.subr.bf16.mxu0 0
        %1427 = vmatpush1.bf16.msra.mxu0 0
        %1428 = vmatprep.mubr.bf16.mxu0 0
        %1429 = vmatmul.mubr.bf16.gmra.mrb[0].mxu0 %v1394
        %v1430 = vpop.f32.mrb[0].mxu0
        %v1431 = vadd.f32 0.0, %v1430
        %v1432 = vpop.f32.mrb[0].mxu0
        %v1433 = vpop.f32.mrb[0].mxu0
        %v1434 = vpop.f32.mrb[0].mxu0
        %1435 = vdwg.mxu0
        %v1436 = vadd.f32 %v1259, %v1431
        %1437 = vrot.lane.b32.xlu0 %v917, 32
        %v1438 = vpop.permute.xlu0 %1437
        %1439 = vrot.lane.b32.xlu0 %v918, 32
        %v1440 = vpop.permute.xlu0 %1439
        %v1442 = vsel %vm920, %v1438, 0
        %v1445 = vsel %vm920, %v1440, 0
        %1447 = vmatprep.subr.bf16.mxu0 0
        %1448 = vmatpush1.bf16.xpose.msra.mxu0 %v1445
        %1449 = vmatprep.subr.bf16.mxu0 0
        %1450 = vmatpush1.bf16.xpose.msra.mxu0 0
        %1451 = vmatprep.subr.bf16.mxu0 0
        %1452 = vmatpush1.bf16.xpose.msra.mxu0 0
        %1453 = vmatprep.subr.bf16.mxu0 0
        %1454 = vmatpush1.bf16.xpose.msra.mxu0 0
        %1455 = vmatprep.subr.bf16.mxu0 0
        %1456 = vmatpush1.bf16.xpose.msra.mxu0 0
        %1457 = vmatprep.subr.bf16.mxu0 0
        %1458 = vmatpush1.bf16.xpose.msra.mxu0 0
        %1459 = vmatprep.subr.bf16.mxu0 0
        %1460 = vmatpush1.bf16.xpose.msra.mxu0 0
        %1461 = vmatprep.subr.bf16.mxu0 0
        %1462 = vmatpush1.bf16.xpose.msra.mxu0 0
        %1463 = vmatprep.subr.bf16.mxu0 0
        %1464 = vmatpush1.bf16.xpose.msra.mxu0 0
        %1465 = vmatprep.subr.bf16.mxu0 0
        %1466 = vmatpush1.bf16.xpose.msra.mxu0 0
        %1467 = vmatprep.subr.bf16.mxu0 0
        %1468 = vmatpush1.bf16.xpose.msra.mxu0 0
        %1469 = vmatprep.subr.bf16.mxu0 0
        %1470 = vmatpush1.bf16.xpose.msra.mxu0 0
        %1471 = vmatprep.subr.bf16.mxu0 0
        %1472 = vmatpush1.bf16.xpose.msra.mxu0 0
        %1473 = vmatprep.subr.bf16.mxu0 0
        %1474 = vmatpush1.bf16.xpose.msra.mxu0 0
        %1475 = vmatprep.subr.bf16.mxu0 0
        %1476 = vmatpush1.bf16.xpose.msra.mxu0 0
        %1477 = vmatprep.subr.bf16.mxu0 0
        %1478 = vmatpush1.bf16.xpose.msra.mxu0 0
        %1479 = vmatprep.mubr.bf16.mxu0 0
        %1480 = vmatmul.mubr.bf16.gmra.mrb[0].mxu0 %v1442
        %v1481 = vpop.f32.mrb[0].mxu0
        %v1482 = vadd.f32 0.0, %v1481
        %v1483 = vpop.f32.mrb[0].mxu0
        %v1484 = vpop.f32.mrb[0].mxu0
        %v1485 = vpop.f32.mrb[0].mxu0
        %1486 = vdwg.mxu0
        %v1487 = vmul.f32 %v1482, 0.17677669
        %v1488 = vadd.f32 %v1487, %v916
        %v1489 = vsel %vm969, %v1488, -inf
        %1490 = vmax.xlane.f32.xlu0 %v1489
        %v1491 = vpop.xlane.xlu0 %1490
        %v1492 = vsub.f32 %v1488, %v1491
        %v1493 = vmul.f32 %v1492, 1.442695
        %v1494 = vpow.pop %v1493
        %v1495 = vsel %vm969, %v1494, 0.0
        %1496 = vadd.xlane.f32.xlu0 %v1495
        %v1497 = vpop.xlane.xlu0 %1496
        %v1498 = vrcp.pop %v1497
        %v1499 = vmul.f32 %v1494, %v1498
        %v1500 = vpack.c.bf16 %v1499, %v1499
        %1501 = vrot.lane.b32.xlu0 %v919, 32
        %v1502 = vpop.permute.xlu0 %1501
        %v1504 = vsel %vm969, %v1500, 0
        %v1507 = vsel %vm985, %v1502, 0
        %1509 = vmatprep.subr.bf16.mxu0 0
        %1510 = vmatpush1.bf16.msra.mxu0 %v1507
        %1511 = vmatprep.subr.bf16.mxu0 0
        %1512 = vmatpush1.bf16.msra.mxu0 0
        %1513 = vmatprep.subr.bf16.mxu0 0
        %1514 = vmatpush1.bf16.msra.mxu0 0
        %1515 = vmatprep.subr.bf16.mxu0 0
        %1516 = vmatpush1.bf16.msra.mxu0 0
        %1517 = vmatprep.subr.bf16.mxu0 0
        %1518 = vmatpush1.bf16.msra.mxu0 0
        %1519 = vmatprep.subr.bf16.mxu0 0
        %1520 = vmatpush1.bf16.msra.mxu0 0
        %1521 = vmatprep.subr.bf16.mxu0 0
        %1522 = vmatpush1.bf16.msra.mxu0 0
        %1523 = vmatprep.subr.bf16.mxu0 0
        %1524 = vmatpush1.bf16.msra.mxu0 0
        %1525 = vmatprep.subr.bf16.mxu0 0
        %1526 = vmatpush1.bf16.msra.mxu0 0
        %1527 = vmatprep.subr.bf16.mxu0 0
        %1528 = vmatpush1.bf16.msra.mxu0 0
        %1529 = vmatprep.subr.bf16.mxu0 0
        %1530 = vmatpush1.bf16.msra.mxu0 0
        %1531 = vmatprep.subr.bf16.mxu0 0
        %1532 = vmatpush1.bf16.msra.mxu0 0
        %1533 = vmatprep.subr.bf16.mxu0 0
        %1534 = vmatpush1.bf16.msra.mxu0 0
        %1535 = vmatprep.subr.bf16.mxu0 0
        %1536 = vmatpush1.bf16.msra.mxu0 0
        %1537 = vmatprep.subr.bf16.mxu0 0
        %1538 = vmatpush1.bf16.msra.mxu0 0
        %1539 = vmatprep.subr.bf16.mxu0 0
        %1540 = vmatpush1.bf16.msra.mxu0 0
        %1541 = vmatprep.mubr.bf16.mxu0 0
        %1542 = vmatmul.mubr.bf16.gmra.mrb[0].mxu0 %v1504
        %v1543 = vpop.f32.mrb[0].mxu0
        %v1544 = vadd.f32 0.0, %v1543
        %v1545 = vpop.f32.mrb[0].mxu0
        %v1546 = vpop.f32.mrb[0].mxu0
        %v1547 = vpop.f32.mrb[0].mxu0
        %1548 = vdwg.mxu0
        %v1549 = vpack.c.bf16 %v1544, %v1544
        %v1550 = vld [vmem:[#allocation7 + $0x1bc] sm:$0xf]
        %v1551 = vld [vmem:[#allocation7 + $0x1e0] sm:$0xf]
        %v1552 = vld [vmem:[#allocation7 + $0x204] sm:$0xf]
        %v1553 = vld [vmem:[#allocation7 + $0x228] sm:$0xf]
        %v1558 = vunpack.c.l.b16 %v1550
        %v1559 = vunpack.c.l.b16 %v1551
        %v1560 = vunpack.c.l.b16 %v1552
        %v1561 = vunpack.c.l.b16 %v1553
        %v1562 = vpack.c.b16 %v1559, %v1558
        %v1563 = vpack.c.b16 %v1561, %v1560
        %v1567 = vsel %vm920, %v1549, 0
        %1569 = vmatprep.subr.bf16.mxu0 0
        %1570 = vmatpush1.bf16.msra.mxu0 %v1562
        %1571 = vmatprep.subr.bf16.mxu0 0
        %1572 = vmatpush1.bf16.msra.mxu0 %v1563
        %1573 = vmatprep.subr.bf16.mxu0 0
        %1574 = vmatpush1.bf16.msra.mxu0 0
        %1575 = vmatprep.subr.bf16.mxu0 0
        %1576 = vmatpush1.bf16.msra.mxu0 0
        %1577 = vmatprep.subr.bf16.mxu0 0
        %1578 = vmatpush1.bf16.msra.mxu0 0
        %1579 = vmatprep.subr.bf16.mxu0 0
        %1580 = vmatpush1.bf16.msra.mxu0 0
        %1581 = vmatprep.subr.bf16.mxu0 0
        %1582 = vmatpush1.bf16.msra.mxu0 0
        %1583 = vmatprep.subr.bf16.mxu0 0
        %1584 = vmatpush1.bf16.msra.mxu0 0
        %1585 = vmatprep.subr.bf16.mxu0 0
        %1586 = vmatpush1.bf16.msra.mxu0 0
        %1587 = vmatprep.subr.bf16.mxu0 0
        %1588 = vmatpush1.bf16.msra.mxu0 0
        %1589 = vmatprep.subr.bf16.mxu0 0
        %1590 = vmatpush1.bf16.msra.mxu0 0
        %1591 = vmatprep.subr.bf16.mxu0 0
        %1592 = vmatpush1.bf16.msra.mxu0 0
        %1593 = vmatprep.subr.bf16.mxu0 0
        %1594 = vmatpush1.bf16.msra.mxu0 0
        %1595 = vmatprep.subr.bf16.mxu0 0
        %1596 = vmatpush1.bf16.msra.mxu0 0
        %1597 = vmatprep.subr.bf16.mxu0 0
        %1598 = vmatpush1.bf16.msra.mxu0 0
        %1599 = vmatprep.subr.bf16.mxu0 0
        %1600 = vmatpush1.bf16.msra.mxu0 0
        %1601 = vmatprep.mubr.bf16.mxu0 0
        %1602 = vmatmul.mubr.bf16.gmra.mrb[0].mxu0 %v1567
        %v1603 = vpop.f32.mrb[0].mxu0
        %v1604 = vadd.f32 0.0, %v1603
        %v1605 = vpop.f32.mrb[0].mxu0
        %v1606 = vpop.f32.mrb[0].mxu0
        %v1607 = vpop.f32.mrb[0].mxu0
        %1608 = vdwg.mxu0
        %v1609 = vadd.f32 %v1436, %v1604
        %v1610 = vadd.f32 %v637, %v1609
        %v1611 = vld [vmem:[#allocation2 + $0x19] ss:$0 sm:$0xff]
        %v1612 = vadd.f32 %v1610, %v1611
        %v1613 = vld [vmem:[#allocation2 + $0x2] ss:$0 sm:$0xff]
        %v1614 = vld [vmem:[#allocation2 + $0xa] ss:$0 sm:$0xff]
        %1615 = vadd.xlane.f32.xlu0 %v1612
        %v1616 = vpop.xlane.xlu0 %1615
        %v1617 = vmul.f32 %v1616, %v626
        %v1618 = vsub.f32 %v1612, %v1617
        %v1619 = vmul.f32 %v1618, %v1618
        %1620 = vadd.xlane.f32.xlu0 %v1619
        %v1621 = vpop.xlane.xlu0 %1620
        %v1622 = vmul.f32 %v1621, %v626
        %v1623 = vadd.f32 %v1622, 1e-05
        %v1624 = vrsqrt.pop %v1623
        %v1625 = vmul.f32 %v1618, %v1624
        %v1626 = vmul.f32 %v1625, %v1613
        %v1627 = vadd.f32 %v1626, %v1614
        %v1628 = vpack.c.bf16 %v1627, %v1627
        %v1629 = vld [vmem:[#allocation7 + $0x10] sm:$0xff]
        %v1630 = vld [vmem:[#allocation7 + $0x18] sm:$0xff]
        %v1631 = vld [vmem:[#allocation7 + $0x34] sm:$0xff]
        %v1632 = vld [vmem:[#allocation7 + $0x3c] sm:$0xff]
        %v1633 = vld [vmem:[#allocation7 + $0x58] sm:$0xff]
        %v1634 = vld [vmem:[#allocation7 + $0x60] sm:$0xff]
        %v1635 = vld [vmem:[#allocation7 + $0x7c] sm:$0xff]
        %v1636 = vld [vmem:[#allocation7 + $0x84] sm:$0xff]
        %v1637 = vld [vmem:[#allocation7 + $0xa0] sm:$0xff]
        %v1638 = vld [vmem:[#allocation7 + $0xa8] sm:$0xff]
        %v1639 = vld [vmem:[#allocation7 + $0xc4] sm:$0xff]
        %v1640 = vld [vmem:[#allocation7 + $0xcc] sm:$0xff]
        %v1641 = vld [vmem:[#allocation7 + $0xe8] sm:$0xff]
        %v1642 = vld [vmem:[#allocation7 + $0xf0] sm:$0xff]
        %v1643 = vld [vmem:[#allocation7 + $0x10c] sm:$0xff]
        %v1644 = vld [vmem:[#allocation7 + $0x114] sm:$0xff]
        %v1645 = vld [vmem:[#allocation7 + $0x130] sm:$0xff]
        %v1646 = vld [vmem:[#allocation7 + $0x138] sm:$0xff]
        %v1647 = vld [vmem:[#allocation7 + $0x154] sm:$0xff]
        %v1648 = vld [vmem:[#allocation7 + $0x15c] sm:$0xff]
        %v1649 = vld [vmem:[#allocation7 + $0x178] sm:$0xff]
        %v1650 = vld [vmem:[#allocation7 + $0x180] sm:$0xff]
        %v1651 = vld [vmem:[#allocation7 + $0x19c] sm:$0xff]
        %v1652 = vld [vmem:[#allocation7 + $0x1a4] sm:$0xff]
        %v1653 = vld [vmem:[#allocation7 + $0x1c0] sm:$0xff]
        %v1654 = vld [vmem:[#allocation7 + $0x1c8] sm:$0xff]
        %v1655 = vld [vmem:[#allocation7 + $0x1e4] sm:$0xff]
        %v1656 = vld [vmem:[#allocation7 + $0x1ec] sm:$0xff]
        %v1657 = vld [vmem:[#allocation7 + $0x208] sm:$0xff]
        %v1658 = vld [vmem:[#allocation7 + $0x210] sm:$0xff]
        %v1659 = vld [vmem:[#allocation7 + $0x22c] sm:$0xff]
        %v1660 = vld [vmem:[#allocation7 + $0x234] sm:$0xff]
        %s1661 = scalar_lea.vmem [#allocation2], 3
        %v1662 = vld [vmem:[%s1661] ss:$8 sm:$0xf]
        %v1664 = vlaneseq
        %v1665 = vshrl.u32 %v1664, 7
        %v1666 = vsub.s32 0, %v1665
        %v1667 = vrot.slane %v1662, %v1666
        %v1668 = vlaneseq
        %v1669 = vshrl.u32 %v1668, 7
        %v1670 = vsub.s32 1, %v1669
        %v1671 = vrot.slane %v1662, %v1670
        %v1672 = vlaneseq
        %v1673 = vshrl.u32 %v1672, 7
        %v1674 = vsub.s32 2, %v1673
        %v1675 = vrot.slane %v1662, %v1674
        %v1676 = vlaneseq
        %v1677 = vshrl.u32 %v1676, 7
        %v1678 = vsub.s32 3, %v1677
        %v1679 = vrot.slane %v1662, %v1678
        %v1716 = vunpack.c.l.b16 %v1629
        %v1717 = vunpack.c.h.b16 %v1629
        %v1718 = vunpack.c.l.b16 %v1630
        %v1719 = vunpack.c.h.b16 %v1630
        %v1720 = vunpack.c.l.b16 %v1631
        %v1721 = vunpack.c.h.b16 %v1631
        %v1722 = vunpack.c.l.b16 %v1632
        %v1723 = vunpack.c.h.b16 %v1632
        %v1724 = vunpack.c.l.b16 %v1633
        %v1725 = vunpack.c.h.b16 %v1633
        %v1726 = vunpack.c.l.b16 %v1634
        %v1727 = vunpack.c.h.b16 %v1634
        %v1728 = vunpack.c.l.b16 %v1635
        %v1729 = vunpack.c.h.b16 %v1635
        %v1730 = vunpack.c.l.b16 %v1636
        %v1731 = vunpack.c.h.b16 %v1636
        %v1732 = vunpack.c.l.b16 %v1637
        %v1733 = vunpack.c.h.b16 %v1637
        %v1734 = vunpack.c.l.b16 %v1638
        %v1735 = vunpack.c.h.b16 %v1638
        %v1736 = vunpack.c.l.b16 %v1639
        %v1737 = vunpack.c.h.b16 %v1639
        %v1738 = vunpack.c.l.b16 %v1640
        %v1739 = vunpack.c.h.b16 %v1640
        %v1740 = vunpack.c.l.b16 %v1641
        %v1741 = vunpack.c.h.b16 %v1641
        %v1742 = vunpack.c.l.b16 %v1642
        %v1743 = vunpack.c.h.b16 %v1642
        %v1744 = vunpack.c.l.b16 %v1643
        %v1745 = vunpack.c.h.b16 %v1643
        %v1746 = vunpack.c.l.b16 %v1644
        %v1747 = vunpack.c.h.b16 %v1644
        %v1748 = vunpack.c.l.b16 %v1645
        %v1749 = vunpack.c.h.b16 %v1645
        %v1750 = vunpack.c.l.b16 %v1646
        %v1751 = vunpack.c.h.b16 %v1646
        %v1752 = vunpack.c.l.b16 %v1647
        %v1753 = vunpack.c.h.b16 %v1647
        %v1754 = vunpack.c.l.b16 %v1648
        %v1755 = vunpack.c.h.b16 %v1648
        %v1756 = vunpack.c.l.b16 %v1649
        %v1757 = vunpack.c.h.b16 %v1649
        %v1758 = vunpack.c.l.b16 %v1650
        %v1759 = vunpack.c.h.b16 %v1650
        %v1760 = vunpack.c.l.b16 %v1651
        %v1761 = vunpack.c.h.b16 %v1651
        %v1762 = vunpack.c.l.b16 %v1652
        %v1763 = vunpack.c.h.b16 %v1652
        %v1764 = vunpack.c.l.b16 %v1653
        %v1765 = vunpack.c.h.b16 %v1653
        %v1766 = vunpack.c.l.b16 %v1654
        %v1767 = vunpack.c.h.b16 %v1654
        %v1768 = vunpack.c.l.b16 %v1655
        %v1769 = vunpack.c.h.b16 %v1655
        %v1770 = vunpack.c.l.b16 %v1656
        %v1771 = vunpack.c.h.b16 %v1656
        %v1772 = vunpack.c.l.b16 %v1657
        %v1773 = vunpack.c.h.b16 %v1657
        %v1774 = vunpack.c.l.b16 %v1658
        %v1775 = vunpack.c.h.b16 %v1658
        %v1776 = vunpack.c.l.b16 %v1659
        %v1777 = vunpack.c.h.b16 %v1659
        %v1778 = vunpack.c.l.b16 %v1660
        %v1779 = vunpack.c.h.b16 %v1660
        %v1780 = vpack.c.b16 %v1720, %v1716
        %v1781 = vpack.c.b16 %v1721, %v1717
        %v1782 = vpack.c.b16 %v1722, %v1718
        %v1783 = vpack.c.b16 %v1723, %v1719
        %v1784 = vpack.c.b16 %v1728, %v1724
        %v1785 = vpack.c.b16 %v1729, %v1725
        %v1786 = vpack.c.b16 %v1730, %v1726
        %v1787 = vpack.c.b16 %v1731, %v1727
        %v1788 = vpack.c.b16 %v1736, %v1732
        %v1789 = vpack.c.b16 %v1737, %v1733
        %v1790 = vpack.c.b16 %v1738, %v1734
        %v1791 = vpack.c.b16 %v1739, %v1735
        %v1792 = vpack.c.b16 %v1744, %v1740
        %v1793 = vpack.c.b16 %v1745, %v1741
        %v1794 = vpack.c.b16 %v1746, %v1742
        %v1795 = vpack.c.b16 %v1747, %v1743
        %v1796 = vpack.c.b16 %v1752, %v1748
        %v1797 = vpack.c.b16 %v1753, %v1749
        %v1798 = vpack.c.b16 %v1754, %v1750
        %v1799 = vpack.c.b16 %v1755, %v1751
        %v1800 = vpack.c.b16 %v1760, %v1756
        %v1801 = vpack.c.b16 %v1761, %v1757
        %v1802 = vpack.c.b16 %v1762, %v1758
        %v1803 = vpack.c.b16 %v1763, %v1759
        %v1804 = vpack.c.b16 %v1768, %v1764
        %v1805 = vpack.c.b16 %v1769, %v1765
        %v1806 = vpack.c.b16 %v1770, %v1766
        %v1807 = vpack.c.b16 %v1771, %v1767
        %v1808 = vpack.c.b16 %v1776, %v1772
        %v1809 = vpack.c.b16 %v1777, %v1773
        %v1810 = vpack.c.b16 %v1778, %v1774
        %v1811 = vpack.c.b16 %v1779, %v1775
        %1844 = vmatprep.subr.bf16.mxu0 %v1781
        %1845 = vmatpush1.bf16.msra.mxu0 %v1780
        %1846 = vmatprep.subr.bf16.mxu0 %v1785
        %1847 = vmatpush1.bf16.msra.mxu0 %v1784
        %1848 = vmatprep.subr.bf16.mxu0 %v1789
        %1849 = vmatpush1.bf16.msra.mxu0 %v1788
        %1850 = vmatprep.subr.bf16.mxu0 %v1793
        %1851 = vmatpush1.bf16.msra.mxu0 %v1792
        %1852 = vmatprep.subr.bf16.mxu0 %v1797
        %1853 = vmatpush1.bf16.msra.mxu0 %v1796
        %1854 = vmatprep.subr.bf16.mxu0 %v1801
        %1855 = vmatpush1.bf16.msra.mxu0 %v1800
        %1856 = vmatprep.subr.bf16.mxu0 %v1805
        %1857 = vmatpush1.bf16.msra.mxu0 %v1804
        %1858 = vmatprep.subr.bf16.mxu0 %v1809
        %1859 = vmatpush1.bf16.msra.mxu0 %v1808
        %1860 = vmatprep.subr.bf16.mxu0 0
        %1861 = vmatpush1.bf16.msra.mxu0 0
        %1862 = vmatprep.subr.bf16.mxu0 0
        %1863 = vmatpush1.bf16.msra.mxu0 0
        %1864 = vmatprep.subr.bf16.mxu0 0
        %1865 = vmatpush1.bf16.msra.mxu0 0
        %1866 = vmatprep.subr.bf16.mxu0 0
        %1867 = vmatpush1.bf16.msra.mxu0 0
        %1868 = vmatprep.subr.bf16.mxu0 0
        %1869 = vmatpush1.bf16.msra.mxu0 0
        %1870 = vmatprep.subr.bf16.mxu0 0
        %1871 = vmatpush1.bf16.msra.mxu0 0
        %1872 = vmatprep.subr.bf16.mxu0 0
        %1873 = vmatpush1.bf16.msra.mxu0 0
        %1874 = vmatprep.subr.bf16.mxu0 0
        %1875 = vmatpush1.bf16.msra.mxu0 0
        %1876 = vmatprep.mubr.bf16.mxu0 0
        %1877 = vmatmul.mubr.bf16.gmra.mrb[0].mxu0 %v1628
        %v1878 = vpop.f32.mrb[0].mxu0
        %v1879 = vadd.f32 %v1667, %v1878
        %v1880 = vpop.f32.mrb[0].mxu0
        %v1881 = vadd.f32 %v1671, %v1880
        %v1882 = vpop.f32.mrb[0].mxu0
        %v1883 = vpop.f32.mrb[0].mxu0
        %1884 = vdwg.mxu0
        %1885 = vmatprep.subr.bf16.mxu0 %v1783
        %1886 = vmatpush1.bf16.msra.mxu0 %v1782
        %1887 = vmatprep.subr.bf16.mxu0 %v1787
        %1888 = vmatpush1.bf16.msra.mxu0 %v1786
        %1889 = vmatprep.subr.bf16.mxu0 %v1791
        %1890 = vmatpush1.bf16.msra.mxu0 %v1790
        %1891 = vmatprep.subr.bf16.mxu0 %v1795
        %1892 = vmatpush1.bf16.msra.mxu0 %v1794
        %1893 = vmatprep.subr.bf16.mxu0 %v1799
        %1894 = vmatpush1.bf16.msra.mxu0 %v1798
        %1895 = vmatprep.subr.bf16.mxu0 %v1803
        %1896 = vmatpush1.bf16.msra.mxu0 %v1802
        %1897 = vmatprep.subr.bf16.mxu0 %v1807
        %1898 = vmatpush1.bf16.msra.mxu0 %v1806
        %1899 = vmatprep.subr.bf16.mxu0 %v1811
        %1900 = vmatpush1.bf16.msra.mxu0 %v1810
        %1901 = vmatprep.subr.bf16.mxu0 0
        %1902 = vmatpush1.bf16.msra.mxu0 0
        %1903 = vmatprep.subr.bf16.mxu0 0
        %1904 = vmatpush1.bf16.msra.mxu0 0
        %1905 = vmatprep.subr.bf16.mxu0 0
        %1906 = vmatpush1.bf16.msra.mxu0 0
        %1907 = vmatprep.subr.bf16.mxu0 0
        %1908 = vmatpush1.bf16.msra.mxu0 0
        %1909 = vmatprep.subr.bf16.mxu0 0
        %1910 = vmatpush1.bf16.msra.mxu0 0
        %1911 = vmatprep.subr.bf16.mxu0 0
        %1912 = vmatpush1.bf16.msra.mxu0 0
        %1913 = vmatprep.subr.bf16.mxu0 0
        %1914 = vmatpush1.bf16.msra.mxu0 0
        %1915 = vmatprep.subr.bf16.mxu0 0
        %1916 = vmatpush1.bf16.msra.mxu0 0
        %1917 = vmatprep.mubr.bf16.mxu0 0
        %1918 = vmatmul.mubr.bf16.gmra.mrb[0].mxu0 %v1628
        %v1919 = vpop.f32.mrb[0].mxu0
        %v1920 = vadd.f32 %v1675, %v1919
        %v1921 = vpop.f32.mrb[0].mxu0
        %v1922 = vadd.f32 %v1679, %v1921
        %v1923 = vpop.f32.mrb[0].mxu0
        %v1924 = vpop.f32.mrb[0].mxu0
        %1925 = vdwg.mxu0
        %v1926 = vmul.f32 %v1879, 1.702
        %v1927 = vmul.f32 %v1881, 1.702
        %v1928 = vmul.f32 %v1920, 1.702
        %v1929 = vmul.f32 %v1922, 1.702
        %v1930 = vxor.u32 %v1926, 2147483648
        %v1931 = vxor.u32 %v1927, 2147483648
        %v1932 = vxor.u32 %v1928, 2147483648
        %v1933 = vxor.u32 %v1929, 2147483648
        %v1934 = vmul.f32 %v1930, 1.442695
        %v1935 = vpow.pop %v1934
        %v1936 = vmul.f32 %v1931, 1.442695
        %v1937 = vpow.pop %v1936
        %v1938 = vmul.f32 %v1932, 1.442695
        %v1939 = vpow.pop %v1938
        %v1940 = vmul.f32 %v1933, 1.442695
        %v1941 = vpow.pop %v1940
        %v1942 = vadd.f32 %v1935, 1.0
        %v1943 = vadd.f32 %v1937, 1.0
        %v1944 = vadd.f32 %v1939, 1.0
        %v1945 = vadd.f32 %v1941, 1.0
        %v1946 = vrcp.pop %v1942
        %v1947 = vmul.f32 1.0, %v1946
        %v1948 = vrcp.pop %v1943
        %v1949 = vmul.f32 1.0, %v1948
        %v1950 = vrcp.pop %v1944
        %v1951 = vmul.f32 1.0, %v1950
        %v1952 = vrcp.pop %v1945
        %v1953 = vmul.f32 1.0, %v1952
        %v1954 = vmul.f32 %v1879, %v1947
        %v1955 = vmul.f32 %v1881, %v1949
        %v1956 = vmul.f32 %v1920, %v1951
        %v1957 = vmul.f32 %v1922, %v1953
        %v1958 = vpack.c.bf16 %v1954, %v1954
        %v1959 = vpack.c.bf16 %v1955, %v1955
        %v1960 = vpack.c.bf16 %v1956, %v1956
        %v1961 = vpack.c.bf16 %v1957, %v1957
        %v1962 = vld [vmem:[%s8] sm:$0xf]
        %v1963 = vld [vmem:[%s8 + $0x4] sm:$0xf]
        %v1964 = vld [vmem:[%s8 + $0x8] sm:$0xf]
        %v1965 = vld [vmem:[%s8 + $0xc] sm:$0xf]
        %v1966 = vld [vmem:[%s8 + $0x10] sm:$0xf]
        %v1967 = vld [vmem:[%s8 + $0x14] sm:$0xf]
        %v1968 = vld [vmem:[%s8 + $0x18] sm:$0xf]
        %v1969 = vld [vmem:[%s8 + $0x1c] sm:$0xf]
        %v1970 = vld [vmem:[%s8 + $0x20] sm:$0xf]
        %v1971 = vld [vmem:[%s8 + $0x24] sm:$0xf]
        %v1972 = vld [vmem:[%s8 + $0x28] sm:$0xf]
        %v1973 = vld [vmem:[%s8 + $0x2c] sm:$0xf]
        %v1974 = vld [vmem:[%s8 + $0x30] sm:$0xf]
        %v1975 = vld [vmem:[%s8 + $0x34] sm:$0xf]
        %v1976 = vld [vmem:[%s8 + $0x38] sm:$0xf]
        %v1977 = vld [vmem:[%s8 + $0x3c] sm:$0xf]
        %v1978 = vld [vmem:[%s8 + $0x40] sm:$0xf]
        %v1979 = vld [vmem:[%s8 + $0x44] sm:$0xf]
        %v1980 = vld [vmem:[%s8 + $0x48] sm:$0xf]
        %v1981 = vld [vmem:[%s8 + $0x4c] sm:$0xf]
        %v1982 = vld [vmem:[%s8 + $0x50] sm:$0xf]
        %v1983 = vld [vmem:[%s8 + $0x54] sm:$0xf]
        %v1984 = vld [vmem:[%s8 + $0x58] sm:$0xf]
        %v1985 = vld [vmem:[%s8 + $0x5c] sm:$0xf]
        %v1986 = vld [vmem:[%s8 + $0x60] sm:$0xf]
        %v1987 = vld [vmem:[%s8 + $0x64] sm:$0xf]
        %v1988 = vld [vmem:[%s8 + $0x68] sm:$0xf]
        %v1989 = vld [vmem:[%s8 + $0x6c] sm:$0xf]
        %v1990 = vld [vmem:[%s8 + $0x70] sm:$0xf]
        %v1991 = vld [vmem:[%s8 + $0x74] sm:$0xf]
        %v1992 = vld [vmem:[%s8 + $0x78] sm:$0xf]
        %v1993 = vld [vmem:[%s8 + $0x7c] sm:$0xf]
        %v1994 = vld [vmem:[%s8 + $0x80] sm:$0xf]
        %v1995 = vld [vmem:[%s8 + $0x84] sm:$0xf]
        %v1996 = vld [vmem:[%s8 + $0x88] sm:$0xf]
        %v1997 = vld [vmem:[%s8 + $0x8c] sm:$0xf]
        %v1998 = vld [vmem:[%s8 + $0x90] sm:$0xf]
        %v1999 = vld [vmem:[%s8 + $0x94] sm:$0xf]
        %v2000 = vld [vmem:[%s8 + $0x98] sm:$0xf]
        %v2001 = vld [vmem:[%s8 + $0x9c] sm:$0xf]
        %v2002 = vld [vmem:[%s8 + $0xa0] sm:$0xf]
        %v2003 = vld [vmem:[%s8 + $0xa4] sm:$0xf]
        %v2004 = vld [vmem:[%s8 + $0xa8] sm:$0xf]
        %v2005 = vld [vmem:[%s8 + $0xac] sm:$0xf]
        %v2006 = vld [vmem:[%s8 + $0xb0] sm:$0xf]
        %v2007 = vld [vmem:[%s8 + $0xb4] sm:$0xf]
        %v2008 = vld [vmem:[%s8 + $0xb8] sm:$0xf]
        %v2009 = vld [vmem:[%s8 + $0xbc] sm:$0xf]
        %v2010 = vld [vmem:[%s8 + $0xc0] sm:$0xf]
        %v2011 = vld [vmem:[%s8 + $0xc4] sm:$0xf]
        %v2012 = vld [vmem:[%s8 + $0xc8] sm:$0xf]
        %v2013 = vld [vmem:[%s8 + $0xcc] sm:$0xf]
        %v2014 = vld [vmem:[%s8 + $0xd0] sm:$0xf]
        %v2015 = vld [vmem:[%s8 + $0xd4] sm:$0xf]
        %v2016 = vld [vmem:[%s8 + $0xd8] sm:$0xf]
        %v2017 = vld [vmem:[%s8 + $0xdc] sm:$0xf]
        %v2018 = vld [vmem:[%s8 + $0xe0] sm:$0xf]
        %v2019 = vld [vmem:[%s8 + $0xe4] sm:$0xf]
        %v2020 = vld [vmem:[%s8 + $0xe8] sm:$0xf]
        %v2021 = vld [vmem:[%s8 + $0xec] sm:$0xf]
        %v2022 = vld [vmem:[%s8 + $0xf0] sm:$0xf]
        %v2023 = vld [vmem:[%s8 + $0xf4] sm:$0xf]
        %v2024 = vld [vmem:[%s8 + $0xf8] sm:$0xf]
        %v2025 = vld [vmem:[%s8 + $0xfc] sm:$0xf]
        %v2090 = vunpack.c.l.b16 %v1962
        %v2091 = vunpack.c.l.b16 %v1963
        %v2092 = vunpack.c.l.b16 %v1964
        %v2093 = vunpack.c.l.b16 %v1965
        %v2094 = vunpack.c.l.b16 %v1966
        %v2095 = vunpack.c.l.b16 %v1967
        %v2096 = vunpack.c.l.b16 %v1968
        %v2097 = vunpack.c.l.b16 %v1969
        %v2098 = vunpack.c.l.b16 %v1970
        %v2099 = vunpack.c.l.b16 %v1971
        %v2100 = vunpack.c.l.b16 %v1972
        %v2101 = vunpack.c.l.b16 %v1973
        %v2102 = vunpack.c.l.b16 %v1974
        %v2103 = vunpack.c.l.b16 %v1975
        %v2104 = vunpack.c.l.b16 %v1976
        %v2105 = vunpack.c.l.b16 %v1977
        %v2106 = vunpack.c.l.b16 %v1978
        %v2107 = vunpack.c.l.b16 %v1979
        %v2108 = vunpack.c.l.b16 %v1980
        %v2109 = vunpack.c.l.b16 %v1981
        %v2110 = vunpack.c.l.b16 %v1982
        %v2111 = vunpack.c.l.b16 %v1983
        %v2112 = vunpack.c.l.b16 %v1984
        %v2113 = vunpack.c.l.b16 %v1985
        %v2114 = vunpack.c.l.b16 %v1986
        %v2115 = vunpack.c.l.b16 %v1987
        %v2116 = vunpack.c.l.b16 %v1988
        %v2117 = vunpack.c.l.b16 %v1989
        %v2118 = vunpack.c.l.b16 %v1990
        %v2119 = vunpack.c.l.b16 %v1991
        %v2120 = vunpack.c.l.b16 %v1992
        %v2121 = vunpack.c.l.b16 %v1993
        %v2122 = vunpack.c.l.b16 %v1994
        %v2123 = vunpack.c.l.b16 %v1995
        %v2124 = vunpack.c.l.b16 %v1996
        %v2125 = vunpack.c.l.b16 %v1997
        %v2126 = vunpack.c.l.b16 %v1998
        %v2127 = vunpack.c.l.b16 %v1999
        %v2128 = vunpack.c.l.b16 %v2000
        %v2129 = vunpack.c.l.b16 %v2001
        %v2130 = vunpack.c.l.b16 %v2002
        %v2131 = vunpack.c.l.b16 %v2003
        %v2132 = vunpack.c.l.b16 %v2004
        %v2133 = vunpack.c.l.b16 %v2005
        %v2134 = vunpack.c.l.b16 %v2006
        %v2135 = vunpack.c.l.b16 %v2007
        %v2136 = vunpack.c.l.b16 %v2008
        %v2137 = vunpack.c.l.b16 %v2009
        %v2138 = vunpack.c.l.b16 %v2010
        %v2139 = vunpack.c.l.b16 %v2011
        %v2140 = vunpack.c.l.b16 %v2012
        %v2141 = vunpack.c.l.b16 %v2013
        %v2142 = vunpack.c.l.b16 %v2014
        %v2143 = vunpack.c.l.b16 %v2015
        %v2144 = vunpack.c.l.b16 %v2016
        %v2145 = vunpack.c.l.b16 %v2017
        %v2146 = vunpack.c.l.b16 %v2018
        %v2147 = vunpack.c.l.b16 %v2019
        %v2148 = vunpack.c.l.b16 %v2020
        %v2149 = vunpack.c.l.b16 %v2021
        %v2150 = vunpack.c.l.b16 %v2022
        %v2151 = vunpack.c.l.b16 %v2023
        %v2152 = vunpack.c.l.b16 %v2024
        %v2153 = vunpack.c.l.b16 %v2025
        %v2154 = vpack.c.b16 %v2091, %v2090
        %v2155 = vpack.c.b16 %v2093, %v2092
        %v2156 = vpack.c.b16 %v2095, %v2094
        %v2157 = vpack.c.b16 %v2097, %v2096
        %v2158 = vpack.c.b16 %v2099, %v2098
        %v2159 = vpack.c.b16 %v2101, %v2100
        %v2160 = vpack.c.b16 %v2103, %v2102
        %v2161 = vpack.c.b16 %v2105, %v2104
        %v2162 = vpack.c.b16 %v2107, %v2106
        %v2163 = vpack.c.b16 %v2109, %v2108
        %v2164 = vpack.c.b16 %v2111, %v2110
        %v2165 = vpack.c.b16 %v2113, %v2112
        %v2166 = vpack.c.b16 %v2115, %v2114
        %v2167 = vpack.c.b16 %v2117, %v2116
        %v2168 = vpack.c.b16 %v2119, %v2118
        %v2169 = vpack.c.b16 %v2121, %v2120
        %v2170 = vpack.c.b16 %v2123, %v2122
        %v2171 = vpack.c.b16 %v2125, %v2124
        %v2172 = vpack.c.b16 %v2127, %v2126
        %v2173 = vpack.c.b16 %v2129, %v2128
        %v2174 = vpack.c.b16 %v2131, %v2130
        %v2175 = vpack.c.b16 %v2133, %v2132
        %v2176 = vpack.c.b16 %v2135, %v2134
        %v2177 = vpack.c.b16 %v2137, %v2136
        %v2178 = vpack.c.b16 %v2139, %v2138
        %v2179 = vpack.c.b16 %v2141, %v2140
        %v2180 = vpack.c.b16 %v2143, %v2142
        %v2181 = vpack.c.b16 %v2145, %v2144
        %v2182 = vpack.c.b16 %v2147, %v2146
        %v2183 = vpack.c.b16 %v2149, %v2148
        %v2184 = vpack.c.b16 %v2151, %v2150
        %v2185 = vpack.c.b16 %v2153, %v2152
        %2218 = vmatprep.subr.bf16.mxu0 0
        %2219 = vmatpush1.bf16.msra.mxu0 %v2154
        %2220 = vmatprep.subr.bf16.mxu0 0
        %2221 = vmatpush1.bf16.msra.mxu0 %v2155
        %2222 = vmatprep.subr.bf16.mxu0 0
        %2223 = vmatpush1.bf16.msra.mxu0 %v2156
        %2224 = vmatprep.subr.bf16.mxu0 0
        %2225 = vmatpush1.bf16.msra.mxu0 %v2157
        %2226 = vmatprep.subr.bf16.mxu0 0
        %2227 = vmatpush1.bf16.msra.mxu0 %v2158
        %2228 = vmatprep.subr.bf16.mxu0 0
        %2229 = vmatpush1.bf16.msra.mxu0 %v2159
        %2230 = vmatprep.subr.bf16.mxu0 0
        %2231 = vmatpush1.bf16.msra.mxu0 %v2160
        %2232 = vmatprep.subr.bf16.mxu0 0
        %2233 = vmatpush1.bf16.msra.mxu0 %v2161
        %2234 = vmatprep.subr.bf16.mxu0 0
        %2235 = vmatpush1.bf16.msra.mxu0 %v2162
        %2236 = vmatprep.subr.bf16.mxu0 0
        %2237 = vmatpush1.bf16.msra.mxu0 %v2163
        %2238 = vmatprep.subr.bf16.mxu0 0
        %2239 = vmatpush1.bf16.msra.mxu0 %v2164
        %2240 = vmatprep.subr.bf16.mxu0 0
        %2241 = vmatpush1.bf16.msra.mxu0 %v2165
        %2242 = vmatprep.subr.bf16.mxu0 0
        %2243 = vmatpush1.bf16.msra.mxu0 %v2166
        %2244 = vmatprep.subr.bf16.mxu0 0
        %2245 = vmatpush1.bf16.msra.mxu0 %v2167
        %2246 = vmatprep.subr.bf16.mxu0 0
        %2247 = vmatpush1.bf16.msra.mxu0 %v2168
        %2248 = vmatprep.subr.bf16.mxu0 0
        %2249 = vmatpush1.bf16.msra.mxu0 %v2169
        %2250 = vmatprep.mubr.bf16.mxu0 %v1959
        %2251 = vmatmul.mubr.bf16.gmra.mrb[0].mxu0 %v1958
        %v2252 = vpop.f32.mrb[0].mxu0
        %v2253 = vadd.f32 0.0, %v2252
        %v2254 = vpop.f32.mrb[0].mxu0
        %v2255 = vpop.f32.mrb[0].mxu0
        %v2256 = vpop.f32.mrb[0].mxu0
        %2257 = vdwg.mxu0
        %2258 = vmatprep.subr.bf16.mxu0 0
        %2259 = vmatpush1.bf16.msra.mxu0 %v2170
        %2260 = vmatprep.subr.bf16.mxu0 0
        %2261 = vmatpush1.bf16.msra.mxu0 %v2171
        %2262 = vmatprep.subr.bf16.mxu0 0
        %2263 = vmatpush1.bf16.msra.mxu0 %v2172
        %2264 = vmatprep.subr.bf16.mxu0 0
        %2265 = vmatpush1.bf16.msra.mxu0 %v2173
        %2266 = vmatprep.subr.bf16.mxu0 0
        %2267 = vmatpush1.bf16.msra.mxu0 %v2174
        %2268 = vmatprep.subr.bf16.mxu0 0
        %2269 = vmatpush1.bf16.msra.mxu0 %v2175
        %2270 = vmatprep.subr.bf16.mxu0 0
        %2271 = vmatpush1.bf16.msra.mxu0 %v2176
        %2272 = vmatprep.subr.bf16.mxu0 0
        %2273 = vmatpush1.bf16.msra.mxu0 %v2177
        %2274 = vmatprep.subr.bf16.mxu0 0
        %2275 = vmatpush1.bf16.msra.mxu0 %v2178
        %2276 = vmatprep.subr.bf16.mxu0 0
        %2277 = vmatpush1.bf16.msra.mxu0 %v2179
        %2278 = vmatprep.subr.bf16.mxu0 0
        %2279 = vmatpush1.bf16.msra.mxu0 %v2180
        %2280 = vmatprep.subr.bf16.mxu0 0
        %2281 = vmatpush1.bf16.msra.mxu0 %v2181
        %2282 = vmatprep.subr.bf16.mxu0 0
        %2283 = vmatpush1.bf16.msra.mxu0 %v2182
        %2284 = vmatprep.subr.bf16.mxu0 0
        %2285 = vmatpush1.bf16.msra.mxu0 %v2183
        %2286 = vmatprep.subr.bf16.mxu0 0
        %2287 = vmatpush1.bf16.msra.mxu0 %v2184
        %2288 = vmatprep.subr.bf16.mxu0 0
        %2289 = vmatpush1.bf16.msra.mxu0 %v2185
        %2290 = vmatprep.mubr.bf16.mxu0 %v1961
        %2291 = vmatmul.mubr.bf16.gmra.mrb[0].mxu0 %v1960
        %v2292 = vpop.f32.mrb[0].mxu0
        %v2293 = vadd.f32 %v2253, %v2292
        %v2294 = vpop.f32.mrb[0].mxu0
        %v2295 = vpop.f32.mrb[0].mxu0
        %v2296 = vpop.f32.mrb[0].mxu0
        %2297 = vdwg.mxu0
        %v2298 = vadd.f32 %v1612, %v2293
        %v2299 = vld [vmem:[#allocation2 + $0x12] ss:$0 sm:$0xff]
        %v2300 = vadd.f32 %v2298, %v2299
        %v2301 = vlaneseq
        %v2302 = vshrl.u32 %v2301, 7
        %vm2303 = vcmp.ge.s32.totalorder %v2302, 1
        %vm2304 = vcmp.le.s32.totalorder %v2302, 4
        %vm2305 = vmand %vm2303, %vm2304
        %v2306 = vsel %vm2305, 0.25, 0.0
        %v2307 = vmul.f32 %v2300, %v2306
        %v2308 = vrot.slane %v2307, 4
        %v2309 = vadd.f32 %v2307, %v2308
        %v2310 = vrot.slane %v2309, 2
        %v2311 = vadd.f32 %v2309, %v2310
        %v2312 = vrot.slane %v2311, 1
        %v2313 = vadd.f32 %v2311, %v2312
        %v2314 = vpack.c.bf16 %v2313, %v2313
        %v2315 = vld [vmem:[#allocation7 + $0x20] sm:$0xf]
        %v2316 = vld [vmem:[#allocation7 + $0x44] sm:$0xf]
        %v2317 = vld [vmem:[#allocation7 + $0x68] sm:$0xf]
        %v2318 = vld [vmem:[#allocation7 + $0x8c] sm:$0xf]
        %v2319 = vld [vmem:[#allocation7 + $0xb0] sm:$0xf]
        %v2320 = vld [vmem:[#allocation7 + $0xd4] sm:$0xf]
        %v2321 = vld [vmem:[#allocation7 + $0xf8] sm:$0xf]
        %v2322 = vld [vmem:[#allocation7 + $0x11c] sm:$0xf]
        %v2323 = vld [vmem:[#allocation7 + $0x140] sm:$0xf]
        %v2324 = vld [vmem:[#allocation7 + $0x164] sm:$0xf]
        %v2325 = vld [vmem:[#allocation7 + $0x188] sm:$0xf]
        %v2326 = vld [vmem:[#allocation7 + $0x1ac] sm:$0xf]
        %v2327 = vld [vmem:[#allocation7 + $0x1d0] sm:$0xf]
        %v2328 = vld [vmem:[#allocation7 + $0x1f4] sm:$0xf]
        %v2329 = vld [vmem:[#allocation7 + $0x218] sm:$0xf]
        %v2330 = vld [vmem:[#allocation7 + $0x23c] sm:$0xf]
        %v2331 = vld [vmem:[#allocation2 + $0x1a] ss:$0 sm:$0xff]
        %v2348 = vunpack.c.l.b16 %v2315
        %v2349 = vunpack.c.l.b16 %v2316
        %v2350 = vunpack.c.l.b16 %v2317
        %v2351 = vunpack.c.l.b16 %v2318
        %v2352 = vunpack.c.l.b16 %v2319
        %v2353 = vunpack.c.l.b16 %v2320
        %v2354 = vunpack.c.l.b16 %v2321
        %v2355 = vunpack.c.l.b16 %v2322
        %v2356 = vunpack.c.l.b16 %v2323
        %v2357 = vunpack.c.l.b16 %v2324
        %v2358 = vunpack.c.l.b16 %v2325
        %v2359 = vunpack.c.l.b16 %v2326
        %v2360 = vunpack.c.l.b16 %v2327
        %v2361 = vunpack.c.l.b16 %v2328
        %v2362 = vunpack.c.l.b16 %v2329
        %v2363 = vunpack.c.l.b16 %v2330
        %v2364 = vpack.c.b16 %v2349, %v2348
        %v2365 = vpack.c.b16 %v2351, %v2350
        %v2366 = vpack.c.b16 %v2353, %v2352
        %v2367 = vpack.c.b16 %v2355, %v2354
        %v2368 = vpack.c.b16 %v2357, %v2356
        %v2369 = vpack.c.b16 %v2359, %v2358
        %v2370 = vpack.c.b16 %v2361, %v2360
        %v2371 = vpack.c.b16 %v2363, %v2362
        %2380 = vmatprep.subr.bf16.mxu0 0
        %2381 = vmatpush1.bf16.msra.mxu0 %v2364
        %2382 = vmatprep.subr.bf16.mxu0 0
        %2383 = vmatpush1.bf16.msra.mxu0 %v2365
        %2384 = vmatprep.subr.bf16.mxu0 0
        %2385 = vmatpush1.bf16.msra.mxu0 %v2366
        %2386 = vmatprep.subr.bf16.mxu0 0
        %2387 = vmatpush1.bf16.msra.mxu0 %v2367
        %2388 = vmatprep.subr.bf16.mxu0 0
        %2389 = vmatpush1.bf16.msra.mxu0 %v2368
        %2390 = vmatprep.subr.bf16.mxu0 0
        %2391 = vmatpush1.bf16.msra.mxu0 %v2369
        %2392 = vmatprep.subr.bf16.mxu0 0
        %2393 = vmatpush1.bf16.msra.mxu0 %v2370
        %2394 = vmatprep.subr.bf16.mxu0 0
        %2395 = vmatpush1.bf16.msra.mxu0 %v2371
        %2396 = vmatprep.subr.bf16.mxu0 0
        %2397 = vmatpush1.bf16.msra.mxu0 0
        %2398 = vmatprep.subr.bf16.mxu0 0
        %2399 = vmatpush1.bf16.msra.mxu0 0
        %2400 = vmatprep.subr.bf16.mxu0 0
        %2401 = vmatpush1.bf16.msra.mxu0 0
        %2402 = vmatprep.subr.bf16.mxu0 0
        %2403 = vmatpush1.bf16.msra.mxu0 0
        %2404 = vmatprep.subr.bf16.mxu0 0
        %2405 = vmatpush1.bf16.msra.mxu0 0
        %2406 = vmatprep.subr.bf16.mxu0 0
        %2407 = vmatpush1.bf16.msra.mxu0 0
        %2408 = vmatprep.subr.bf16.mxu0 0
        %2409 = vmatpush1.bf16.msra.mxu0 0
        %2410 = vmatprep.subr.bf16.mxu0 0
        %2411 = vmatpush1.bf16.msra.mxu0 0
        %2412 = vmatprep.mubr.bf16.mxu0 0
        %2413 = vmatmul.mubr.bf16.gmra.mrb[0].mxu0 %v2314
        %v2414 = vpop.f32.mrb[0].mxu0
        %v2415 = vadd.f32 %v2331, %v2414
        %v2416 = vpop.f32.mrb[0].mxu0
        %v2417 = vpop.f32.mrb[0].mxu0
        %v2418 = vpop.f32.mrb[0].mxu0
        %2419 = vdwg.mxu0
        %v2420 = vadd.s32 %v2302, 8
        %v2421 = vld [vmem:[%s472] sm:$0xff]
        %v2422 = vld [vmem:[%s472 + $0x8] sm:$0xff]
        %vm2423 = vcmp.eq.s32.totalorder %v2302, 0
        %vm2424 = vcmp.eq.s32.totalorder %v2420, 0
        %v2425 = vlaneseq
        %v2426 = vshrl.u32 %v2425, 7
        %v2427 = vsub.s32 0, %v2426
        %v2428 = vrot.slane %v2415, %v2427
        %v2429 = vsel %vm2423, %v2428, 0.0
        %v2430 = vsel %vm2424, %v2428, 0.0
        %v2431 = vadd.f32 %v2421, %v2429
        %v2432 = vadd.f32 %v2422, %v2430
        %v2433 = vld [vmem:[#allocation2 + $0x4] ss:$0 sm:$0xff]
        %v2434 = vmul.f32 %v2431, %v2431
        %v2435 = vmul.f32 %v2432, %v2432
        %2436 = vadd.xlane.f32.xlu0 %v2434
        %v2437 = vpop.xlane.xlu0 %2436
        %2438 = vadd.xlane.f32.xlu0 %v2435
        %v2439 = vpop.xlane.xlu0 %2438
        %v2440 = vmul.f32 %v2437, %v626
        %v2441 = vmul.f32 %v2439, %v626
        %v2442 = vadd.f32 %v2440, 1e-06
        %v2443 = vadd.f32 %v2441, 1e-06
        %v2444 = vrsqrt.pop %v2442
        %v2445 = vrsqrt.pop %v2443
        %v2446 = vmul.f32 %v2431, %v2444
        %v2447 = vmul.f32 %v2432, %v2445
        %v2448 = vmul.f32 %v2446, %v2433
        %v2449 = vmul.f32 %v2447, %v2433
        %v2450 = vpack.c.bf16 %v2449, %v2448
        %v2451 = vld [vmem:[%s9] sm:$0xff]
        %v2452 = vld [vmem:[%s9 + $0x8] sm:$0xff]
        %v2453 = vld [vmem:[%s9 + $0x10] sm:$0xf]
        %v2454 = vld [vmem:[%s9 + $0x38] sm:$0xff]
        %v2455 = vld [vmem:[%s9 + $0x40] sm:$0xff]
        %v2456 = vld [vmem:[%s9 + $0x48] sm:$0xf]
        %v2457 = vld [vmem:[%s9 + $0x70] sm:$0xff]
        %v2458 = vld [vmem:[%s9 + $0x78] sm:$0xff]
        %v2459 = vld [vmem:[%s9 + $0x80] sm:$0xf]
        %v2460 = vld [vmem:[%s9 + $0xa8] sm:$0xff]
        %v2461 = vld [vmem:[%s9 + $0xb0] sm:$0xff]
        %v2462 = vld [vmem:[%s9 + $0xb8] sm:$0xf]
        %v2463 = vld [vmem:[%s9 + $0xe0] sm:$0xff]
        %v2464 = vld [vmem:[%s9 + $0xe8] sm:$0xff]
        %v2465 = vld [vmem:[%s9 + $0xf0] sm:$0xf]
        %v2466 = vld [vmem:[%s9 + $0x118] sm:$0xff]
        %v2467 = vld [vmem:[%s9 + $0x120] sm:$0xff]
        %v2468 = vld [vmem:[%s9 + $0x128] sm:$0xf]
        %v2469 = vld [vmem:[%s9 + $0x150] sm:$0xff]
        %v2470 = vld [vmem:[%s9 + $0x158] sm:$0xff]
        %v2471 = vld [vmem:[%s9 + $0x160] sm:$0xf]
        %v2472 = vld [vmem:[%s9 + $0x188] sm:$0xff]
        %v2473 = vld [vmem:[%s9 + $0x190] sm:$0xff]
        %v2474 = vld [vmem:[%s9 + $0x198] sm:$0xf]
        %v2475 = vld [vmem:[%s9 + $0x1c0] sm:$0xff]
        %v2476 = vld [vmem:[%s9 + $0x1c8] sm:$0xff]
        %v2477 = vld [vmem:[%s9 + $0x1d0] sm:$0xf]
        %v2478 = vld [vmem:[%s9 + $0x1f8] sm:$0xff]
        %v2479 = vld [vmem:[%s9 + $0x200] sm:$0xff]
        %v2480 = vld [vmem:[%s9 + $0x208] sm:$0xf]
        %v2481 = vld [vmem:[%s9 + $0x230] sm:$0xff]
        %v2482 = vld [vmem:[%s9 + $0x238] sm:$0xff]
        %v2483 = vld [vmem:[%s9 + $0x240] sm:$0xf]
        %v2484 = vld [vmem:[%s9 + $0x268] sm:$0xff]
        %v2485 = vld [vmem:[%s9 + $0x270] sm:$0xff]
        %v2486 = vld [vmem:[%s9 + $0x278] sm:$0xf]
        %v2487 = vld [vmem:[%s9 + $0x2a0] sm:$0xff]
        %v2488 = vld [vmem:[%s9 + $0x2a8] sm:$0xff]
        %v2489 = vld [vmem:[%s9 + $0x2b0] sm:$0xf]
        %v2490 = vld [vmem:[%s9 + $0x2d8] sm:$0xff]
        %v2491 = vld [vmem:[%s9 + $0x2e0] sm:$0xff]
        %v2492 = vld [vmem:[%s9 + $0x2e8] sm:$0xf]
        %v2493 = vld [vmem:[%s9 + $0x310] sm:$0xff]
        %v2494 = vld [vmem:[%s9 + $0x318] sm:$0xff]
        %v2495 = vld [vmem:[%s9 + $0x320] sm:$0xf]
        %v2496 = vld [vmem:[%s9 + $0x348] sm:$0xff]
        %v2497 = vld [vmem:[%s9 + $0x350] sm:$0xff]
        %v2498 = vld [vmem:[%s9 + $0x358] sm:$0xf]
        %v2547 = vunpack.c.l.b16 %v2451
        %v2548 = vunpack.c.h.b16 %v2451
        %v2549 = vunpack.c.l.b16 %v2452
        %v2550 = vunpack.c.h.b16 %v2452
        %v2551 = vunpack.c.l.b16 %v2453
        %v2552 = vunpack.c.l.b16 %v2454
        %v2553 = vunpack.c.h.b16 %v2454
        %v2554 = vunpack.c.l.b16 %v2455
        %v2555 = vunpack.c.h.b16 %v2455
        %v2556 = vunpack.c.l.b16 %v2456
        %v2557 = vunpack.c.l.b16 %v2457
        %v2558 = vunpack.c.h.b16 %v2457
        %v2559 = vunpack.c.l.b16 %v2458
        %v2560 = vunpack.c.h.b16 %v2458
        %v2561 = vunpack.c.l.b16 %v2459
        %v2562 = vunpack.c.l.b16 %v2460
        %v2563 = vunpack.c.h.b16 %v2460
        %v2564 = vunpack.c.l.b16 %v2461
        %v2565 = vunpack.c.h.b16 %v2461
        %v2566 = vunpack.c.l.b16 %v2462
        %v2567 = vunpack.c.l.b16 %v2463
        %v2568 = vunpack.c.h.b16 %v2463
        %v2569 = vunpack.c.l.b16 %v2464
        %v2570 = vunpack.c.h.b16 %v2464
        %v2571 = vunpack.c.l.b16 %v2465
        %v2572 = vunpack.c.l.b16 %v2466
        %v2573 = vunpack.c.h.b16 %v2466
        %v2574 = vunpack.c.l.b16 %v2467
        %v2575 = vunpack.c.h.b16 %v2467
        %v2576 = vunpack.c.l.b16 %v2468
        %v2577 = vunpack.c.l.b16 %v2469
        %v2578 = vunpack.c.h.b16 %v2469
        %v2579 = vunpack.c.l.b16 %v2470
        %v2580 = vunpack.c.h.b16 %v2470
        %v2581 = vunpack.c.l.b16 %v2471
        %v2582 = vunpack.c.l.b16 %v2472
        %v2583 = vunpack.c.h.b16 %v2472
        %v2584 = vunpack.c.l.b16 %v2473
        %v2585 = vunpack.c.h.b16 %v2473
        %v2586 = vunpack.c.l.b16 %v2474
        %v2587 = vunpack.c.l.b16 %v2475
        %v2588 = vunpack.c.h.b16 %v2475
        %v2589 = vunpack.c.l.b16 %v2476
        %v2590 = vunpack.c.h.b16 %v2476
        %v2591 = vunpack.c.l.b16 %v2477
        %v2592 = vunpack.c.l.b16 %v2478
        %v2593 = vunpack.c.h.b16 %v2478
        %v2594 = vunpack.c.l.b16 %v2479
        %v2595 = vunpack.c.h.b16 %v2479
        %v2596 = vunpack.c.l.b16 %v2480
        %v2597 = vunpack.c.l.b16 %v2481
        %v2598 = vunpack.c.h.b16 %v2481
        %v2599 = vunpack.c.l.b16 %v2482
        %v2600 = vunpack.c.h.b16 %v2482
        %v2601 = vunpack.c.l.b16 %v2483
        %v2602 = vunpack.c.l.b16 %v2484
        %v2603 = vunpack.c.h.b16 %v2484
        %v2604 = vunpack.c.l.b16 %v2485
        %v2605 = vunpack.c.h.b16 %v2485
        %v2606 = vunpack.c.l.b16 %v2486
        %v2607 = vunpack.c.l.b16 %v2487
        %v2608 = vunpack.c.h.b16 %v2487
        %v2609 = vunpack.c.l.b16 %v2488
        %v2610 = vunpack.c.h.b16 %v2488
        %v2611 = vunpack.c.l.b16 %v2489
        %v2612 = vunpack.c.l.b16 %v2490
        %v2613 = vunpack.c.h.b16 %v2490
        %v2614 = vunpack.c.l.b16 %v2491
        %v2615 = vunpack.c.h.b16 %v2491
        %v2616 = vunpack.c.l.b16 %v2492
        %v2617 = vunpack.c.l.b16 %v2493
        %v2618 = vunpack.c.h.b16 %v2493
        %v2619 = vunpack.c.l.b16 %v2494
        %v2620 = vunpack.c.h.b16 %v2494
        %v2621 = vunpack.c.l.b16 %v2495
        %v2622 = vunpack.c.l.b16 %v2496
        %v2623 = vunpack.c.h.b16 %v2496
        %v2624 = vunpack.c.l.b16 %v2497
        %v2625 = vunpack.c.h.b16 %v2497
        %v2626 = vunpack.c.l.b16 %v2498
        %v2627 = vpack.c.b16 %v2552, %v2547
        %v2628 = vpack.c.b16 %v2553, %v2548
        %v2629 = vpack.c.b16 %v2554, %v2549
        %v2630 = vpack.c.b16 %v2555, %v2550
        %v2631 = vpack.c.b16 %v2556, %v2551
        %v2632 = vpack.c.b16 %v2562, %v2557
        %v2633 = vpack.c.b16 %v2563, %v2558
        %v2634 = vpack.c.b16 %v2564, %v2559
        %v2635 = vpack.c.b16 %v2565, %v2560
        %v2636 = vpack.c.b16 %v2566, %v2561
        %v2637 = vpack.c.b16 %v2572, %v2567
        %v2638 = vpack.c.b16 %v2573, %v2568
        %v2639 = vpack.c.b16 %v2574, %v2569
        %v2640 = vpack.c.b16 %v2575, %v2570
        %v2641 = vpack.c.b16 %v2576, %v2571
        %v2642 = vpack.c.b16 %v2582, %v2577
        %v2643 = vpack.c.b16 %v2583, %v2578
        %v2644 = vpack.c.b16 %v2584, %v2579
        %v2645 = vpack.c.b16 %v2585, %v2580
        %v2646 = vpack.c.b16 %v2586, %v2581
        %v2647 = vpack.c.b16 %v2592, %v2587
        %v2648 = vpack.c.b16 %v2593, %v2588
        %v2649 = vpack.c.b16 %v2594, %v2589
        %v2650 = vpack.c.b16 %v2595, %v2590
        %v2651 = vpack.c.b16 %v2596, %v2591
        %v2652 = vpack.c.b16 %v2602, %v2597
        %v2653 = vpack.c.b16 %v2603, %v2598
        %v2654 = vpack.c.b16 %v2604, %v2599
        %v2655 = vpack.c.b16 %v2605, %v2600
        %v2656 = vpack.c.b16 %v2606, %v2601
        %v2657 = vpack.c.b16 %v2612, %v2607
        %v2658 = vpack.c.b16 %v2613, %v2608
        %v2659 = vpack.c.b16 %v2614, %v2609
        %v2660 = vpack.c.b16 %v2615, %v2610
        %v2661 = vpack.c.b16 %v2616, %v2611
        %v2662 = vpack.c.b16 %v2622, %v2617
        %v2663 = vpack.c.b16 %v2623, %v2618
        %v2664 = vpack.c.b16 %v2624, %v2619
        %v2665 = vpack.c.b16 %v2625, %v2620
        %v2666 = vpack.c.b16 %v2626, %v2621
        %2707 = vmatprep.subr.bf16.mxu0 %v2628
        %2708 = vmatpush1.bf16.msra.mxu0 %v2627
        %2709 = vmatprep.subr.bf16.mxu0 %v2633
        %2710 = vmatpush1.bf16.msra.mxu0 %v2632
        %2711 = vmatprep.subr.bf16.mxu0 %v2638
        %2712 = vmatpush1.bf16.msra.mxu0 %v2637
        %2713 = vmatprep.subr.bf16.mxu0 %v2643
        %2714 = vmatpush1.bf16.msra.mxu0 %v2642
        %2715 = vmatprep.subr.bf16.mxu0 %v2648
        %2716 = vmatpush1.bf16.msra.mxu0 %v2647
        %2717 = vmatprep.subr.bf16.mxu0 %v2653
        %2718 = vmatpush1.bf16.msra.mxu0 %v2652
        %2719 = vmatprep.subr.bf16.mxu0 %v2658
        %2720 = vmatpush1.bf16.msra.mxu0 %v2657
        %2721 = vmatprep.subr.bf16.mxu0 %v2663
        %2722 = vmatpush1.bf16.msra.mxu0 %v2662
        %2723 = vmatprep.subr.bf16.mxu0 0
        %2724 = vmatpush1.bf16.msra.mxu0 0
        %2725 = vmatprep.subr.bf16.mxu0 0
        %2726 = vmatpush1.bf16.msra.mxu0 0
        %2727 = vmatprep.subr.bf16.mxu0 0
        %2728 = vmatpush1.bf16.msra.mxu0 0
        %2729 = vmatprep.subr.bf16.mxu0 0
        %2730 = vmatpush1.bf16.msra.mxu0 0
        %2731 = vmatprep.subr.bf16.mxu0 0
        %2732 = vmatpush1.bf16.msra.mxu0 0
        %2733 = vmatprep.subr.bf16.mxu0 0
        %2734 = vmatpush1.bf16.msra.mxu0 0
        %2735 = vmatprep.subr.bf16.mxu0 0
        %2736 = vmatpush1.bf16.msra.mxu0 0
        %2737 = vmatprep.subr.bf16.mxu0 0
        %2738 = vmatpush1.bf16.msra.mxu0 0
        %2739 = vmatprep.mubr.bf16.mxu0 0
        %2740 = vmatmul.mubr.bf16.gmra.mrb[0].mxu0 %v2450
        %v2741 = vpop.f32.mrb[0].mxu0
        %v2742 = vadd.f32 0.0, %v2741
        %v2743 = vpop.f32.mrb[0].mxu0
        %v2744 = vadd.f32 0.0, %v2743
        %v2745 = vpop.f32.mrb[0].mxu0
        %v2746 = vadd.f32 0.0, %v2745
        %v2747 = vpop.f32.mrb[0].mxu0
        %v2748 = vadd.f32 0.0, %v2747
        %2749 = vdwg.mxu0
        %2750 = vmatprep.subr.bf16.mxu0 %v2630
        %2751 = vmatpush1.bf16.msra.mxu0 %v2629
        %2752 = vmatprep.subr.bf16.mxu0 %v2635
        %2753 = vmatpush1.bf16.msra.mxu0 %v2634
        %2754 = vmatprep.subr.bf16.mxu0 %v2640
        %2755 = vmatpush1.bf16.msra.mxu0 %v2639
        %2756 = vmatprep.subr.bf16.mxu0 %v2645
        %2757 = vmatpush1.bf16.msra.mxu0 %v2644
        %2758 = vmatprep.subr.bf16.mxu0 %v2650
        %2759 = vmatpush1.bf16.msra.mxu0 %v2649
        %2760 = vmatprep.subr.bf16.mxu0 %v2655
        %2761 = vmatpush1.bf16.msra.mxu0 %v2654
        %2762 = vmatprep.subr.bf16.mxu0 %v2660
        %2763 = vmatpush1.bf16.msra.mxu0 %v2659
        %2764 = vmatprep.subr.bf16.mxu0 %v2665
        %2765 = vmatpush1.bf16.msra.mxu0 %v2664
        %2766 = vmatprep.subr.bf16.mxu0 0
        %2767 = vmatpush1.bf16.msra.mxu0 0
        %2768 = vmatprep.subr.bf16.mxu0 0
        %2769 = vmatpush1.bf16.msra.mxu0 0
        %2770 = vmatprep.subr.bf16.mxu0 0
        %2771 = vmatpush1.bf16.msra.mxu0 0
        %2772 = vmatprep.subr.bf16.mxu0 0
        %2773 = vmatpush1.bf16.msra.mxu0 0
        %2774 = vmatprep.subr.bf16.mxu0 0
        %2775 = vmatpush1.bf16.msra.mxu0 0
        %2776 = vmatprep.subr.bf16.mxu0 0
        %2777 = vmatpush1.bf16.msra.mxu0 0
        %2778 = vmatprep.subr.bf16.mxu0 0
        %2779 = vmatpush1.bf16.msra.mxu0 0
        %2780 = vmatprep.subr.bf16.mxu0 0
        %2781 = vmatpush1.bf16.msra.mxu0 0
        %2782 = vmatprep.mubr.bf16.mxu0 0
        %2783 = vmatmul.mubr.bf16.gmra.mrb[0].mxu0 %v2450
        %v2784 = vpop.f32.mrb[0].mxu0
        %v2785 = vadd.f32 0.0, %v2784
        %v2786 = vpop.f32.mrb[0].mxu0
        %v2787 = vadd.f32 0.0, %v2786
        %v2788 = vpop.f32.mrb[0].mxu0
        %v2789 = vadd.f32 0.0, %v2788
        %v2790 = vpop.f32.mrb[0].mxu0
        %v2791 = vadd.f32 0.0, %v2790
        %2792 = vdwg.mxu0
        %2793 = vmatprep.subr.bf16.mxu0 0
        %2794 = vmatpush1.bf16.msra.mxu0 %v2631
        %2795 = vmatprep.subr.bf16.mxu0 0
        %2796 = vmatpush1.bf16.msra.mxu0 %v2636
        %2797 = vmatprep.subr.bf16.mxu0 0
        %2798 = vmatpush1.bf16.msra.mxu0 %v2641
        %2799 = vmatprep.subr.bf16.mxu0 0
        %2800 = vmatpush1.bf16.msra.mxu0 %v2646
        %2801 = vmatprep.subr.bf16.mxu0 0
        %2802 = vmatpush1.bf16.msra.mxu0 %v2651
        %2803 = vmatprep.subr.bf16.mxu0 0
        %2804 = vmatpush1.bf16.msra.mxu0 %v2656
        %2805 = vmatprep.subr.bf16.mxu0 0
        %2806 = vmatpush1.bf16.msra.mxu0 %v2661
        %2807 = vmatprep.subr.bf16.mxu0 0
        %2808 = vmatpush1.bf16.msra.mxu0 %v2666
        %2809 = vmatprep.subr.bf16.mxu0 0
        %2810 = vmatpush1.bf16.msra.mxu0 0
        %2811 = vmatprep.subr.bf16.mxu0 0
        %2812 = vmatpush1.bf16.msra.mxu0 0
        %2813 = vmatprep.subr.bf16.mxu0 0
        %2814 = vmatpush1.bf16.msra.mxu0 0
        %2815 = vmatprep.subr.bf16.mxu0 0
        %2816 = vmatpush1.bf16.msra.mxu0 0
        %2817 = vmatprep.subr.bf16.mxu0 0
        %2818 = vmatpush1.bf16.msra.mxu0 0
        %2819 = vmatprep.subr.bf16.mxu0 0
        %2820 = vmatpush1.bf16.msra.mxu0 0
        %2821 = vmatprep.subr.bf16.mxu0 0
        %2822 = vmatpush1.bf16.msra.mxu0 0
        %2823 = vmatprep.subr.bf16.mxu0 0
        %2824 = vmatpush1.bf16.msra.mxu0 0
        %2825 = vmatprep.mubr.bf16.mxu0 0
        %2826 = vmatmul.mubr.bf16.gmra.mrb[0].mxu0 %v2450
        %v2827 = vpop.f32.mrb[0].mxu0
        %v2828 = vadd.f32 0.0, %v2827
        %v2829 = vpop.f32.mrb[0].mxu0
        %v2830 = vpop.f32.mrb[0].mxu0
        %v2831 = vadd.f32 0.0, %v2830
        %v2832 = vpop.f32.mrb[0].mxu0
        %2833 = vdwg.mxu0
        %v2834 = vld [vmem:[%s4] sm:$0xff]
        %v2835 = vld [vmem:[%s4 + $0x8] sm:$0xff]
        %v2836 = vld [vmem:[%s4 + $0x10] sm:$0xff]
        %v2837 = vld [vmem:[%s4 + $0x18] sm:$0xff]
        %v2838 = vmul.f32 %v2742, %v2834
        %v2839 = vmul.f32 %v2746, %v2835
        %v2840 = vmul.f32 %v2787, %v2836
        %v2841 = vmul.f32 %v2791, %v2837
        %v2842 = vadd.f32 %v2838, %v2840
        %v2843 = vadd.f32 %v2839, %v2841
        %v2844 = vmul.f32 %v2744, %v2834
        %v2845 = vmul.f32 %v2748, %v2835
        %v2846 = vmul.f32 %v2828, %v2836
        %v2847 = vmul.f32 %v2831, %v2837
        %v2848 = vadd.f32 %v2844, %v2846
        %v2849 = vadd.f32 %v2845, %v2847
        %vm2850 = vcmp.le.s32.totalorder %v914, %v2302
        %vm2851 = vcmp.le.s32.totalorder %v914, %v2420
        %v2852 = vld [vmem:[%s475] sm:$0x1]
        %vm2853 = vcmp.gt.f32.partialorder %v2852, 0.5
        %v2854 = vsel %vm2853, 1, 0
        %v2855 = vlaneseq
        %v2856 = vshrl.u32 %v2855, 7
        %v2857 = vsub.s32 0, %v2856
        %v2858 = vrot.slane %v2854, %v2857
        %vm2859 = vcmp.eq.s32.totalorder %v2858, 1
        %vm2860 = vmand %vm2850, %vm2859
        %vm2861 = vmand %vm2851, %vm2859
        %v2862 = vsel %vm2860, 0.0, -1e+30
        %v2863 = vsel %vm2861, 0.0, -1e+30
        %v2864 = vpack.c.bf16 %v2843, %v2842
        %v2865 = vpack.c.bf16 %v2849, %v2848
        %v2867 = vsel %vm920, %v2864, 0
        %v2870 = vsel %vm920, %v2865, 0
        %2872 = vmatprep.subr.bf16.mxu0 0
        %2873 = vmatpush1.bf16.xpose.msra.mxu0 %v2870
        %2874 = vmatprep.subr.bf16.mxu0 0
        %2875 = vmatpush1.bf16.xpose.msra.mxu0 0
        %2876 = vmatprep.subr.bf16.mxu0 0
        %2877 = vmatpush1.bf16.xpose.msra.mxu0 0
        %2878 = vmatprep.subr.bf16.mxu0 0
        %2879 = vmatpush1.bf16.xpose.msra.mxu0 0
        %2880 = vmatprep.subr.bf16.mxu0 0
        %2881 = vmatpush1.bf16.xpose.msra.mxu0 0
        %2882 = vmatprep.subr.bf16.mxu0 0
        %2883 = vmatpush1.bf16.xpose.msra.mxu0 0
        %2884 = vmatprep.subr.bf16.mxu0 0
        %2885 = vmatpush1.bf16.xpose.msra.mxu0 0
        %2886 = vmatprep.subr.bf16.mxu0 0
        %2887 = vmatpush1.bf16.xpose.msra.mxu0 0
        %2888 = vmatprep.subr.bf16.mxu0 0
        %2889 = vmatpush1.bf16.xpose.msra.mxu0 0
        %2890 = vmatprep.subr.bf16.mxu0 0
        %2891 = vmatpush1.bf16.xpose.msra.mxu0 0
        %2892 = vmatprep.subr.bf16.mxu0 0
        %2893 = vmatpush1.bf16.xpose.msra.mxu0 0
        %2894 = vmatprep.subr.bf16.mxu0 0
        %2895 = vmatpush1.bf16.xpose.msra.mxu0 0
        %2896 = vmatprep.subr.bf16.mxu0 0
        %2897 = vmatpush1.bf16.xpose.msra.mxu0 0
        %2898 = vmatprep.subr.bf16.mxu0 0
        %2899 = vmatpush1.bf16.xpose.msra.mxu0 0
        %2900 = vmatprep.subr.bf16.mxu0 0
        %2901 = vmatpush1.bf16.xpose.msra.mxu0 0
        %2902 = vmatprep.subr.bf16.mxu0 0
        %2903 = vmatpush1.bf16.xpose.msra.mxu0 0
        %2904 = vmatprep.mubr.bf16.mxu0 0
        %2905 = vmatmul.mubr.bf16.gmra.mrb[0].mxu0 %v2867
        %v2906 = vpop.f32.mrb[0].mxu0
        %v2907 = vadd.f32 0.0, %v2906
        %v2908 = vpop.f32.mrb[0].mxu0
        %v2909 = vpop.f32.mrb[0].mxu0
        %v2910 = vadd.f32 0.0, %v2909
        %v2911 = vpop.f32.mrb[0].mxu0
        %2912 = vdwg.mxu0
        %v2913 = vmul.f32 %v2907, 0.17677669
        %v2914 = vmul.f32 %v2910, 0.17677669
        %v2915 = vadd.f32 %v2913, %v2862
        %v2916 = vadd.f32 %v2914, %v2863
        %vm2917 = vcmask 130048
        %v2918 = vsel %vm2917, %v2915, -inf
        %2919 = vmax.xlane.f32.xlu0 %v2918
        %v2920 = vpop.xlane.xlu0 %2919
        %v2921 = vsel %vm2917, %v2916, -inf
        %2922 = vmax.xlane.f32.xlu0 %v2921
        %v2923 = vpop.xlane.xlu0 %2922
        %v2924 = vsub.f32 %v2915, %v2920
        %v2925 = vsub.f32 %v2916, %v2923
        %v2926 = vmul.f32 %v2924, 1.442695
        %v2927 = vpow.pop %v2926
        %v2928 = vmul.f32 %v2925, 1.442695
        %v2929 = vpow.pop %v2928
        %v2930 = vsel %vm2917, %v2927, 0.0
        %2931 = vadd.xlane.f32.xlu0 %v2930
        %v2932 = vpop.xlane.xlu0 %2931
        %v2933 = vsel %vm2917, %v2929, 0.0
        %2934 = vadd.xlane.f32.xlu0 %v2933
        %v2935 = vpop.xlane.xlu0 %2934
        %v2936 = vrcp.pop %v2932
        %v2937 = vrcp.pop %v2935
        %v2938 = vmul.f32 %v2927, %v2936
        %v2939 = vmul.f32 %v2929, %v2937
        %v2940 = vpack.c.bf16 %v2939, %v2938
        %v2941 = vpack.c.bf16 %v2789, %v2785
        %v2943 = vsel %vm2917, %v2940, 0
        %2945 = vmatprep.subr.bf16.mxu0 0
        %2946 = vmatpush1.bf16.msra.mxu0 %v2941
        %2947 = vmatprep.subr.bf16.mxu0 0
        %2948 = vmatpush1.bf16.msra.mxu0 0
        %2949 = vmatprep.subr.bf16.mxu0 0
        %2950 = vmatpush1.bf16.msra.mxu0 0
        %2951 = vmatprep.subr.bf16.mxu0 0
        %2952 = vmatpush1.bf16.msra.mxu0 0
        %2953 = vmatprep.subr.bf16.mxu0 0
        %2954 = vmatpush1.bf16.msra.mxu0 0
        %2955 = vmatprep.subr.bf16.mxu0 0
        %2956 = vmatpush1.bf16.msra.mxu0 0
        %2957 = vmatprep.subr.bf16.mxu0 0
        %2958 = vmatpush1.bf16.msra.mxu0 0
        %2959 = vmatprep.subr.bf16.mxu0 0
        %2960 = vmatpush1.bf16.msra.mxu0 0
        %2961 = vmatprep.subr.bf16.mxu0 0
        %2962 = vmatpush1.bf16.msra.mxu0 0
        %2963 = vmatprep.subr.bf16.mxu0 0
        %2964 = vmatpush1.bf16.msra.mxu0 0
        %2965 = vmatprep.subr.bf16.mxu0 0
        %2966 = vmatpush1.bf16.msra.mxu0 0
        %2967 = vmatprep.subr.bf16.mxu0 0
        %2968 = vmatpush1.bf16.msra.mxu0 0
        %2969 = vmatprep.subr.bf16.mxu0 0
        %2970 = vmatpush1.bf16.msra.mxu0 0
        %2971 = vmatprep.subr.bf16.mxu0 0
        %2972 = vmatpush1.bf16.msra.mxu0 0
        %2973 = vmatprep.subr.bf16.mxu0 0
        %2974 = vmatpush1.bf16.msra.mxu0 0
        %2975 = vmatprep.subr.bf16.mxu0 0
        %2976 = vmatpush1.bf16.msra.mxu0 0
        %2977 = vmatprep.mubr.bf16.mxu0 0
        %2978 = vmatmul.mubr.bf16.gmra.mrb[0].mxu0 %v2943
        %v2979 = vpop.f32.mrb[0].mxu0
        %v2980 = vadd.f32 0.0, %v2979
        %v2981 = vpop.f32.mrb[0].mxu0
        %v2982 = vpop.f32.mrb[0].mxu0
        %v2983 = vadd.f32 0.0, %v2982
        %v2984 = vpop.f32.mrb[0].mxu0
        %2985 = vdwg.mxu0
        %v2986 = vpack.c.bf16 %v2983, %v2980
        %v2987 = vld [vmem:[%s9 + $0x14] sm:$0xf]
        %v2988 = vld [vmem:[%s9 + $0x4c] sm:$0xf]
        %v2989 = vld [vmem:[%s9 + $0x84] sm:$0xf]
        %v2990 = vld [vmem:[%s9 + $0xbc] sm:$0xf]
        %2992 = vrot.lane.b32.xlu0 %v2864, 96
        %v2993 = vpop.permute.xlu0 %2992
        %2995 = vrot.lane.b32.xlu0 %v2865, 96
        %v2996 = vpop.permute.xlu0 %2995
        %v2998 = vsel %vm920, %v2993, 0
        %v3001 = vsel %vm920, %v2996, 0
        %3003 = vmatprep.subr.bf16.mxu0 0
        %3004 = vmatpush1.bf16.xpose.msra.mxu0 %v3001
        %3005 = vmatprep.subr.bf16.mxu0 0
        %3006 = vmatpush1.bf16.xpose.msra.mxu0 0
        %3007 = vmatprep.subr.bf16.mxu0 0
        %3008 = vmatpush1.bf16.xpose.msra.mxu0 0
        %3009 = vmatprep.subr.bf16.mxu0 0
        %3010 = vmatpush1.bf16.xpose.msra.mxu0 0
        %3011 = vmatprep.subr.bf16.mxu0 0
        %3012 = vmatpush1.bf16.xpose.msra.mxu0 0
        %3013 = vmatprep.subr.bf16.mxu0 0
        %3014 = vmatpush1.bf16.xpose.msra.mxu0 0
        %3015 = vmatprep.subr.bf16.mxu0 0
        %3016 = vmatpush1.bf16.xpose.msra.mxu0 0
        %3017 = vmatprep.subr.bf16.mxu0 0
        %3018 = vmatpush1.bf16.xpose.msra.mxu0 0
        %3019 = vmatprep.subr.bf16.mxu0 0
        %3020 = vmatpush1.bf16.xpose.msra.mxu0 0
        %3021 = vmatprep.subr.bf16.mxu0 0
        %3022 = vmatpush1.bf16.xpose.msra.mxu0 0
        %3023 = vmatprep.subr.bf16.mxu0 0
        %3024 = vmatpush1.bf16.xpose.msra.mxu0 0
        %3025 = vmatprep.subr.bf16.mxu0 0
        %3026 = vmatpush1.bf16.xpose.msra.mxu0 0
        %3027 = vmatprep.subr.bf16.mxu0 0
        %3028 = vmatpush1.bf16.xpose.msra.mxu0 0
        %3029 = vmatprep.subr.bf16.mxu0 0
        %3030 = vmatpush1.bf16.xpose.msra.mxu0 0
        %3031 = vmatprep.subr.bf16.mxu0 0
        %3032 = vmatpush1.bf16.xpose.msra.mxu0 0
        %3033 = vmatprep.subr.bf16.mxu0 0
        %3034 = vmatpush1.bf16.xpose.msra.mxu0 0
        %3035 = vmatprep.mubr.bf16.mxu0 0
        %3036 = vmatmul.mubr.bf16.gmra.mrb[0].mxu0 %v2998
        %v3037 = vpop.f32.mrb[0].mxu0
        %v3038 = vadd.f32 0.0, %v3037
        %v3039 = vpop.f32.mrb[0].mxu0
        %v3040 = vpop.f32.mrb[0].mxu0
        %v3041 = vadd.f32 0.0, %v3040
        %v3042 = vpop.f32.mrb[0].mxu0
        %3043 = vdwg.mxu0
        %v3044 = vmul.f32 %v3038, 0.17677669
        %v3045 = vmul.f32 %v3041, 0.17677669
        %v3046 = vadd.f32 %v3044, %v2862
        %v3047 = vadd.f32 %v3045, %v2863
        %v3048 = vsel %vm2917, %v3046, -inf
        %3049 = vmax.xlane.f32.xlu0 %v3048
        %v3050 = vpop.xlane.xlu0 %3049
        %v3051 = vsel %vm2917, %v3047, -inf
        %3052 = vmax.xlane.f32.xlu0 %v3051
        %v3053 = vpop.xlane.xlu0 %3052
        %v3054 = vsub.f32 %v3046, %v3050
        %v3055 = vsub.f32 %v3047, %v3053
        %v3056 = vmul.f32 %v3054, 1.442695
        %v3057 = vpow.pop %v3056
        %v3058 = vmul.f32 %v3055, 1.442695
        %v3059 = vpow.pop %v3058
        %v3060 = vsel %vm2917, %v3057, 0.0
        %3061 = vadd.xlane.f32.xlu0 %v3060
        %v3062 = vpop.xlane.xlu0 %3061
        %v3063 = vsel %vm2917, %v3059, 0.0
        %3064 = vadd.xlane.f32.xlu0 %v3063
        %v3065 = vpop.xlane.xlu0 %3064
        %v3066 = vrcp.pop %v3062
        %v3067 = vrcp.pop %v3065
        %v3068 = vmul.f32 %v3057, %v3066
        %v3069 = vmul.f32 %v3059, %v3067
        %v3070 = vpack.c.bf16 %v3069, %v3068
        %3072 = vrot.lane.b32.xlu0 %v2941, 96
        %v3073 = vpop.permute.xlu0 %3072
        %v3076 = vsel %vm2917, %v3070, 0
        %3078 = vmatprep.subr.bf16.mxu0 0
        %3079 = vmatpush1.bf16.msra.mxu0 %v3073
        %3080 = vmatprep.subr.bf16.mxu0 0
        %3081 = vmatpush1.bf16.msra.mxu0 0
        %3082 = vmatprep.subr.bf16.mxu0 0
        %3083 = vmatpush1.bf16.msra.mxu0 0
        %3084 = vmatprep.subr.bf16.mxu0 0
        %3085 = vmatpush1.bf16.msra.mxu0 0
        %3086 = vmatprep.subr.bf16.mxu0 0
        %3087 = vmatpush1.bf16.msra.mxu0 0
        %3088 = vmatprep.subr.bf16.mxu0 0
        %3089 = vmatpush1.bf16.msra.mxu0 0
        %3090 = vmatprep.subr.bf16.mxu0 0
        %3091 = vmatpush1.bf16.msra.mxu0 0
        %3092 = vmatprep.subr.bf16.mxu0 0
        %3093 = vmatpush1.bf16.msra.mxu0 0
        %3094 = vmatprep.subr.bf16.mxu0 0
        %3095 = vmatpush1.bf16.msra.mxu0 0
        %3096 = vmatprep.subr.bf16.mxu0 0
        %3097 = vmatpush1.bf16.msra.mxu0 0
        %3098 = vmatprep.subr.bf16.mxu0 0
        %3099 = vmatpush1.bf16.msra.mxu0 0
        %3100 = vmatprep.subr.bf16.mxu0 0
        %3101 = vmatpush1.bf16.msra.mxu0 0
        %3102 = vmatprep.subr.bf16.mxu0 0
        %3103 = vmatpush1.bf16.msra.mxu0 0
        %3104 = vmatprep.subr.bf16.mxu0 0
        %3105 = vmatpush1.bf16.msra.mxu0 0
        %3106 = vmatprep.subr.bf16.mxu0 0
        %3107 = vmatpush1.bf16.msra.mxu0 0
        %3108 = vmatprep.subr.bf16.mxu0 0
        %3109 = vmatpush1.bf16.msra.mxu0 0
        %3110 = vmatprep.mubr.bf16.mxu0 0
        %3111 = vmatmul.mubr.bf16.gmra.mrb[0].mxu0 %v3076
        %v3112 = vpop.f32.mrb[0].mxu0
        %v3113 = vadd.f32 0.0, %v3112
        %v3114 = vpop.f32.mrb[0].mxu0
        %v3115 = vpop.f32.mrb[0].mxu0
        %v3116 = vadd.f32 0.0, %v3115
        %v3117 = vpop.f32.mrb[0].mxu0
        %3118 = vdwg.mxu0
        %v3119 = vpack.c.bf16 %v3116, %v3113
        %v3120 = vld [vmem:[%s9 + $0xf4] sm:$0xf]
        %v3121 = vld [vmem:[%s9 + $0x12c] sm:$0xf]
        %v3122 = vld [vmem:[%s9 + $0x164] sm:$0xf]
        %v3123 = vld [vmem:[%s9 + $0x19c] sm:$0xf]
        %v3128 = vunpack.c.l.b16 %v3120
        %v3129 = vunpack.c.l.b16 %v3121
        %v3130 = vunpack.c.l.b16 %v3122
        %v3131 = vunpack.c.l.b16 %v3123
        %v3132 = vpack.c.b16 %v3129, %v3128
        %v3133 = vpack.c.b16 %v3131, %v3130
        %v3137 = vsel %vm920, %v3119, 0
        %3139 = vmatprep.subr.bf16.mxu0 0
        %3140 = vmatpush1.bf16.msra.mxu0 %v3132
        %3141 = vmatprep.subr.bf16.mxu0 0
        %3142 = vmatpush1.bf16.msra.mxu0 %v3133
        %3143 = vmatprep.subr.bf16.mxu0 0
        %3144 = vmatpush1.bf16.msra.mxu0 0
        %3145 = vmatprep.subr.bf16.mxu0 0
        %3146 = vmatpush1.bf16.msra.mxu0 0
        %3147 = vmatprep.subr.bf16.mxu0 0
        %3148 = vmatpush1.bf16.msra.mxu0 0
        %3149 = vmatprep.subr.bf16.mxu0 0
        %3150 = vmatpush1.bf16.msra.mxu0 0
        %3151 = vmatprep.subr.bf16.mxu0 0
        %3152 = vmatpush1.bf16.msra.mxu0 0
        %3153 = vmatprep.subr.bf16.mxu0 0
        %3154 = vmatpush1.bf16.msra.mxu0 0
        %3155 = vmatprep.subr.bf16.mxu0 0
        %3156 = vmatpush1.bf16.msra.mxu0 0
        %3157 = vmatprep.subr.bf16.mxu0 0
        %3158 = vmatpush1.bf16.msra.mxu0 0
        %3159 = vmatprep.subr.bf16.mxu0 0
        %3160 = vmatpush1.bf16.msra.mxu0 0
        %3161 = vmatprep.subr.bf16.mxu0 0
        %3162 = vmatpush1.bf16.msra.mxu0 0
        %3163 = vmatprep.subr.bf16.mxu0 0
        %3164 = vmatpush1.bf16.msra.mxu0 0
        %3165 = vmatprep.subr.bf16.mxu0 0
        %3166 = vmatpush1.bf16.msra.mxu0 0
        %3167 = vmatprep.subr.bf16.mxu0 0
        %3168 = vmatpush1.bf16.msra.mxu0 0
        %3169 = vmatprep.subr.bf16.mxu0 0
        %3170 = vmatpush1.bf16.msra.mxu0 0
        %3171 = vmatprep.mubr.bf16.mxu0 0
        %3172 = vmatmul.mubr.bf16.gmra.mrb[0].mxu0 %v3137
        %v3173 = vpop.f32.mrb[0].mxu0
        %v3174 = vadd.f32 0.0, %v3173
        %v3175 = vpop.f32.mrb[0].mxu0
        %v3176 = vpop.f32.mrb[0].mxu0
        %v3177 = vadd.f32 0.0, %v3176
        %v3178 = vpop.f32.mrb[0].mxu0
        %3179 = vdwg.mxu0
        %v3184 = vunpack.c.l.b16 %v2987
        %v3185 = vunpack.c.l.b16 %v2988
        %v3186 = vunpack.c.l.b16 %v2989
        %v3187 = vunpack.c.l.b16 %v2990
        %v3188 = vpack.c.b16 %v3185, %v3184
        %v3189 = vpack.c.b16 %v3187, %v3186
        %v3193 = vsel %vm920, %v2986, 0
        %3195 = vmatprep.subr.bf16.mxu0 0
        %3196 = vmatpush1.bf16.msra.mxu0 %v3188
        %3197 = vmatprep.subr.bf16.mxu0 0
        %3198 = vmatpush1.bf16.msra.mxu0 %v3189
        %3199 = vmatprep.subr.bf16.mxu0 0
        %3200 = vmatpush1.bf16.msra.mxu0 0
        %3201 = vmatprep.subr.bf16.mxu0 0
        %3202 = vmatpush1.bf16.msra.mxu0 0
        %3203 = vmatprep.subr.bf16.mxu0 0
        %3204 = vmatpush1.bf16.msra.mxu0 0
        %3205 = vmatprep.subr.bf16.mxu0 0
        %3206 = vmatpush1.bf16.msra.mxu0 0
        %3207 = vmatprep.subr.bf16.mxu0 0
        %3208 = vmatpush1.bf16.msra.mxu0 0
        %3209 = vmatprep.subr.bf16.mxu0 0
        %3210 = vmatpush1.bf16.msra.mxu0 0
        %3211 = vmatprep.subr.bf16.mxu0 0
        %3212 = vmatpush1.bf16.msra.mxu0 0
        %3213 = vmatprep.subr.bf16.mxu0 0
        %3214 = vmatpush1.bf16.msra.mxu0 0
        %3215 = vmatprep.subr.bf16.mxu0 0
        %3216 = vmatpush1.bf16.msra.mxu0 0
        %3217 = vmatprep.subr.bf16.mxu0 0
        %3218 = vmatpush1.bf16.msra.mxu0 0
        %3219 = vmatprep.subr.bf16.mxu0 0
        %3220 = vmatpush1.bf16.msra.mxu0 0
        %3221 = vmatprep.subr.bf16.mxu0 0
        %3222 = vmatpush1.bf16.msra.mxu0 0
        %3223 = vmatprep.subr.bf16.mxu0 0
        %3224 = vmatpush1.bf16.msra.mxu0 0
        %3225 = vmatprep.subr.bf16.mxu0 0
        %3226 = vmatpush1.bf16.msra.mxu0 0
        %3227 = vmatprep.mubr.bf16.mxu0 0
        %3228 = vmatmul.mubr.bf16.gmra.mrb[0].mxu0 %v3193
        %v3229 = vpop.f32.mrb[0].mxu0
        %v3230 = vadd.f32 %v3174, %v3229
        %v3231 = vpop.f32.mrb[0].mxu0
        %v3232 = vpop.f32.mrb[0].mxu0
        %v3233 = vadd.f32 %v3177, %v3232
        %v3234 = vpop.f32.mrb[0].mxu0
        %3235 = vdwg.mxu0
        %3236 = vrot.lane.b32.xlu0 %v2864, 64
        %v3237 = vpop.permute.xlu0 %3236
        %3238 = vrot.lane.b32.xlu0 %v2865, 64
        %v3239 = vpop.permute.xlu0 %3238
        %v3241 = vsel %vm920, %v3237, 0
        %v3244 = vsel %vm920, %v3239, 0
        %3246 = vmatprep.subr.bf16.mxu0 0
        %3247 = vmatpush1.bf16.xpose.msra.mxu0 %v3244
        %3248 = vmatprep.subr.bf16.mxu0 0
        %3249 = vmatpush1.bf16.xpose.msra.mxu0 0
        %3250 = vmatprep.subr.bf16.mxu0 0
        %3251 = vmatpush1.bf16.xpose.msra.mxu0 0
        %3252 = vmatprep.subr.bf16.mxu0 0
        %3253 = vmatpush1.bf16.xpose.msra.mxu0 0
        %3254 = vmatprep.subr.bf16.mxu0 0
        %3255 = vmatpush1.bf16.xpose.msra.mxu0 0
        %3256 = vmatprep.subr.bf16.mxu0 0
        %3257 = vmatpush1.bf16.xpose.msra.mxu0 0
        %3258 = vmatprep.subr.bf16.mxu0 0
        %3259 = vmatpush1.bf16.xpose.msra.mxu0 0
        %3260 = vmatprep.subr.bf16.mxu0 0
        %3261 = vmatpush1.bf16.xpose.msra.mxu0 0
        %3262 = vmatprep.subr.bf16.mxu0 0
        %3263 = vmatpush1.bf16.xpose.msra.mxu0 0
        %3264 = vmatprep.subr.bf16.mxu0 0
        %3265 = vmatpush1.bf16.xpose.msra.mxu0 0
        %3266 = vmatprep.subr.bf16.mxu0 0
        %3267 = vmatpush1.bf16.xpose.msra.mxu0 0
        %3268 = vmatprep.subr.bf16.mxu0 0
        %3269 = vmatpush1.bf16.xpose.msra.mxu0 0
        %3270 = vmatprep.subr.bf16.mxu0 0
        %3271 = vmatpush1.bf16.xpose.msra.mxu0 0
        %3272 = vmatprep.subr.bf16.mxu0 0
        %3273 = vmatpush1.bf16.xpose.msra.mxu0 0
        %3274 = vmatprep.subr.bf16.mxu0 0
        %3275 = vmatpush1.bf16.xpose.msra.mxu0 0
        %3276 = vmatprep.subr.bf16.mxu0 0
        %3277 = vmatpush1.bf16.xpose.msra.mxu0 0
        %3278 = vmatprep.mubr.bf16.mxu0 0
        %3279 = vmatmul.mubr.bf16.gmra.mrb[0].mxu0 %v3241
        %v3280 = vpop.f32.mrb[0].mxu0
        %v3281 = vadd.f32 0.0, %v3280
        %v3282 = vpop.f32.mrb[0].mxu0
        %v3283 = vpop.f32.mrb[0].mxu0
        %v3284 = vadd.f32 0.0, %v3283
        %v3285 = vpop.f32.mrb[0].mxu0
        %3286 = vdwg.mxu0
        %v3287 = vmul.f32 %v3281, 0.17677669
        %v3288 = vmul.f32 %v3284, 0.17677669
        %v3289 = vadd.f32 %v3287, %v2862
        %v3290 = vadd.f32 %v3288, %v2863
        %v3291 = vsel %vm2917, %v3289, -inf
        %3292 = vmax.xlane.f32.xlu0 %v3291
        %v3293 = vpop.xlane.xlu0 %3292
        %v3294 = vsel %vm2917, %v3290, -inf
        %3295 = vmax.xlane.f32.xlu0 %v3294
        %v3296 = vpop.xlane.xlu0 %3295
        %v3297 = vsub.f32 %v3289, %v3293
        %v3298 = vsub.f32 %v3290, %v3296
        %v3299 = vmul.f32 %v3297, 1.442695
        %v3300 = vpow.pop %v3299
        %v3301 = vmul.f32 %v3298, 1.442695
        %v3302 = vpow.pop %v3301
        %v3303 = vsel %vm2917, %v3300, 0.0
        %3304 = vadd.xlane.f32.xlu0 %v3303
        %v3305 = vpop.xlane.xlu0 %3304
        %v3306 = vsel %vm2917, %v3302, 0.0
        %3307 = vadd.xlane.f32.xlu0 %v3306
        %v3308 = vpop.xlane.xlu0 %3307
        %v3309 = vrcp.pop %v3305
        %v3310 = vrcp.pop %v3308
        %v3311 = vmul.f32 %v3300, %v3309
        %v3312 = vmul.f32 %v3302, %v3310
        %v3313 = vpack.c.bf16 %v3312, %v3311
        %3314 = vrot.lane.b32.xlu0 %v2941, 64
        %v3315 = vpop.permute.xlu0 %3314
        %v3318 = vsel %vm2917, %v3313, 0
        %3320 = vmatprep.subr.bf16.mxu0 0
        %3321 = vmatpush1.bf16.msra.mxu0 %v3315
        %3322 = vmatprep.subr.bf16.mxu0 0
        %3323 = vmatpush1.bf16.msra.mxu0 0
        %3324 = vmatprep.subr.bf16.mxu0 0
        %3325 = vmatpush1.bf16.msra.mxu0 0
        %3326 = vmatprep.subr.bf16.mxu0 0
        %3327 = vmatpush1.bf16.msra.mxu0 0
        %3328 = vmatprep.subr.bf16.mxu0 0
        %3329 = vmatpush1.bf16.msra.mxu0 0
        %3330 = vmatprep.subr.bf16.mxu0 0
        %3331 = vmatpush1.bf16.msra.mxu0 0
        %3332 = vmatprep.subr.bf16.mxu0 0
        %3333 = vmatpush1.bf16.msra.mxu0 0
        %3334 = vmatprep.subr.bf16.mxu0 0
        %3335 = vmatpush1.bf16.msra.mxu0 0
        %3336 = vmatprep.subr.bf16.mxu0 0
        %3337 = vmatpush1.bf16.msra.mxu0 0
        %3338 = vmatprep.subr.bf16.mxu0 0
        %3339 = vmatpush1.bf16.msra.mxu0 0
        %3340 = vmatprep.subr.bf16.mxu0 0
        %3341 = vmatpush1.bf16.msra.mxu0 0
        %3342 = vmatprep.subr.bf16.mxu0 0
        %3343 = vmatpush1.bf16.msra.mxu0 0
        %3344 = vmatprep.subr.bf16.mxu0 0
        %3345 = vmatpush1.bf16.msra.mxu0 0
        %3346 = vmatprep.subr.bf16.mxu0 0
        %3347 = vmatpush1.bf16.msra.mxu0 0
        %3348 = vmatprep.subr.bf16.mxu0 0
        %3349 = vmatpush1.bf16.msra.mxu0 0
        %3350 = vmatprep.subr.bf16.mxu0 0
        %3351 = vmatpush1.bf16.msra.mxu0 0
        %3352 = vmatprep.mubr.bf16.mxu0 0
        %3353 = vmatmul.mubr.bf16.gmra.mrb[0].mxu0 %v3318
        %v3354 = vpop.f32.mrb[0].mxu0
        %v3355 = vadd.f32 0.0, %v3354
        %v3356 = vpop.f32.mrb[0].mxu0
        %v3357 = vpop.f32.mrb[0].mxu0
        %v3358 = vadd.f32 0.0, %v3357
        %v3359 = vpop.f32.mrb[0].mxu0
        %3360 = vdwg.mxu0
        %v3361 = vpack.c.bf16 %v3358, %v3355
        %v3362 = vld [vmem:[%s9 + $0x1d4] sm:$0xf]
        %v3363 = vld [vmem:[%s9 + $0x20c] sm:$0xf]
        %v3364 = vld [vmem:[%s9 + $0x244] sm:$0xf]
        %v3365 = vld [vmem:[%s9 + $0x27c] sm:$0xf]
        %v3370 = vunpack.c.l.b16 %v3362
        %v3371 = vunpack.c.l.b16 %v3363
        %v3372 = vunpack.c.l.b16 %v3364
        %v3373 = vunpack.c.l.b16 %v3365
        %v3374 = vpack.c.b16 %v3371, %v3370
        %v3375 = vpack.c.b16 %v3373, %v3372
        %v3379 = vsel %vm920, %v3361, 0
        %3381 = vmatprep.subr.bf16.mxu0 0
        %3382 = vmatpush1.bf16.msra.mxu0 %v3374
        %3383 = vmatprep.subr.bf16.mxu0 0
        %3384 = vmatpush1.bf16.msra.mxu0 %v3375
        %3385 = vmatprep.subr.bf16.mxu0 0
        %3386 = vmatpush1.bf16.msra.mxu0 0
        %3387 = vmatprep.subr.bf16.mxu0 0
        %3388 = vmatpush1.bf16.msra.mxu0 0
        %3389 = vmatprep.subr.bf16.mxu0 0
        %3390 = vmatpush1.bf16.msra.mxu0 0
        %3391 = vmatprep.subr.bf16.mxu0 0
        %3392 = vmatpush1.bf16.msra.mxu0 0
        %3393 = vmatprep.subr.bf16.mxu0 0
        %3394 = vmatpush1.bf16.msra.mxu0 0
        %3395 = vmatprep.subr.bf16.mxu0 0
        %3396 = vmatpush1.bf16.msra.mxu0 0
        %3397 = vmatprep.subr.bf16.mxu0 0
        %3398 = vmatpush1.bf16.msra.mxu0 0
        %3399 = vmatprep.subr.bf16.mxu0 0
        %3400 = vmatpush1.bf16.msra.mxu0 0
        %3401 = vmatprep.subr.bf16.mxu0 0
        %3402 = vmatpush1.bf16.msra.mxu0 0
        %3403 = vmatprep.subr.bf16.mxu0 0
        %3404 = vmatpush1.bf16.msra.mxu0 0
        %3405 = vmatprep.subr.bf16.mxu0 0
        %3406 = vmatpush1.bf16.msra.mxu0 0
        %3407 = vmatprep.subr.bf16.mxu0 0
        %3408 = vmatpush1.bf16.msra.mxu0 0
        %3409 = vmatprep.subr.bf16.mxu0 0
        %3410 = vmatpush1.bf16.msra.mxu0 0
        %3411 = vmatprep.subr.bf16.mxu0 0
        %3412 = vmatpush1.bf16.msra.mxu0 0
        %3413 = vmatprep.mubr.bf16.mxu0 0
        %3414 = vmatmul.mubr.bf16.gmra.mrb[0].mxu0 %v3379
        %v3415 = vpop.f32.mrb[0].mxu0
        %v3416 = vadd.f32 0.0, %v3415
        %v3417 = vpop.f32.mrb[0].mxu0
        %v3418 = vpop.f32.mrb[0].mxu0
        %v3419 = vadd.f32 0.0, %v3418
        %v3420 = vpop.f32.mrb[0].mxu0
        %3421 = vdwg.mxu0
        %v3422 = vadd.f32 %v3230, %v3416
        %v3423 = vadd.f32 %v3233, %v3419
        %3424 = vrot.lane.b32.xlu0 %v2864, 32
        %v3425 = vpop.permute.xlu0 %3424
        %3426 = vrot.lane.b32.xlu0 %v2865, 32
        %v3427 = vpop.permute.xlu0 %3426
        %v3429 = vsel %vm920, %v3425, 0
        %v3432 = vsel %vm920, %v3427, 0
        %3434 = vmatprep.subr.bf16.mxu0 0
        %3435 = vmatpush1.bf16.xpose.msra.mxu0 %v3432
        %3436 = vmatprep.subr.bf16.mxu0 0
        %3437 = vmatpush1.bf16.xpose.msra.mxu0 0
        %3438 = vmatprep.subr.bf16.mxu0 0
        %3439 = vmatpush1.bf16.xpose.msra.mxu0 0
        %3440 = vmatprep.subr.bf16.mxu0 0
        %3441 = vmatpush1.bf16.xpose.msra.mxu0 0
        %3442 = vmatprep.subr.bf16.mxu0 0
        %3443 = vmatpush1.bf16.xpose.msra.mxu0 0
        %3444 = vmatprep.subr.bf16.mxu0 0
        %3445 = vmatpush1.bf16.xpose.msra.mxu0 0
        %3446 = vmatprep.subr.bf16.mxu0 0
        %3447 = vmatpush1.bf16.xpose.msra.mxu0 0
        %3448 = vmatprep.subr.bf16.mxu0 0
        %3449 = vmatpush1.bf16.xpose.msra.mxu0 0
        %3450 = vmatprep.subr.bf16.mxu0 0
        %3451 = vmatpush1.bf16.xpose.msra.mxu0 0
        %3452 = vmatprep.subr.bf16.mxu0 0
        %3453 = vmatpush1.bf16.xpose.msra.mxu0 0
        %3454 = vmatprep.subr.bf16.mxu0 0
        %3455 = vmatpush1.bf16.xpose.msra.mxu0 0
        %3456 = vmatprep.subr.bf16.mxu0 0
        %3457 = vmatpush1.bf16.xpose.msra.mxu0 0
        %3458 = vmatprep.subr.bf16.mxu0 0
        %3459 = vmatpush1.bf16.xpose.msra.mxu0 0
        %3460 = vmatprep.subr.bf16.mxu0 0
        %3461 = vmatpush1.bf16.xpose.msra.mxu0 0
        %3462 = vmatprep.subr.bf16.mxu0 0
        %3463 = vmatpush1.bf16.xpose.msra.mxu0 0
        %3464 = vmatprep.subr.bf16.mxu0 0
        %3465 = vmatpush1.bf16.xpose.msra.mxu0 0
        %3466 = vmatprep.mubr.bf16.mxu0 0
        %3467 = vmatmul.mubr.bf16.gmra.mrb[0].mxu0 %v3429
        %v3468 = vpop.f32.mrb[0].mxu0
        %v3469 = vadd.f32 0.0, %v3468
        %v3470 = vpop.f32.mrb[0].mxu0
        %v3471 = vpop.f32.mrb[0].mxu0
        %v3472 = vadd.f32 0.0, %v3471
        %v3473 = vpop.f32.mrb[0].mxu0
        %3474 = vdwg.mxu0
        %v3475 = vmul.f32 %v3469, 0.17677669
        %v3476 = vmul.f32 %v3472, 0.17677669
        %v3477 = vadd.f32 %v3475, %v2862
        %v3478 = vadd.f32 %v3476, %v2863
        %v3479 = vsel %vm2917, %v3477, -inf
        %3480 = vmax.xlane.f32.xlu0 %v3479
        %v3481 = vpop.xlane.xlu0 %3480
        %v3482 = vsel %vm2917, %v3478, -inf
        %3483 = vmax.xlane.f32.xlu0 %v3482
        %v3484 = vpop.xlane.xlu0 %3483
        %v3485 = vsub.f32 %v3477, %v3481
        %v3486 = vsub.f32 %v3478, %v3484
        %v3487 = vmul.f32 %v3485, 1.442695
        %v3488 = vpow.pop %v3487
        %v3489 = vmul.f32 %v3486, 1.442695
        %v3490 = vpow.pop %v3489
        %v3491 = vsel %vm2917, %v3488, 0.0
        %3492 = vadd.xlane.f32.xlu0 %v3491
        %v3493 = vpop.xlane.xlu0 %3492
        %v3494 = vsel %vm2917, %v3490, 0.0
        %3495 = vadd.xlane.f32.xlu0 %v3494
        %v3496 = vpop.xlane.xlu0 %3495
        %v3497 = vrcp.pop %v3493
        %v3498 = vrcp.pop %v3496
        %v3499 = vmul.f32 %v3488, %v3497
        %v3500 = vmul.f32 %v3490, %v3498
        %v3501 = vpack.c.bf16 %v3500, %v3499
        %3502 = vrot.lane.b32.xlu0 %v2941, 32
        %v3503 = vpop.permute.xlu0 %3502
        %v3506 = vsel %vm2917, %v3501, 0
        %3508 = vmatprep.subr.bf16.mxu0 0
        %3509 = vmatpush1.bf16.msra.mxu0 %v3503
        %3510 = vmatprep.subr.bf16.mxu0 0
        %3511 = vmatpush1.bf16.msra.mxu0 0
        %3512 = vmatprep.subr.bf16.mxu0 0
        %3513 = vmatpush1.bf16.msra.mxu0 0
        %3514 = vmatprep.subr.bf16.mxu0 0
        %3515 = vmatpush1.bf16.msra.mxu0 0
        %3516 = vmatprep.subr.bf16.mxu0 0
        %3517 = vmatpush1.bf16.msra.mxu0 0
        %3518 = vmatprep.subr.bf16.mxu0 0
        %3519 = vmatpush1.bf16.msra.mxu0 0
        %3520 = vmatprep.subr.bf16.mxu0 0
        %3521 = vmatpush1.bf16.msra.mxu0 0
        %3522 = vmatprep.subr.bf16.mxu0 0
        %3523 = vmatpush1.bf16.msra.mxu0 0
        %3524 = vmatprep.subr.bf16.mxu0 0
        %3525 = vmatpush1.bf16.msra.mxu0 0
        %3526 = vmatprep.subr.bf16.mxu0 0
        %3527 = vmatpush1.bf16.msra.mxu0 0
        %3528 = vmatprep.subr.bf16.mxu0 0
        %3529 = vmatpush1.bf16.msra.mxu0 0
        %3530 = vmatprep.subr.bf16.mxu0 0
        %3531 = vmatpush1.bf16.msra.mxu0 0
        %3532 = vmatprep.subr.bf16.mxu0 0
        %3533 = vmatpush1.bf16.msra.mxu0 0
        %3534 = vmatprep.subr.bf16.mxu0 0
        %3535 = vmatpush1.bf16.msra.mxu0 0
        %3536 = vmatprep.subr.bf16.mxu0 0
        %3537 = vmatpush1.bf16.msra.mxu0 0
        %3538 = vmatprep.subr.bf16.mxu0 0
        %3539 = vmatpush1.bf16.msra.mxu0 0
        %3540 = vmatprep.mubr.bf16.mxu0 0
        %3541 = vmatmul.mubr.bf16.gmra.mrb[0].mxu0 %v3506
        %v3542 = vpop.f32.mrb[0].mxu0
        %v3543 = vadd.f32 0.0, %v3542
        %v3544 = vpop.f32.mrb[0].mxu0
        %v3545 = vpop.f32.mrb[0].mxu0
        %v3546 = vadd.f32 0.0, %v3545
        %v3547 = vpop.f32.mrb[0].mxu0
        %3548 = vdwg.mxu0
        %v3549 = vpack.c.bf16 %v3546, %v3543
        %v3550 = vld [vmem:[%s9 + $0x2b4] sm:$0xf]
        %v3551 = vld [vmem:[%s9 + $0x2ec] sm:$0xf]
        %v3552 = vld [vmem:[%s9 + $0x324] sm:$0xf]
        %v3553 = vld [vmem:[%s9 + $0x35c] sm:$0xf]
        %v3558 = vunpack.c.l.b16 %v3550
        %v3559 = vunpack.c.l.b16 %v3551
        %v3560 = vunpack.c.l.b16 %v3552
        %v3561 = vunpack.c.l.b16 %v3553
        %v3562 = vpack.c.b16 %v3559, %v3558
        %v3563 = vpack.c.b16 %v3561, %v3560
        %v3567 = vsel %vm920, %v3549, 0
        %3569 = vmatprep.subr.bf16.mxu0 0
        %3570 = vmatpush1.bf16.msra.mxu0 %v3562
        %3571 = vmatprep.subr.bf16.mxu0 0
        %3572 = vmatpush1.bf16.msra.mxu0 %v3563
        %3573 = vmatprep.subr.bf16.mxu0 0
        %3574 = vmatpush1.bf16.msra.mxu0 0
        %3575 = vmatprep.subr.bf16.mxu0 0
        %3576 = vmatpush1.bf16.msra.mxu0 0
        %3577 = vmatprep.subr.bf16.mxu0 0
        %3578 = vmatpush1.bf16.msra.mxu0 0
        %3579 = vmatprep.subr.bf16.mxu0 0
        %3580 = vmatpush1.bf16.msra.mxu0 0
        %3581 = vmatprep.subr.bf16.mxu0 0
        %3582 = vmatpush1.bf16.msra.mxu0 0
        %3583 = vmatprep.subr.bf16.mxu0 0
        %3584 = vmatpush1.bf16.msra.mxu0 0
        %3585 = vmatprep.subr.bf16.mxu0 0
        %3586 = vmatpush1.bf16.msra.mxu0 0
        %3587 = vmatprep.subr.bf16.mxu0 0
        %3588 = vmatpush1.bf16.msra.mxu0 0
        %3589 = vmatprep.subr.bf16.mxu0 0
        %3590 = vmatpush1.bf16.msra.mxu0 0
        %3591 = vmatprep.subr.bf16.mxu0 0
        %3592 = vmatpush1.bf16.msra.mxu0 0
        %3593 = vmatprep.subr.bf16.mxu0 0
        %3594 = vmatpush1.bf16.msra.mxu0 0
        %3595 = vmatprep.subr.bf16.mxu0 0
        %3596 = vmatpush1.bf16.msra.mxu0 0
        %3597 = vmatprep.subr.bf16.mxu0 0
        %3598 = vmatpush1.bf16.msra.mxu0 0
        %3599 = vmatprep.subr.bf16.mxu0 0
        %3600 = vmatpush1.bf16.msra.mxu0 0
        %3601 = vmatprep.mubr.bf16.mxu0 0
        %3602 = vmatmul.mubr.bf16.gmra.mrb[0].mxu0 %v3567
        %v3603 = vpop.f32.mrb[0].mxu0
        %v3604 = vadd.f32 0.0, %v3603
        %v3605 = vpop.f32.mrb[0].mxu0
        %v3606 = vpop.f32.mrb[0].mxu0
        %v3607 = vadd.f32 0.0, %v3606
        %v3608 = vpop.f32.mrb[0].mxu0
        %3609 = vdwg.mxu0
        %v3610 = vadd.f32 %v3422, %v3604
        %v3611 = vadd.f32 %v3423, %v3607
        %v3612 = vadd.f32 %v2431, %v3610
        %v3613 = vadd.f32 %v2432, %v3611
        %v3614 = vld [vmem:[#allocation2 + $0xc] ss:$0 sm:$0xff]
        %v3615 = vmul.f32 %v3612, %v3612
        %v3616 = vmul.f32 %v3613, %v3613
        %3617 = vadd.xlane.f32.xlu0 %v3615
        %v3618 = vpop.xlane.xlu0 %3617
        %3619 = vadd.xlane.f32.xlu0 %v3616
        %v3620 = vpop.xlane.xlu0 %3619
        %v3621 = vmul.f32 %v3618, %v626
        %v3622 = vmul.f32 %v3620, %v626
        %v3623 = vadd.f32 %v3621, 1e-06
        %v3624 = vadd.f32 %v3622, 1e-06
        %v3625 = vrsqrt.pop %v3623
        %v3626 = vrsqrt.pop %v3624
        %v3627 = vmul.f32 %v3612, %v3625
        %v3628 = vmul.f32 %v3613, %v3626
        %v3629 = vmul.f32 %v3627, %v3614
        %v3630 = vmul.f32 %v3628, %v3614
        %v3631 = vpack.c.bf16 %v3630, %v3629
        %v3632 = vld [vmem:[%s9 + $0x18] sm:$0xff]
        %v3633 = vld [vmem:[%s9 + $0x20] sm:$0xff]
        %v3634 = vld [vmem:[%s9 + $0x50] sm:$0xff]
        %v3635 = vld [vmem:[%s9 + $0x58] sm:$0xff]
        %v3636 = vld [vmem:[%s9 + $0x88] sm:$0xff]
        %v3637 = vld [vmem:[%s9 + $0x90] sm:$0xff]
        %v3638 = vld [vmem:[%s9 + $0xc0] sm:$0xff]
        %v3639 = vld [vmem:[%s9 + $0xc8] sm:$0xff]
        %v3640 = vld [vmem:[%s9 + $0xf8] sm:$0xff]
        %v3641 = vld [vmem:[%s9 + $0x100] sm:$0xff]
        %v3642 = vld [vmem:[%s9 + $0x130] sm:$0xff]
        %v3643 = vld [vmem:[%s9 + $0x138] sm:$0xff]
        %v3644 = vld [vmem:[%s9 + $0x168] sm:$0xff]
        %v3645 = vld [vmem:[%s9 + $0x170] sm:$0xff]
        %v3646 = vld [vmem:[%s9 + $0x1a0] sm:$0xff]
        %v3647 = vld [vmem:[%s9 + $0x1a8] sm:$0xff]
        %v3648 = vld [vmem:[%s9 + $0x1d8] sm:$0xff]
        %v3649 = vld [vmem:[%s9 + $0x1e0] sm:$0xff]
        %v3650 = vld [vmem:[%s9 + $0x210] sm:$0xff]
        %v3651 = vld [vmem:[%s9 + $0x218] sm:$0xff]
        %v3652 = vld [vmem:[%s9 + $0x248] sm:$0xff]
        %v3653 = vld [vmem:[%s9 + $0x250] sm:$0xff]
        %v3654 = vld [vmem:[%s9 + $0x280] sm:$0xff]
        %v3655 = vld [vmem:[%s9 + $0x288] sm:$0xff]
        %v3656 = vld [vmem:[%s9 + $0x2b8] sm:$0xff]
        %v3657 = vld [vmem:[%s9 + $0x2c0] sm:$0xff]
        %v3658 = vld [vmem:[%s9 + $0x2f0] sm:$0xff]
        %v3659 = vld [vmem:[%s9 + $0x2f8] sm:$0xff]
        %v3660 = vld [vmem:[%s9 + $0x328] sm:$0xff]
        %v3661 = vld [vmem:[%s9 + $0x330] sm:$0xff]
        %v3662 = vld [vmem:[%s9 + $0x360] sm:$0xff]
        %v3663 = vld [vmem:[%s9 + $0x368] sm:$0xff]
        %v3696 = vunpack.c.l.b16 %v3632
        %v3697 = vunpack.c.h.b16 %v3632
        %v3698 = vunpack.c.l.b16 %v3633
        %v3699 = vunpack.c.h.b16 %v3633
        %v3700 = vunpack.c.l.b16 %v3634
        %v3701 = vunpack.c.h.b16 %v3634
        %v3702 = vunpack.c.l.b16 %v3635
        %v3703 = vunpack.c.h.b16 %v3635
        %v3704 = vunpack.c.l.b16 %v3636
        %v3705 = vunpack.c.h.b16 %v3636
        %v3706 = vunpack.c.l.b16 %v3637
        %v3707 = vunpack.c.h.b16 %v3637
        %v3708 = vunpack.c.l.b16 %v3638
        %v3709 = vunpack.c.h.b16 %v3638
        %v3710 = vunpack.c.l.b16 %v3639
        %v3711 = vunpack.c.h.b16 %v3639
        %v3712 = vunpack.c.l.b16 %v3640
        %v3713 = vunpack.c.h.b16 %v3640
        %v3714 = vunpack.c.l.b16 %v3641
        %v3715 = vunpack.c.h.b16 %v3641
        %v3716 = vunpack.c.l.b16 %v3642
        %v3717 = vunpack.c.h.b16 %v3642
        %v3718 = vunpack.c.l.b16 %v3643
        %v3719 = vunpack.c.h.b16 %v3643
        %v3720 = vunpack.c.l.b16 %v3644
        %v3721 = vunpack.c.h.b16 %v3644
        %v3722 = vunpack.c.l.b16 %v3645
        %v3723 = vunpack.c.h.b16 %v3645
        %v3724 = vunpack.c.l.b16 %v3646
        %v3725 = vunpack.c.h.b16 %v3646
        %v3726 = vunpack.c.l.b16 %v3647
        %v3727 = vunpack.c.h.b16 %v3647
        %v3728 = vunpack.c.l.b16 %v3648
        %v3729 = vunpack.c.h.b16 %v3648
        %v3730 = vunpack.c.l.b16 %v3649
        %v3731 = vunpack.c.h.b16 %v3649
        %v3732 = vunpack.c.l.b16 %v3650
        %v3733 = vunpack.c.h.b16 %v3650
        %v3734 = vunpack.c.l.b16 %v3651
        %v3735 = vunpack.c.h.b16 %v3651
        %v3736 = vunpack.c.l.b16 %v3652
        %v3737 = vunpack.c.h.b16 %v3652
        %v3738 = vunpack.c.l.b16 %v3653
        %v3739 = vunpack.c.h.b16 %v3653
        %v3740 = vunpack.c.l.b16 %v3654
        %v3741 = vunpack.c.h.b16 %v3654
        %v3742 = vunpack.c.l.b16 %v3655
        %v3743 = vunpack.c.h.b16 %v3655
        %v3744 = vunpack.c.l.b16 %v3656
        %v3745 = vunpack.c.h.b16 %v3656
        %v3746 = vunpack.c.l.b16 %v3657
        %v3747 = vunpack.c.h.b16 %v3657
        %v3748 = vunpack.c.l.b16 %v3658
        %v3749 = vunpack.c.h.b16 %v3658
        %v3750 = vunpack.c.l.b16 %v3659
        %v3751 = vunpack.c.h.b16 %v3659
        %v3752 = vunpack.c.l.b16 %v3660
        %v3753 = vunpack.c.h.b16 %v3660
        %v3754 = vunpack.c.l.b16 %v3661
        %v3755 = vunpack.c.h.b16 %v3661
        %v3756 = vunpack.c.l.b16 %v3662
        %v3757 = vunpack.c.h.b16 %v3662
        %v3758 = vunpack.c.l.b16 %v3663
        %v3759 = vunpack.c.h.b16 %v3663
        %v3760 = vpack.c.b16 %v3700, %v3696
        %v3761 = vpack.c.b16 %v3701, %v3697
        %v3762 = vpack.c.b16 %v3702, %v3698
        %v3763 = vpack.c.b16 %v3703, %v3699
        %v3764 = vpack.c.b16 %v3708, %v3704
        %v3765 = vpack.c.b16 %v3709, %v3705
        %v3766 = vpack.c.b16 %v3710, %v3706
        %v3767 = vpack.c.b16 %v3711, %v3707
        %v3768 = vpack.c.b16 %v3716, %v3712
        %v3769 = vpack.c.b16 %v3717, %v3713
        %v3770 = vpack.c.b16 %v3718, %v3714
        %v3771 = vpack.c.b16 %v3719, %v3715
        %v3772 = vpack.c.b16 %v3724, %v3720
        %v3773 = vpack.c.b16 %v3725, %v3721
        %v3774 = vpack.c.b16 %v3726, %v3722
        %v3775 = vpack.c.b16 %v3727, %v3723
        %v3776 = vpack.c.b16 %v3732, %v3728
        %v3777 = vpack.c.b16 %v3733, %v3729
        %v3778 = vpack.c.b16 %v3734, %v3730
        %v3779 = vpack.c.b16 %v3735, %v3731
        %v3780 = vpack.c.b16 %v3740, %v3736
        %v3781 = vpack.c.b16 %v3741, %v3737
        %v3782 = vpack.c.b16 %v3742, %v3738
        %v3783 = vpack.c.b16 %v3743, %v3739
        %v3784 = vpack.c.b16 %v3748, %v3744
        %v3785 = vpack.c.b16 %v3749, %v3745
        %v3786 = vpack.c.b16 %v3750, %v3746
        %v3787 = vpack.c.b16 %v3751, %v3747
        %v3788 = vpack.c.b16 %v3756, %v3752
        %v3789 = vpack.c.b16 %v3757, %v3753
        %v3790 = vpack.c.b16 %v3758, %v3754
        %v3791 = vpack.c.b16 %v3759, %v3755
        %3824 = vmatprep.subr.bf16.mxu0 %v3761
        %3825 = vmatpush1.bf16.msra.mxu0 %v3760
        %3826 = vmatprep.subr.bf16.mxu0 %v3765
        %3827 = vmatpush1.bf16.msra.mxu0 %v3764
        %3828 = vmatprep.subr.bf16.mxu0 %v3769
        %3829 = vmatpush1.bf16.msra.mxu0 %v3768
        %3830 = vmatprep.subr.bf16.mxu0 %v3773
        %3831 = vmatpush1.bf16.msra.mxu0 %v3772
        %3832 = vmatprep.subr.bf16.mxu0 %v3777
        %3833 = vmatpush1.bf16.msra.mxu0 %v3776
        %3834 = vmatprep.subr.bf16.mxu0 %v3781
        %3835 = vmatpush1.bf16.msra.mxu0 %v3780
        %3836 = vmatprep.subr.bf16.mxu0 %v3785
        %3837 = vmatpush1.bf16.msra.mxu0 %v3784
        %3838 = vmatprep.subr.bf16.mxu0 %v3789
        %3839 = vmatpush1.bf16.msra.mxu0 %v3788
        %3840 = vmatprep.subr.bf16.mxu0 0
        %3841 = vmatpush1.bf16.msra.mxu0 0
        %3842 = vmatprep.subr.bf16.mxu0 0
        %3843 = vmatpush1.bf16.msra.mxu0 0
        %3844 = vmatprep.subr.bf16.mxu0 0
        %3845 = vmatpush1.bf16.msra.mxu0 0
        %3846 = vmatprep.subr.bf16.mxu0 0
        %3847 = vmatpush1.bf16.msra.mxu0 0
        %3848 = vmatprep.subr.bf16.mxu0 0
        %3849 = vmatpush1.bf16.msra.mxu0 0
        %3850 = vmatprep.subr.bf16.mxu0 0
        %3851 = vmatpush1.bf16.msra.mxu0 0
        %3852 = vmatprep.subr.bf16.mxu0 0
        %3853 = vmatpush1.bf16.msra.mxu0 0
        %3854 = vmatprep.subr.bf16.mxu0 0
        %3855 = vmatpush1.bf16.msra.mxu0 0
        %3856 = vmatprep.mubr.bf16.mxu0 0
        %3857 = vmatmul.mubr.bf16.gmra.mrb[0].mxu0 %v3631
        %v3858 = vpop.f32.mrb[0].mxu0
        %v3859 = vadd.f32 0.0, %v3858
        %v3860 = vpop.f32.mrb[0].mxu0
        %v3861 = vadd.f32 0.0, %v3860
        %v3862 = vpop.f32.mrb[0].mxu0
        %v3863 = vadd.f32 0.0, %v3862
        %v3864 = vpop.f32.mrb[0].mxu0
        %v3865 = vadd.f32 0.0, %v3864
        %3866 = vdwg.mxu0
        %3867 = vmatprep.subr.bf16.mxu0 %v3763
        %3868 = vmatpush1.bf16.msra.mxu0 %v3762
        %3869 = vmatprep.subr.bf16.mxu0 %v3767
        %3870 = vmatpush1.bf16.msra.mxu0 %v3766
        %3871 = vmatprep.subr.bf16.mxu0 %v3771
        %3872 = vmatpush1.bf16.msra.mxu0 %v3770
        %3873 = vmatprep.subr.bf16.mxu0 %v3775
        %3874 = vmatpush1.bf16.msra.mxu0 %v3774
        %3875 = vmatprep.subr.bf16.mxu0 %v3779
        %3876 = vmatpush1.bf16.msra.mxu0 %v3778
        %3877 = vmatprep.subr.bf16.mxu0 %v3783
        %3878 = vmatpush1.bf16.msra.mxu0 %v3782
        %3879 = vmatprep.subr.bf16.mxu0 %v3787
        %3880 = vmatpush1.bf16.msra.mxu0 %v3786
        %3881 = vmatprep.subr.bf16.mxu0 %v3791
        %3882 = vmatpush1.bf16.msra.mxu0 %v3790
        %3883 = vmatprep.subr.bf16.mxu0 0
        %3884 = vmatpush1.bf16.msra.mxu0 0
        %3885 = vmatprep.subr.bf16.mxu0 0
        %3886 = vmatpush1.bf16.msra.mxu0 0
        %3887 = vmatprep.subr.bf16.mxu0 0
        %3888 = vmatpush1.bf16.msra.mxu0 0
        %3889 = vmatprep.subr.bf16.mxu0 0
        %3890 = vmatpush1.bf16.msra.mxu0 0
        %3891 = vmatprep.subr.bf16.mxu0 0
        %3892 = vmatpush1.bf16.msra.mxu0 0
        %3893 = vmatprep.subr.bf16.mxu0 0
        %3894 = vmatpush1.bf16.msra.mxu0 0
        %3895 = vmatprep.subr.bf16.mxu0 0
        %3896 = vmatpush1.bf16.msra.mxu0 0
        %3897 = vmatprep.subr.bf16.mxu0 0
        %3898 = vmatpush1.bf16.msra.mxu0 0
        %3899 = vmatprep.mubr.bf16.mxu0 0
        %3900 = vmatmul.mubr.bf16.gmra.mrb[0].mxu0 %v3631
        %v3901 = vpop.f32.mrb[0].mxu0
        %v3902 = vadd.f32 0.0, %v3901
        %v3903 = vpop.f32.mrb[0].mxu0
        %v3904 = vadd.f32 0.0, %v3903
        %v3905 = vpop.f32.mrb[0].mxu0
        %v3906 = vadd.f32 0.0, %v3905
        %v3907 = vpop.f32.mrb[0].mxu0
        %v3908 = vadd.f32 0.0, %v3907
        %3909 = vdwg.mxu0
        %v3910 = vxor.u32 %v3859, 2147483648
        %v3911 = vxor.u32 %v3861, 2147483648
        %v3912 = vxor.u32 %v3863, 2147483648
        %v3913 = vxor.u32 %v3865, 2147483648
        %v3914 = vmul.f32 %v3910, 1.442695
        %v3915 = vpow.pop %v3914
        %v3916 = vmul.f32 %v3911, 1.442695
        %v3917 = vpow.pop %v3916
        %v3918 = vmul.f32 %v3912, 1.442695
        %v3919 = vpow.pop %v3918
        %v3920 = vmul.f32 %v3913, 1.442695
        %v3921 = vpow.pop %v3920
        %v3922 = vadd.f32 %v3915, 1.0
        %v3923 = vadd.f32 %v3917, 1.0
        %v3924 = vadd.f32 %v3919, 1.0
        %v3925 = vadd.f32 %v3921, 1.0
        %v3926 = vrcp.pop %v3922
        %v3927 = vmul.f32 1.0, %v3926
        %v3928 = vrcp.pop %v3923
        %v3929 = vmul.f32 1.0, %v3928
        %v3930 = vrcp.pop %v3924
        %v3931 = vmul.f32 1.0, %v3930
        %v3932 = vrcp.pop %v3925
        %v3933 = vmul.f32 1.0, %v3932
        %v3934 = vmul.f32 %v3859, %v3927
        %v3935 = vmul.f32 %v3861, %v3929
        %v3936 = vmul.f32 %v3863, %v3931
        %v3937 = vmul.f32 %v3865, %v3933
        %v3938 = vmul.f32 %v3934, %v3902
        %v3939 = vmul.f32 %v3935, %v3904
        %v3940 = vmul.f32 %v3936, %v3906
        %v3941 = vmul.f32 %v3937, %v3908
        %v3942 = vpack.c.bf16 %v3940, %v3938
        %v3943 = vpack.c.bf16 %v3941, %v3939
        %v3944 = vld [vmem:[#allocation8] sm:$0xf]
        %v3945 = vld [vmem:[#allocation8 + $0x4] sm:$0xf]
        %v3946 = vld [vmem:[#allocation8 + $0x8] sm:$0xf]
        %v3947 = vld [vmem:[#allocation8 + $0xc] sm:$0xf]
        %v3948 = vld [vmem:[#allocation8 + $0x10] sm:$0xf]
        %v3949 = vld [vmem:[#allocation8 + $0x14] sm:$0xf]
        %v3950 = vld [vmem:[#allocation8 + $0x18] sm:$0xf]
        %v3951 = vld [vmem:[#allocation8 + $0x1c] sm:$0xf]
        %v3952 = vld [vmem:[#allocation8 + $0x20] sm:$0xf]
        %v3953 = vld [vmem:[#allocation8 + $0x24] sm:$0xf]
        %v3954 = vld [vmem:[#allocation8 + $0x28] sm:$0xf]
        %v3955 = vld [vmem:[#allocation8 + $0x2c] sm:$0xf]
        %v3956 = vld [vmem:[#allocation8 + $0x30] sm:$0xf]
        %v3957 = vld [vmem:[#allocation8 + $0x34] sm:$0xf]
        %v3958 = vld [vmem:[#allocation8 + $0x38] sm:$0xf]
        %v3959 = vld [vmem:[#allocation8 + $0x3c] sm:$0xf]
        %v3960 = vld [vmem:[#allocation8 + $0x40] sm:$0xf]
        %v3961 = vld [vmem:[#allocation8 + $0x44] sm:$0xf]
        %v3962 = vld [vmem:[#allocation8 + $0x48] sm:$0xf]
        %v3963 = vld [vmem:[#allocation8 + $0x4c] sm:$0xf]
        %v3964 = vld [vmem:[#allocation8 + $0x50] sm:$0xf]
        %v3965 = vld [vmem:[#allocation8 + $0x54] sm:$0xf]
        %v3966 = vld [vmem:[#allocation8 + $0x58] sm:$0xf]
        %v3967 = vld [vmem:[#allocation8 + $0x5c] sm:$0xf]
        %v3968 = vld [vmem:[#allocation8 + $0x60] sm:$0xf]
        %v3969 = vld [vmem:[#allocation8 + $0x64] sm:$0xf]
        %v3970 = vld [vmem:[#allocation8 + $0x68] sm:$0xf]
        %v3971 = vld [vmem:[#allocation8 + $0x6c] sm:$0xf]
        %v3972 = vld [vmem:[#allocation8 + $0x70] sm:$0xf]
        %v3973 = vld [vmem:[#allocation8 + $0x74] sm:$0xf]
        %v3974 = vld [vmem:[#allocation8 + $0x78] sm:$0xf]
        %v3975 = vld [vmem:[#allocation8 + $0x7c] sm:$0xf]
        %v4008 = vunpack.c.l.b16 %v3944
        %v4009 = vunpack.c.l.b16 %v3945
        %v4010 = vunpack.c.l.b16 %v3946
        %v4011 = vunpack.c.l.b16 %v3947
        %v4012 = vunpack.c.l.b16 %v3948
        %v4013 = vunpack.c.l.b16 %v3949
        %v4014 = vunpack.c.l.b16 %v3950
        %v4015 = vunpack.c.l.b16 %v3951
        %v4016 = vunpack.c.l.b16 %v3952
        %v4017 = vunpack.c.l.b16 %v3953
        %v4018 = vunpack.c.l.b16 %v3954
        %v4019 = vunpack.c.l.b16 %v3955
        %v4020 = vunpack.c.l.b16 %v3956
        %v4021 = vunpack.c.l.b16 %v3957
        %v4022 = vunpack.c.l.b16 %v3958
        %v4023 = vunpack.c.l.b16 %v3959
        %v4024 = vunpack.c.l.b16 %v3960
        %v4025 = vunpack.c.l.b16 %v3961
        %v4026 = vunpack.c.l.b16 %v3962
        %v4027 = vunpack.c.l.b16 %v3963
        %v4028 = vunpack.c.l.b16 %v3964
        %v4029 = vunpack.c.l.b16 %v3965
        %v4030 = vunpack.c.l.b16 %v3966
        %v4031 = vunpack.c.l.b16 %v3967
        %v4032 = vunpack.c.l.b16 %v3968
        %v4033 = vunpack.c.l.b16 %v3969
        %v4034 = vunpack.c.l.b16 %v3970
        %v4035 = vunpack.c.l.b16 %v3971
        %v4036 = vunpack.c.l.b16 %v3972
        %v4037 = vunpack.c.l.b16 %v3973
        %v4038 = vunpack.c.l.b16 %v3974
        %v4039 = vunpack.c.l.b16 %v3975
        %v4040 = vpack.c.b16 %v4009, %v4008
        %v4041 = vpack.c.b16 %v4011, %v4010
        %v4042 = vpack.c.b16 %v4013, %v4012
        %v4043 = vpack.c.b16 %v4015, %v4014
        %v4044 = vpack.c.b16 %v4017, %v4016
        %v4045 = vpack.c.b16 %v4019, %v4018
        %v4046 = vpack.c.b16 %v4021, %v4020
        %v4047 = vpack.c.b16 %v4023, %v4022
        %v4048 = vpack.c.b16 %v4025, %v4024
        %v4049 = vpack.c.b16 %v4027, %v4026
        %v4050 = vpack.c.b16 %v4029, %v4028
        %v4051 = vpack.c.b16 %v4031, %v4030
        %v4052 = vpack.c.b16 %v4033, %v4032
        %v4053 = vpack.c.b16 %v4035, %v4034
        %v4054 = vpack.c.b16 %v4037, %v4036
        %v4055 = vpack.c.b16 %v4039, %v4038
        %4072 = vmatprep.subr.bf16.mxu0 0
        %4073 = vmatpush1.bf16.msra.mxu0 %v4040
        %4074 = vmatprep.subr.bf16.mxu0 0
        %4075 = vmatpush1.bf16.msra.mxu0 %v4041
        %4076 = vmatprep.subr.bf16.mxu0 0
        %4077 = vmatpush1.bf16.msra.mxu0 %v4042
        %4078 = vmatprep.subr.bf16.mxu0 0
        %4079 = vmatpush1.bf16.msra.mxu0 %v4043
        %4080 = vmatprep.subr.bf16.mxu0 0
        %4081 = vmatpush1.bf16.msra.mxu0 %v4044
        %4082 = vmatprep.subr.bf16.mxu0 0
        %4083 = vmatpush1.bf16.msra.mxu0 %v4045
        %4084 = vmatprep.subr.bf16.mxu0 0
        %4085 = vmatpush1.bf16.msra.mxu0 %v4046
        %4086 = vmatprep.subr.bf16.mxu0 0
        %4087 = vmatpush1.bf16.msra.mxu0 %v4047
        %4088 = vmatprep.subr.bf16.mxu0 0
        %4089 = vmatpush1.bf16.msra.mxu0 %v4048
        %4090 = vmatprep.subr.bf16.mxu0 0
        %4091 = vmatpush1.bf16.msra.mxu0 %v4049
        %4092 = vmatprep.subr.bf16.mxu0 0
        %4093 = vmatpush1.bf16.msra.mxu0 %v4050
        %4094 = vmatprep.subr.bf16.mxu0 0
        %4095 = vmatpush1.bf16.msra.mxu0 %v4051
        %4096 = vmatprep.subr.bf16.mxu0 0
        %4097 = vmatpush1.bf16.msra.mxu0 %v4052
        %4098 = vmatprep.subr.bf16.mxu0 0
        %4099 = vmatpush1.bf16.msra.mxu0 %v4053
        %4100 = vmatprep.subr.bf16.mxu0 0
        %4101 = vmatpush1.bf16.msra.mxu0 %v4054
        %4102 = vmatprep.subr.bf16.mxu0 0
        %4103 = vmatpush1.bf16.msra.mxu0 %v4055
        %4104 = vmatprep.mubr.bf16.mxu0 %v3943
        %4105 = vmatmul.mubr.bf16.gmra.mrb[0].mxu0 %v3942
        %v4106 = vpop.f32.mrb[0].mxu0
        %v4107 = vadd.f32 0.0, %v4106
        %v4108 = vpop.f32.mrb[0].mxu0
        %v4109 = vpop.f32.mrb[0].mxu0
        %v4110 = vadd.f32 0.0, %v4109
        %v4111 = vpop.f32.mrb[0].mxu0
        %4112 = vdwg.mxu0
        %v4113 = vadd.f32 %v3612, %v4107
        %v4114 = vadd.f32 %v3613, %v4110
        %v4115 = vld [vmem:[#allocation2 + $0x14] ss:$0 sm:$0xff]
        %v4116 = vmul.f32 %v4113, %v4113
        %v4117 = vmul.f32 %v4114, %v4114
        %vm4118 = vcmask 1047553
        %v4119 = vsel %vm4118, %v4116, 0.0
        %4120 = vadd.xlane.f32.xlu0 %v4119
        %v4121 = vpop.xlane.xlu0 %4120
        %vm4122 = vcmask 1040384
        %v4123 = vsel %vm4122, %v4117, 0.0
        %4124 = vadd.xlane.f32.xlu0 %v4123
        %v4125 = vpop.xlane.xlu0 %4124
        %v4126 = vmul.f32 %v4121, %v626
        %v4127 = vmul.f32 %v4125, %v626
        %v4128 = vadd.f32 %v4126, 1e-06
        %v4129 = vadd.f32 %v4127, 1e-06
        %v4130 = vrsqrt.pop %v4128
        %v4131 = vrsqrt.pop %v4129
        %v4132 = vmul.f32 %v4113, %v4130
        %v4133 = vmul.f32 %v4114, %v4131
        %v4134 = vmul.f32 %v4132, %v4115
        %v4135 = vmul.f32 %v4133, %v4115
        %v4136 = vpack.c.bf16 %v4135, %v4134
        %v4137 = vld [vmem:[%s9 + $0x28] sm:$0xff]
        %v4138 = vld [vmem:[%s9 + $0x30] sm:$0xff]
        %v4139 = vld [vmem:[%s9 + $0x60] sm:$0xff]
        %v4140 = vld [vmem:[%s9 + $0x68] sm:$0xff]
        %v4141 = vld [vmem:[%s9 + $0x98] sm:$0xff]
        %v4142 = vld [vmem:[%s9 + $0xa0] sm:$0xff]
        %v4143 = vld [vmem:[%s9 + $0xd0] sm:$0xff]
        %v4144 = vld [vmem:[%s9 + $0xd8] sm:$0xff]
        %v4145 = vld [vmem:[%s9 + $0x108] sm:$0xff]
        %v4146 = vld [vmem:[%s9 + $0x110] sm:$0xff]
        %v4147 = vld [vmem:[%s9 + $0x140] sm:$0xff]
        %v4148 = vld [vmem:[%s9 + $0x148] sm:$0xff]
        %v4149 = vld [vmem:[%s9 + $0x178] sm:$0xff]
        %v4150 = vld [vmem:[%s9 + $0x180] sm:$0xff]
        %v4151 = vld [vmem:[%s9 + $0x1b0] sm:$0xff]
        %v4152 = vld [vmem:[%s9 + $0x1b8] sm:$0xff]
        %v4153 = vld [vmem:[%s9 + $0x1e8] sm:$0xff]
        %v4154 = vld [vmem:[%s9 + $0x1f0] sm:$0xff]
        %v4155 = vld [vmem:[%s9 + $0x220] sm:$0xff]
        %v4156 = vld [vmem:[%s9 + $0x228] sm:$0xff]
        %v4157 = vld [vmem:[%s9 + $0x258] sm:$0xff]
        %v4158 = vld [vmem:[%s9 + $0x260] sm:$0xff]
        %v4159 = vld [vmem:[%s9 + $0x290] sm:$0xff]
        %v4160 = vld [vmem:[%s9 + $0x298] sm:$0xff]
        %v4161 = vld [vmem:[%s9 + $0x2c8] sm:$0xff]
        %v4162 = vld [vmem:[%s9 + $0x2d0] sm:$0xff]
        %v4163 = vld [vmem:[%s9 + $0x300] sm:$0xff]
        %v4164 = vld [vmem:[%s9 + $0x308] sm:$0xff]
        %v4165 = vld [vmem:[%s9 + $0x338] sm:$0xff]
        %v4166 = vld [vmem:[%s9 + $0x340] sm:$0xff]
        %v4167 = vld [vmem:[%s9 + $0x370] sm:$0xff]
        %v4168 = vld [vmem:[%s9 + $0x378] sm:$0xff]
        %v4170 = vshrl.u32 %v4136, 16
        %v4172 = vshll.u32 %v4136, 16
        %v4174 = vrot.slane %v4172, 1
        %v4175 = vor.u32 %v4170, %v4174
        %v4209 = vunpack.c.l.b16 %v4137
        %v4210 = vunpack.c.h.b16 %v4137
        %v4211 = vunpack.c.l.b16 %v4138
        %v4212 = vunpack.c.h.b16 %v4138
        %v4213 = vunpack.c.l.b16 %v4139
        %v4214 = vunpack.c.h.b16 %v4139
        %v4215 = vunpack.c.l.b16 %v4140
        %v4216 = vunpack.c.h.b16 %v4140
        %v4217 = vunpack.c.l.b16 %v4141
        %v4218 = vunpack.c.h.b16 %v4141
        %v4219 = vunpack.c.l.b16 %v4142
        %v4220 = vunpack.c.h.b16 %v4142
        %v4221 = vunpack.c.l.b16 %v4143
        %v4222 = vunpack.c.h.b16 %v4143
        %v4223 = vunpack.c.l.b16 %v4144
        %v4224 = vunpack.c.h.b16 %v4144
        %v4225 = vunpack.c.l.b16 %v4145
        %v4226 = vunpack.c.h.b16 %v4145
        %v4227 = vunpack.c.l.b16 %v4146
        %v4228 = vunpack.c.h.b16 %v4146
        %v4229 = vunpack.c.l.b16 %v4147
        %v4230 = vunpack.c.h.b16 %v4147
        %v4231 = vunpack.c.l.b16 %v4148
        %v4232 = vunpack.c.h.b16 %v4148
        %v4233 = vunpack.c.l.b16 %v4149
        %v4234 = vunpack.c.h.b16 %v4149
        %v4235 = vunpack.c.l.b16 %v4150
        %v4236 = vunpack.c.h.b16 %v4150
        %v4237 = vunpack.c.l.b16 %v4151
        %v4238 = vunpack.c.h.b16 %v4151
        %v4239 = vunpack.c.l.b16 %v4152
        %v4240 = vunpack.c.h.b16 %v4152
        %v4241 = vunpack.c.l.b16 %v4153
        %v4242 = vunpack.c.h.b16 %v4153
        %v4243 = vunpack.c.l.b16 %v4154
        %v4244 = vunpack.c.h.b16 %v4154
        %v4245 = vunpack.c.l.b16 %v4155
        %v4246 = vunpack.c.h.b16 %v4155
        %v4247 = vunpack.c.l.b16 %v4156
        %v4248 = vunpack.c.h.b16 %v4156
        %v4249 = vunpack.c.l.b16 %v4157
        %v4250 = vunpack.c.h.b16 %v4157
        %v4251 = vunpack.c.l.b16 %v4158
        %v4252 = vunpack.c.h.b16 %v4158
        %v4253 = vunpack.c.l.b16 %v4159
        %v4254 = vunpack.c.h.b16 %v4159
        %v4255 = vunpack.c.l.b16 %v4160
        %v4256 = vunpack.c.h.b16 %v4160
        %v4257 = vunpack.c.l.b16 %v4161
        %v4258 = vunpack.c.h.b16 %v4161
        %v4259 = vunpack.c.l.b16 %v4162
        %v4260 = vunpack.c.h.b16 %v4162
        %v4261 = vunpack.c.l.b16 %v4163
        %v4262 = vunpack.c.h.b16 %v4163
        %v4263 = vunpack.c.l.b16 %v4164
        %v4264 = vunpack.c.h.b16 %v4164
        %v4265 = vunpack.c.l.b16 %v4165
        %v4266 = vunpack.c.h.b16 %v4165
        %v4267 = vunpack.c.l.b16 %v4166
        %v4268 = vunpack.c.h.b16 %v4166
        %v4269 = vunpack.c.l.b16 %v4167
        %v4270 = vunpack.c.h.b16 %v4167
        %v4271 = vunpack.c.l.b16 %v4168
        %v4272 = vunpack.c.h.b16 %v4168
        %v4273 = vpack.c.b16 %v4213, %v4209
        %v4274 = vpack.c.b16 %v4214, %v4210
        %v4275 = vpack.c.b16 %v4215, %v4211
        %v4276 = vpack.c.b16 %v4216, %v4212
        %v4277 = vpack.c.b16 %v4221, %v4217
        %v4278 = vpack.c.b16 %v4222, %v4218
        %v4279 = vpack.c.b16 %v4223, %v4219
        %v4280 = vpack.c.b16 %v4224, %v4220
        %v4281 = vpack.c.b16 %v4229, %v4225
        %v4282 = vpack.c.b16 %v4230, %v4226
        %v4283 = vpack.c.b16 %v4231, %v4227
        %v4284 = vpack.c.b16 %v4232, %v4228
        %v4285 = vpack.c.b16 %v4237, %v4233
        %v4286 = vpack.c.b16 %v4238, %v4234
        %v4287 = vpack.c.b16 %v4239, %v4235
        %v4288 = vpack.c.b16 %v4240, %v4236
        %v4289 = vpack.c.b16 %v4245, %v4241
        %v4290 = vpack.c.b16 %v4246, %v4242
        %v4291 = vpack.c.b16 %v4247, %v4243
        %v4292 = vpack.c.b16 %v4248, %v4244
        %v4293 = vpack.c.b16 %v4253, %v4249
        %v4294 = vpack.c.b16 %v4254, %v4250
        %v4295 = vpack.c.b16 %v4255, %v4251
        %v4296 = vpack.c.b16 %v4256, %v4252
        %v4297 = vpack.c.b16 %v4261, %v4257
        %v4298 = vpack.c.b16 %v4262, %v4258
        %v4299 = vpack.c.b16 %v4263, %v4259
        %v4300 = vpack.c.b16 %v4264, %v4260
        %v4301 = vpack.c.b16 %v4269, %v4265
        %v4302 = vpack.c.b16 %v4270, %v4266
        %v4303 = vpack.c.b16 %v4271, %v4267
        %v4304 = vpack.c.b16 %v4272, %v4268
        %4337 = vmatprep.subr.bf16.mxu0 %v4274
        %4338 = vmatpush1.bf16.msra.mxu0 %v4273
        %4339 = vmatprep.subr.bf16.mxu0 %v4278
        %4340 = vmatpush1.bf16.msra.mxu0 %v4277
        %4341 = vmatprep.subr.bf16.mxu0 %v4282
        %4342 = vmatpush1.bf16.msra.mxu0 %v4281
        %4343 = vmatprep.subr.bf16.mxu0 %v4286
        %4344 = vmatpush1.bf16.msra.mxu0 %v4285
        %4345 = vmatprep.subr.bf16.mxu0 %v4290
        %4346 = vmatpush1.bf16.msra.mxu0 %v4289
        %4347 = vmatprep.subr.bf16.mxu0 %v4294
        %4348 = vmatpush1.bf16.msra.mxu0 %v4293
        %4349 = vmatprep.subr.bf16.mxu0 %v4298
        %4350 = vmatpush1.bf16.msra.mxu0 %v4297
        %4351 = vmatprep.subr.bf16.mxu0 %v4302
        %4352 = vmatpush1.bf16.msra.mxu0 %v4301
        %4353 = vmatprep.subr.bf16.mxu0 0
        %4354 = vmatpush1.bf16.msra.mxu0 0
        %4355 = vmatprep.subr.bf16.mxu0 0
        %4356 = vmatpush1.bf16.msra.mxu0 0
        %4357 = vmatprep.subr.bf16.mxu0 0
        %4358 = vmatpush1.bf16.msra.mxu0 0
        %4359 = vmatprep.subr.bf16.mxu0 0
        %4360 = vmatpush1.bf16.msra.mxu0 0
        %4361 = vmatprep.subr.bf16.mxu0 0
        %4362 = vmatpush1.bf16.msra.mxu0 0
        %4363 = vmatprep.subr.bf16.mxu0 0
        %4364 = vmatpush1.bf16.msra.mxu0 0
        %4365 = vmatprep.subr.bf16.mxu0 0
        %4366 = vmatpush1.bf16.msra.mxu0 0
        %4367 = vmatprep.subr.bf16.mxu0 0
        %4368 = vmatpush1.bf16.msra.mxu0 0
        %4369 = vmatprep.mubr.bf16.mxu0 0
        %4370 = vmatmul.mubr.bf16.gmra.mrb[0].mxu0 %v4175
        %v4371 = vpop.f32.mrb[0].mxu0
        %v4372 = vadd.f32 0.0, %v4371
        %v4373 = vpop.f32.mrb[0].mxu0
        %v4374 = vadd.f32 0.0, %v4373
        %v4375 = vpop.f32.mrb[0].mxu0
        %v4376 = vpop.f32.mrb[0].mxu0
        %4377 = vdwg.mxu0
        %4378 = vmatprep.subr.bf16.mxu0 %v4276
        %4379 = vmatpush1.bf16.msra.mxu0 %v4275
        %4380 = vmatprep.subr.bf16.mxu0 %v4280
        %4381 = vmatpush1.bf16.msra.mxu0 %v4279
        %4382 = vmatprep.subr.bf16.mxu0 %v4284
        %4383 = vmatpush1.bf16.msra.mxu0 %v4283
        %4384 = vmatprep.subr.bf16.mxu0 %v4288
        %4385 = vmatpush1.bf16.msra.mxu0 %v4287
        %4386 = vmatprep.subr.bf16.mxu0 %v4292
        %4387 = vmatpush1.bf16.msra.mxu0 %v4291
        %4388 = vmatprep.subr.bf16.mxu0 %v4296
        %4389 = vmatpush1.bf16.msra.mxu0 %v4295
        %4390 = vmatprep.subr.bf16.mxu0 %v4300
        %4391 = vmatpush1.bf16.msra.mxu0 %v4299
        %4392 = vmatprep.subr.bf16.mxu0 %v4304
        %4393 = vmatpush1.bf16.msra.mxu0 %v4303
        %4394 = vmatprep.subr.bf16.mxu0 0
        %4395 = vmatpush1.bf16.msra.mxu0 0
        %4396 = vmatprep.subr.bf16.mxu0 0
        %4397 = vmatpush1.bf16.msra.mxu0 0
        %4398 = vmatprep.subr.bf16.mxu0 0
        %4399 = vmatpush1.bf16.msra.mxu0 0
        %4400 = vmatprep.subr.bf16.mxu0 0
        %4401 = vmatpush1.bf16.msra.mxu0 0
        %4402 = vmatprep.subr.bf16.mxu0 0
        %4403 = vmatpush1.bf16.msra.mxu0 0
        %4404 = vmatprep.subr.bf16.mxu0 0
        %4405 = vmatpush1.bf16.msra.mxu0 0
        %4406 = vmatprep.subr.bf16.mxu0 0
        %4407 = vmatpush1.bf16.msra.mxu0 0
        %4408 = vmatprep.subr.bf16.mxu0 0
        %4409 = vmatpush1.bf16.msra.mxu0 0
        %4410 = vmatprep.mubr.bf16.mxu0 0
        %4411 = vmatmul.mubr.bf16.gmra.mrb[0].mxu0 %v4175
        %v4412 = vpop.f32.mrb[0].mxu0
        %v4413 = vadd.f32 0.0, %v4412
        %v4414 = vpop.f32.mrb[0].mxu0
        %v4415 = vadd.f32 0.0, %v4414
        %v4416 = vpop.f32.mrb[0].mxu0
        %v4417 = vpop.f32.mrb[0].mxu0
        %4418 = vdwg.mxu0
        %4419 = vst [vmem:[%s462] sm:$0xff] %v4372
        %4420 = vst [vmem:[%s462 + $0x8] sm:$0xff] %v4374
        %4421 = vst [vmem:[%s462 + $0x10] sm:$0xff] %v4413
        %4422 = vst [vmem:[%s462 + $0x18] sm:$0xff] %v4415
        %s4423 = sand.u32 %s282, 1
        %s4424 = scalar_lea.sflag [#allocation4], %s4423
        %s4425 = sand.u32 %s282, 1
        %s4426 = smul.addr %s4425, 32
        %s4427 = scalar_lea.vmem [#allocation10], %s4426
        // Predicated region
        $region81: #{forward.1} parent=63 // pred_check
          %p4428 = pneg %p292
        $region82: #{forward.1} parent=63 // pred_check_branch
          %4430 = sbr.rel (%p4428) target = $region84
        $region83: #{forward.1} parent=63 // pred_region
          %s4432 = ssub.s32 512, 512
          %4433 = vsyncadd %s4424, %s4432
          %s4434 = smul.addr %s28, 4
          %s4435 = smul.addr %s4434, 128
          %s4436 = scalar_lea.hbm %s11, %s4435
          %s4438 = sshll.u32 %s4427, 4
          %s4439 = int_to_ptr.vmem [resolvable:$true] %s4438
          %4441 = dma.vmem_to_hbm [thread:$0]  %s4439, 512, %s4436, %s4424
        $region84: #{forward.1} parent=63 // pred_fallthru
          _
      $region64: #{forward.1} parent=5 // pred_fallthru
        _
      %p4442 = scmp.le.s32.totalorder 2, %s23
      // Predicated region
      $region85: #{forward.1} parent=5 // pred_check
        %p4443 = pneg %p4442
      $region86: #{forward.1} parent=5 // pred_check_branch
        %4445 = sbr.rel (%p4443) target = $region88
      $region87: #{forward.1} parent=5 // pred_region
        %s4446 = ssub.s32 %s23, 2
        // Predicated region
        $region89: #{forward.1} parent=87 // pred_check
          %p4447 = pneg %p298
        $region90: #{forward.1} parent=87 // pred_check_branch
          %4449 = sbr.rel (%p4447) target = $region92
        $region91: #{forward.1} parent=87 // pred_region
          %s4450 = sand.u32 %s283, 1
          %s4451 = scalar_lea.sflag [#allocation4], %s4450
          %s4452 = sand.u32 %s283, 1
          %s4453 = smul.addr %s4452, 32
          %s4454 = scalar_lea.vmem [#allocation10], %s4453
          %4455 = dma.done %s4451, 512
        $region92: #{forward.1} parent=87 // pred_fallthru
          _
      $region88: #{forward.1} parent=5 // pred_fallthru
        _
    $region6: #{forward.1} parent=1 // loop_footer
      %s27 = sadd.s32 1, %s23
    $region7: #{forward.1} parent=1 // loop_footer_branch
      %22 = sbr.rel target = $region3
    $region8: #{forward.1} parent=1 // loop_exit
      _
    %4456 = vsyncpa [#allocation3], 1
    %s4457 = scalar_lea.sflag [#allocation3], 1
    %4458 = vsyncpa %s4457, 1
    %4459 = vsyncpa [#allocation6], 1
    %4460 = vsyncpa [#allocation9], 1
    %4461 = vsyncpa [#allocation4], 1
    %s4462 = scalar_lea.sflag [#allocation4], 1
    %4463 = vsyncpa %s4462, 1

</llo_original>
